<compile_context>
chip_gen: v6e
topology: v6e:2x2x1
jax: 0.10.0
libtpu: 0.0.40
codegen_flags: <defaults>
</compile_context>

<pallas_src>
import functools
import math

import jax
import jax.numpy as jnp
from jax.experimental import pallas as pl
from jax.experimental.pallas import tpu as pltpu


CFG = dict(vocab=100, hidden=32, layers=2, heads=2, ff=64,
           max_pos=16, type_vocab=2, n_classes=3)

_INV_SQRT2 = 0.7071067811865476


# ----------------------------------------------------------------------------
# Fused Pallas kernel: whole BERTModule forward, everything VMEM-resident.
# ----------------------------------------------------------------------------

def _bert_fused_kernel(emb_ref, mask_ref, eg_ref, eb_ref,
                       wqkv_ref, bqkv_ref, wo_ref, bo_ref,
                       ln1g_ref, ln1b_ref, w1_ref, b1_ref,
                       w2_ref, b2_ref, ln2g_ref, ln2b_ref,
                       pw_ref, pb_ref, fw_ref, fb_ref,
                       o_ref, *, B, S, H, nH, L, eps):
    dh = H // nH

    def layer_norm(x, g, b):
        mu = jnp.mean(x, axis=-1, keepdims=True)
        var = jnp.mean((x - mu) ** 2, axis=-1, keepdims=True)
        return (x - mu) * jax.lax.rsqrt(var + eps) * g + b

    def dense(x, w, b):
        return jnp.dot(x, w, preferred_element_type=jnp.float32) + b

    # --- embedding LayerNorm ---
    x = layer_norm(emb_ref[...].astype(jnp.float32), eg_ref[...], eb_ref[...])
    mask = mask_ref[...]                      # [B, S] additive mask (×-10000)

    # --- encoder layers (static unroll) ---
    for l in range(L):
        # fused QKV projection; 1/sqrt(dh) is pre-baked into Wq/bq host-side
        qkv = dense(x, wqkv_ref[l], bqkv_ref[l])            # [B*S, 3H]

        # scaled dot-product attention, static loop over (batch, head)
        batch_ctx = []
        for b in range(B):
            r0 = b * S
            m_b = mask[b:b + 1, :]                          # [1, S]
            head_ctx = []
            for h in range(nH):
                c0 = h * dh
                q = qkv[r0:r0 + S, c0:c0 + dh]              # [S, dh]
                k = qkv[r0:r0 + S, H + c0:H + c0 + dh]      # [S, dh]
                v = qkv[r0:r0 + S, 2 * H + c0:2 * H + c0 + dh]
                s = jnp.dot(q, k.T, preferred_element_type=jnp.float32) + m_b
                s = s - jnp.max(s, axis=-1, keepdims=True)
                p = jnp.exp(s)
                p = p * pl.reciprocal(jnp.sum(p, axis=-1, keepdims=True),
                                      approx=True)
                head_ctx.append(
                    jnp.dot(p, v, preferred_element_type=jnp.float32))
            batch_ctx.append(jnp.concatenate(head_ctx, axis=-1))   # [S, H]
        ctx = jnp.concatenate(batch_ctx, axis=0)                   # [B*S, H]

        # output projection + residual + LN1
        attn_out = dense(ctx, wo_ref[l], bo_ref[l])
        x = layer_norm(x + attn_out, ln1g_ref[l], ln1b_ref[l])

        # feed-forward (exact erf-GELU) + residual + LN2
        h1 = dense(x, w1_ref[l], b1_ref[l])
        h1 = 0.5 * h1 * (1.0 + jax.lax.erf(h1 * _INV_SQRT2))
        ff = dense(h1, w2_ref[l], b2_ref[l])
        x = layer_norm(x + ff, ln2g_ref[l], ln2b_ref[l])

    # --- pooler: tanh(W * hidden[:, 0] + b) on the [CLS] rows ---
    cls = jnp.concatenate([x[b * S:b * S + 1, :] for b in range(B)], axis=0)
    pooled = jnp.tanh(dense(cls, pw_ref[...], pb_ref[...]))

    # dropout(p=0.3) is identity in deterministic eval mode.
    # TODO(synk): training-mode stochastic dropout (pltpu.prng_*) not emitted.

    # --- classifier head: Linear(hidden, n_classes) ---
    o_ref[...] = dense(pooled, fw_ref[...], fb_ref[...]).astype(o_ref.dtype)


# ----------------------------------------------------------------------------
# Parameters (deterministic synthetic init)
# ----------------------------------------------------------------------------

def init_params(key, cfg):
    H, F = cfg["hidden"], cfg["ff"]
    std = 0.02

    def nrm(k, shape):
        return jax.random.normal(k, shape, jnp.float32) * std

    keys = iter(jax.random.split(key, 64))
    p = {
        "word_emb": nrm(next(keys), (cfg["vocab"], H)),
        "pos_emb": nrm(next(keys), (cfg["max_pos"], H)),
        "type_emb": nrm(next(keys), (cfg["type_vocab"], H)),
        "emb_ln_g": jnp.ones((H,), jnp.float32),
        "emb_ln_b": jnp.zeros((H,), jnp.float32),
        "layers": [],
        "pooler_w": nrm(next(keys), (H, H)),
        "pooler_b": jnp.zeros((H,), jnp.float32),
        "fc_w": nrm(next(keys), (H, cfg["n_classes"])),
        "fc_b": jnp.zeros((cfg["n_classes"],), jnp.float32),
    }
    for _ in range(cfg["layers"]):
        layer = {
            "wq": nrm(next(keys), (H, H)), "bq": jnp.zeros((H,), jnp.float32),
            "wk": nrm(next(keys), (H, H)), "bk": jnp.zeros((H,), jnp.float32),
            "wv": nrm(next(keys), (H, H)), "bv": jnp.zeros((H,), jnp.float32),
            "wo": nrm(next(keys), (H, H)), "bo": jnp.zeros((H,), jnp.float32),
            "ln1_g": jnp.ones((H,), jnp.float32), "ln1_b": jnp.zeros((H,), jnp.float32),
            "w1": nrm(next(keys), (H, F)), "b1": jnp.zeros((F,), jnp.float32),
            "w2": nrm(next(keys), (F, H)), "b2": jnp.zeros((H,), jnp.float32),
            "ln2_g": jnp.ones((H,), jnp.float32), "ln2_b": jnp.zeros((H,), jnp.float32),
        }
        p["layers"].append(layer)
    return p


def _stack_layer_params(params, cfg):
    """Stack per-layer weights along a leading L axis; fuse QKV; bake in scale."""
    H = cfg["hidden"]
    dh = H // cfg["heads"]
    scale = 1.0 / math.sqrt(dh)

    def col(v):                         # 1D bias -> [1, D]
        return v[None, :]

    lists = [[] for _ in range(12)]
    (wqkv, bqkv, wo, bo, ln1g, ln1b, w1, b1, w2, b2, ln2g, ln2b) = lists
    for lyr in params["layers"]:
        wqkv.append(jnp.concatenate(
            [lyr["wq"] * scale, lyr["wk"], lyr["wv"]], axis=1))
        bqkv.append(col(jnp.concatenate(
            [lyr["bq"] * scale, lyr["bk"], lyr["bv"]], axis=0)))
        wo.append(lyr["wo"]); bo.append(col(lyr["bo"]))
        ln1g.append(col(lyr["ln1_g"])); ln1b.append(col(lyr["ln1_b"]))
        w1.append(lyr["w1"]); b1.append(col(lyr["b1"]))
        w2.append(lyr["w2"]); b2.append(col(lyr["b2"]))
        ln2g.append(col(lyr["ln2_g"])); ln2b.append(col(lyr["ln2_b"]))
    return tuple(jnp.stack(xs, axis=0) for xs in lists)


# ----------------------------------------------------------------------------
# Forward pass (mirrors BERTModule.forward) — one pallas_call total.
# ----------------------------------------------------------------------------

def bert_module_forward(params, ids, masks, ttis, cfg=CFG):
    B, S = ids.shape
    H, nH, L = cfg["hidden"], cfg["heads"], cfg["layers"]
    C = cfg["n_classes"]

    # embeddings (gathers = glue in plain XLA)
    emb = (params["word_emb"][ids]
           + params["pos_emb"][None, :S, :]
           + params["type_emb"][ttis])                      # [B, S, H]
    emb = emb.reshape(B * S, H)

    # BERT-style additive attention mask, kept in f32
    mask_add = (1.0 - masks.astype(jnp.float32)) * -10000.0  # [B, S]

    stacked = _stack_layer_params(params, cfg)

    inputs = (emb, mask_add,
              params["emb_ln_g"][None, :], params["emb_ln_b"][None, :],
              *stacked,
              params["pooler_w"], params["pooler_b"][None, :],
              params["fc_w"], params["fc_b"][None, :])

    kernel = functools.partial(_bert_fused_kernel,
                               B=B, S=S, H=H, nH=nH, L=L, eps=1e-12)

    vmem_spec = pl.BlockSpec(memory_space=pltpu.MemorySpace.VMEM)
    return pl.pallas_call(
        kernel,
        out_shape=jax.ShapeDtypeStruct((B, C), jnp.float32),
        in_specs=[vmem_spec] * len(inputs),
        out_specs=vmem_spec,
    )(*inputs)


# ----------------------------------------------------------------------------
# Main
# ----------------------------------------------------------------------------

if __name__ == "__main__":
    key = jax.random.PRNGKey(0)
    pkey, ikey, mkey = jax.random.split(key, 3)

    params = init_params(pkey, CFG)

    B, S = 2, 8
    ids = jax.random.randint(ikey, (B, S), 0, CFG["vocab"], dtype=jnp.int32)
    # attention mask: first row full, second row last 3 tokens padded
    masks = jnp.array([[1] * S, [1] * (S - 3) + [0] * 3], dtype=jnp.int32)
    ttis = jnp.zeros((B, S), dtype=jnp.int32)

    fwd = jax.jit(bert_module_forward)
    logits = fwd(params, ids, masks, ttis)
    jax.block_until_ready(logits)

    assert logits.shape == (B, CFG["n_classes"])
    assert bool(jnp.all(jnp.isfinite(logits)))
    print("KERNEL_OK")
</pallas_src>

<mosaic_0001>
module attributes {stable_mosaic.version = 11 : i64} {
  func.func @_bert_fused_kernel(%arg0: memref<16x32xf32, #tpu.memory_space<vmem>>, %arg1: memref<2x8xf32, #tpu.memory_space<vmem>>, %arg2: memref<1x32xf32, #tpu.memory_space<vmem>>, %arg3: memref<1x32xf32, #tpu.memory_space<vmem>>, %arg4: memref<2x32x96xf32, #tpu.memory_space<vmem>>, %arg5: memref<2x1x96xf32, #tpu.memory_space<vmem>>, %arg6: memref<2x32x32xf32, #tpu.memory_space<vmem>>, %arg7: memref<2x1x32xf32, #tpu.memory_space<vmem>>, %arg8: memref<2x1x32xf32, #tpu.memory_space<vmem>>, %arg9: memref<2x1x32xf32, #tpu.memory_space<vmem>>, %arg10: memref<2x32x64xf32, #tpu.memory_space<vmem>>, %arg11: memref<2x1x64xf32, #tpu.memory_space<vmem>>, %arg12: memref<2x64x32xf32, #tpu.memory_space<vmem>>, %arg13: memref<2x1x32xf32, #tpu.memory_space<vmem>>, %arg14: memref<2x1x32xf32, #tpu.memory_space<vmem>>, %arg15: memref<2x1x32xf32, #tpu.memory_space<vmem>>, %arg16: memref<32x32xf32, #tpu.memory_space<vmem>>, %arg17: memref<1x32xf32, #tpu.memory_space<vmem>>, %arg18: memref<32x3xf32, #tpu.memory_space<vmem>>, %arg19: memref<1x3xf32, #tpu.memory_space<vmem>>, %arg20: memref<2x3xf32, #tpu.memory_space<vmem>>) attributes {dimension_semantics = [], scalar_prefetch = 0 : i64, scratch_operands = 0 : i64, tpu.core_type = #tpu.core_type<tc>} {
    %c0 = arith.constant 0 : index
    %c0_0 = arith.constant 0 : index
    %0 = vector.load %arg0[%c0, %c0_0] : memref<16x32xf32, #tpu.memory_space<vmem>>, vector<16x32xf32>
    %c0_1 = arith.constant 0 : index
    %c0_2 = arith.constant 0 : index
    %1 = vector.load %arg2[%c0_1, %c0_2] : memref<1x32xf32, #tpu.memory_space<vmem>>, vector<1x32xf32>
    %c0_3 = arith.constant 0 : index
    %c0_4 = arith.constant 0 : index
    %2 = vector.load %arg3[%c0_3, %c0_4] : memref<1x32xf32, #tpu.memory_space<vmem>>, vector<1x32xf32>
    %cst = arith.constant dense<0.000000e+00> : vector<16xf32>
    %3 = vector.multi_reduction <add>, %0, %cst [1] : vector<16x32xf32> to vector<16xf32>
    %4 = vector.shape_cast %3 : vector<16xf32> to vector<16x1xf32>
    %cst_5 = arith.constant 3.200000e+01 : f32
    %5 = vector.broadcast %cst_5 : f32 to vector<16x1xf32>
    %6 = arith.divf %4, %5 : vector<16x1xf32>
    %7 = vector.broadcast %6 : vector<16x1xf32> to vector<16x32xf32>
    %8 = arith.subf %0, %7 : vector<16x32xf32>
    %9 = arith.mulf %8, %8 : vector<16x32xf32>
    %cst_6 = arith.constant dense<0.000000e+00> : vector<16xf32>
    %10 = vector.multi_reduction <add>, %9, %cst_6 [1] : vector<16x32xf32> to vector<16xf32>
    %11 = vector.shape_cast %10 : vector<16xf32> to vector<16x1xf32>
    %cst_7 = arith.constant 3.200000e+01 : f32
    %12 = vector.broadcast %cst_7 : f32 to vector<16x1xf32>
    %13 = arith.divf %11, %12 : vector<16x1xf32>
    %14 = vector.broadcast %6 : vector<16x1xf32> to vector<16x32xf32>
    %15 = arith.subf %0, %14 : vector<16x32xf32>
    %cst_8 = arith.constant 9.99999996E-13 : f32
    %16 = vector.broadcast %cst_8 : f32 to vector<16x1xf32>
    %17 = arith.addf %13, %16 : vector<16x1xf32>
    %18 = math.rsqrt %17 : vector<16x1xf32>
    %19 = vector.broadcast %18 : vector<16x1xf32> to vector<16x32xf32>
    %20 = arith.mulf %15, %19 : vector<16x32xf32>
    %21 = vector.broadcast %1 : vector<1x32xf32> to vector<16x32xf32>
    %22 = arith.mulf %20, %21 : vector<16x32xf32>
    %23 = vector.broadcast %2 : vector<1x32xf32> to vector<16x32xf32>
    %24 = arith.addf %22, %23 : vector<16x32xf32>
    %c0_9 = arith.constant 0 : index
    %c0_10 = arith.constant 0 : index
    %25 = vector.load %arg1[%c0_9, %c0_10] : memref<2x8xf32, #tpu.memory_space<vmem>>, vector<2x8xf32>
    %c0_11 = arith.constant 0 : index
    %c0_12 = arith.constant 0 : index
    %c0_13 = arith.constant 0 : index
    %26 = vector.load %arg4[%c0_11, %c0_12, %c0_13] : memref<2x32x96xf32, #tpu.memory_space<vmem>>, vector<1x32x96xf32>
    %27 = vector.shape_cast %26 : vector<1x32x96xf32> to vector<32x96xf32>
    %c0_14 = arith.constant 0 : index
    %c0_15 = arith.constant 0 : index
    %c0_16 = arith.constant 0 : index
    %28 = vector.load %arg5[%c0_14, %c0_15, %c0_16] : memref<2x1x96xf32, #tpu.memory_space<vmem>>, vector<1x1x96xf32>
    %29 = vector.shape_cast %28 : vector<1x1x96xf32> to vector<1x96xf32>
    %cst_17 = arith.constant dense<0.000000e+00> : vector<16x96xf32>
    %30 = tpu.matmul %24, %27, %cst_17 {dimension_numbers = #tpu.dot_dimension_numbers<[1], [0], [0], [1], [0, 0, 1, 1], [], []>} : vector<16x32xf32>, vector<32x96xf32>, vector<16x96xf32> -> vector<16x96xf32>
    %31 = vector.broadcast %29 : vector<1x96xf32> to vector<16x96xf32>
    %32 = arith.addf %30, %31 : vector<16x96xf32>
    %33 = vector.extract_strided_slice %25 {offsets = [0, 0], sizes = [1, 8], strides = [1, 1]} : vector<2x8xf32> to vector<1x8xf32>
    %34 = vector.extract_strided_slice %32 {offsets = [0, 0], sizes = [8, 16], strides = [1, 1]} : vector<16x96xf32> to vector<8x16xf32>
    %35 = vector.extract_strided_slice %32 {offsets = [0, 32], sizes = [8, 16], strides = [1, 1]} : vector<16x96xf32> to vector<8x16xf32>
    %36 = vector.extract_strided_slice %32 {offsets = [0, 64], sizes = [8, 16], strides = [1, 1]} : vector<16x96xf32> to vector<8x16xf32>
    %37 = tpu.transpose %35, [1, 0] : vector<8x16xf32> -> vector<16x8xf32>
    %cst_18 = arith.constant dense<0.000000e+00> : vector<8x8xf32>
    %38 = tpu.matmul %34, %37, %cst_18 {dimension_numbers = #tpu.dot_dimension_numbers<[1], [0], [0], [1], [0, 0, 1, 1], [], []>} : vector<8x16xf32>, vector<16x8xf32>, vector<8x8xf32> -> vector<8x8xf32>
    %39 = vector.broadcast %33 : vector<1x8xf32> to vector<8x8xf32>
    %40 = arith.addf %38, %39 : vector<8x8xf32>
    %cst_19 = arith.constant dense<0xFF800000> : vector<8xf32>
    %41 = vector.multi_reduction <maximumf>, %40, %cst_19 [1] : vector<8x8xf32> to vector<8xf32>
    %42 = vector.shape_cast %41 : vector<8xf32> to vector<8x1xf32>
    %43 = vector.broadcast %42 : vector<8x1xf32> to vector<8x8xf32>
    %44 = arith.subf %40, %43 : vector<8x8xf32>
    %45 = math.exp %44 : vector<8x8xf32>
    %cst_20 = arith.constant dense<0.000000e+00> : vector<8xf32>
    %46 = vector.multi_reduction <add>, %45, %cst_20 [1] : vector<8x8xf32> to vector<8xf32>
    %47 = vector.shape_cast %46 : vector<8xf32> to vector<8x1xf32>
    %48 = tpu.reciprocal %47 {approx = true} : vector<8x1xf32> -> vector<8x1xf32>
    %49 = vector.broadcast %48 : vector<8x1xf32> to vector<8x8xf32>
    %50 = arith.mulf %45, %49 : vector<8x8xf32>
    %cst_21 = arith.constant dense<0.000000e+00> : vector<8x16xf32>
    %51 = tpu.matmul %50, %36, %cst_21 {dimension_numbers = #tpu.dot_dimension_numbers<[1], [0], [0], [1], [0, 0, 1, 1], [], []>} : vector<8x8xf32>, vector<8x16xf32>, vector<8x16xf32> -> vector<8x16xf32>
    %52 = vector.extract_strided_slice %32 {offsets = [0, 16], sizes = [8, 16], strides = [1, 1]} : vector<16x96xf32> to vector<8x16xf32>
    %53 = vector.extract_strided_slice %32 {offsets = [0, 48], sizes = [8, 16], strides = [1, 1]} : vector<16x96xf32> to vector<8x16xf32>
    %54 = vector.extract_strided_slice %32 {offsets = [0, 80], sizes = [8, 16], strides = [1, 1]} : vector<16x96xf32> to vector<8x16xf32>
    %55 = tpu.transpose %53, [1, 0] : vector<8x16xf32> -> vector<16x8xf32>
    %cst_22 = arith.constant dense<0.000000e+00> : vector<8x8xf32>
    %56 = tpu.matmul %52, %55, %cst_22 {dimension_numbers = #tpu.dot_dimension_numbers<[1], [0], [0], [1], [0, 0, 1, 1], [], []>} : vector<8x16xf32>, vector<16x8xf32>, vector<8x8xf32> -> vector<8x8xf32>
    %57 = vector.broadcast %33 : vector<1x8xf32> to vector<8x8xf32>
    %58 = arith.addf %56, %57 : vector<8x8xf32>
    %cst_23 = arith.constant dense<0xFF800000> : vector<8xf32>
    %59 = vector.multi_reduction <maximumf>, %58, %cst_23 [1] : vector<8x8xf32> to vector<8xf32>
    %60 = vector.shape_cast %59 : vector<8xf32> to vector<8x1xf32>
    %61 = vector.broadcast %60 : vector<8x1xf32> to vector<8x8xf32>
    %62 = arith.subf %58, %61 : vector<8x8xf32>
    %63 = math.exp %62 : vector<8x8xf32>
    %cst_24 = arith.constant dense<0.000000e+00> : vector<8xf32>
    %64 = vector.multi_reduction <add>, %63, %cst_24 [1] : vector<8x8xf32> to vector<8xf32>
    %65 = vector.shape_cast %64 : vector<8xf32> to vector<8x1xf32>
    %66 = tpu.reciprocal %65 {approx = true} : vector<8x1xf32> -> vector<8x1xf32>
    %67 = vector.broadcast %66 : vector<8x1xf32> to vector<8x8xf32>
    %68 = arith.mulf %63, %67 : vector<8x8xf32>
    %cst_25 = arith.constant dense<0.000000e+00> : vector<8x16xf32>
    %69 = tpu.matmul %68, %54, %cst_25 {dimension_numbers = #tpu.dot_dimension_numbers<[1], [0], [0], [1], [0, 0, 1, 1], [], []>} : vector<8x8xf32>, vector<8x16xf32>, vector<8x16xf32> -> vector<8x16xf32>
    %70 = tpu.concatenate %51, %69 in 1 : vector<8x16xf32>, vector<8x16xf32> -> vector<8x32xf32>
    %71 = vector.extract_strided_slice %25 {offsets = [1, 0], sizes = [1, 8], strides = [1, 1]} : vector<2x8xf32> to vector<1x8xf32>
    %72 = vector.extract_strided_slice %32 {offsets = [8, 0], sizes = [8, 16], strides = [1, 1]} : vector<16x96xf32> to vector<8x16xf32>
    %73 = vector.extract_strided_slice %32 {offsets = [8, 32], sizes = [8, 16], strides = [1, 1]} : vector<16x96xf32> to vector<8x16xf32>
    %74 = vector.extract_strided_slice %32 {offsets = [8, 64], sizes = [8, 16], strides = [1, 1]} : vector<16x96xf32> to vector<8x16xf32>
    %75 = tpu.transpose %73, [1, 0] : vector<8x16xf32> -> vector<16x8xf32>
    %cst_26 = arith.constant dense<0.000000e+00> : vector<8x8xf32>
    %76 = tpu.matmul %72, %75, %cst_26 {dimension_numbers = #tpu.dot_dimension_numbers<[1], [0], [0], [1], [0, 0, 1, 1], [], []>} : vector<8x16xf32>, vector<16x8xf32>, vector<8x8xf32> -> vector<8x8xf32>
    %77 = vector.broadcast %71 : vector<1x8xf32> to vector<8x8xf32>
    %78 = arith.addf %76, %77 : vector<8x8xf32>
    %cst_27 = arith.constant dense<0xFF800000> : vector<8xf32>
    %79 = vector.multi_reduction <maximumf>, %78, %cst_27 [1] : vector<8x8xf32> to vector<8xf32>
    %80 = vector.shape_cast %79 : vector<8xf32> to vector<8x1xf32>
    %81 = vector.broadcast %80 : vector<8x1xf32> to vector<8x8xf32>
    %82 = arith.subf %78, %81 : vector<8x8xf32>
    %83 = math.exp %82 : vector<8x8xf32>
    %cst_28 = arith.constant dense<0.000000e+00> : vector<8xf32>
    %84 = vector.multi_reduction <add>, %83, %cst_28 [1] : vector<8x8xf32> to vector<8xf32>
    %85 = vector.shape_cast %84 : vector<8xf32> to vector<8x1xf32>
    %86 = tpu.reciprocal %85 {approx = true} : vector<8x1xf32> -> vector<8x1xf32>
    %87 = vector.broadcast %86 : vector<8x1xf32> to vector<8x8xf32>
    %88 = arith.mulf %83, %87 : vector<8x8xf32>
    %cst_29 = arith.constant dense<0.000000e+00> : vector<8x16xf32>
    %89 = tpu.matmul %88, %74, %cst_29 {dimension_numbers = #tpu.dot_dimension_numbers<[1], [0], [0], [1], [0, 0, 1, 1], [], []>} : vector<8x8xf32>, vector<8x16xf32>, vector<8x16xf32> -> vector<8x16xf32>
    %90 = vector.extract_strided_slice %32 {offsets = [8, 16], sizes = [8, 16], strides = [1, 1]} : vector<16x96xf32> to vector<8x16xf32>
    %91 = vector.extract_strided_slice %32 {offsets = [8, 48], sizes = [8, 16], strides = [1, 1]} : vector<16x96xf32> to vector<8x16xf32>
    %92 = vector.extract_strided_slice %32 {offsets = [8, 80], sizes = [8, 16], strides = [1, 1]} : vector<16x96xf32> to vector<8x16xf32>
    %93 = tpu.transpose %91, [1, 0] : vector<8x16xf32> -> vector<16x8xf32>
    %cst_30 = arith.constant dense<0.000000e+00> : vector<8x8xf32>
    %94 = tpu.matmul %90, %93, %cst_30 {dimension_numbers = #tpu.dot_dimension_numbers<[1], [0], [0], [1], [0, 0, 1, 1], [], []>} : vector<8x16xf32>, vector<16x8xf32>, vector<8x8xf32> -> vector<8x8xf32>
    %95 = vector.broadcast %71 : vector<1x8xf32> to vector<8x8xf32>
    %96 = arith.addf %94, %95 : vector<8x8xf32>
    %cst_31 = arith.constant dense<0xFF800000> : vector<8xf32>
    %97 = vector.multi_reduction <maximumf>, %96, %cst_31 [1] : vector<8x8xf32> to vector<8xf32>
    %98 = vector.shape_cast %97 : vector<8xf32> to vector<8x1xf32>
    %99 = vector.broadcast %98 : vector<8x1xf32> to vector<8x8xf32>
    %100 = arith.subf %96, %99 : vector<8x8xf32>
    %101 = math.exp %100 : vector<8x8xf32>
    %cst_32 = arith.constant dense<0.000000e+00> : vector<8xf32>
    %102 = vector.multi_reduction <add>, %101, %cst_32 [1] : vector<8x8xf32> to vector<8xf32>
    %103 = vector.shape_cast %102 : vector<8xf32> to vector<8x1xf32>
    %104 = tpu.reciprocal %103 {approx = true} : vector<8x1xf32> -> vector<8x1xf32>
    %105 = vector.broadcast %104 : vector<8x1xf32> to vector<8x8xf32>
    %106 = arith.mulf %101, %105 : vector<8x8xf32>
    %cst_33 = arith.constant dense<0.000000e+00> : vector<8x16xf32>
    %107 = tpu.matmul %106, %92, %cst_33 {dimension_numbers = #tpu.dot_dimension_numbers<[1], [0], [0], [1], [0, 0, 1, 1], [], []>} : vector<8x8xf32>, vector<8x16xf32>, vector<8x16xf32> -> vector<8x16xf32>
    %108 = tpu.concatenate %89, %107 in 1 : vector<8x16xf32>, vector<8x16xf32> -> vector<8x32xf32>
    %109 = tpu.concatenate %70, %108 in 0 : vector<8x32xf32>, vector<8x32xf32> -> vector<16x32xf32>
    %c0_34 = arith.constant 0 : index
    %c0_35 = arith.constant 0 : index
    %c0_36 = arith.constant 0 : index
    %110 = vector.load %arg6[%c0_34, %c0_35, %c0_36] : memref<2x32x32xf32, #tpu.memory_space<vmem>>, vector<1x32x32xf32>
    %111 = vector.shape_cast %110 : vector<1x32x32xf32> to vector<32x32xf32>
    %c0_37 = arith.constant 0 : index
    %c0_38 = arith.constant 0 : index
    %c0_39 = arith.constant 0 : index
    %112 = vector.load %arg7[%c0_37, %c0_38, %c0_39] : memref<2x1x32xf32, #tpu.memory_space<vmem>>, vector<1x1x32xf32>
    %113 = vector.shape_cast %112 : vector<1x1x32xf32> to vector<1x32xf32>
    %cst_40 = arith.constant dense<0.000000e+00> : vector<16x32xf32>
    %114 = tpu.matmul %109, %111, %cst_40 {dimension_numbers = #tpu.dot_dimension_numbers<[1], [0], [0], [1], [0, 0, 1, 1], [], []>} : vector<16x32xf32>, vector<32x32xf32>, vector<16x32xf32> -> vector<16x32xf32>
    %115 = vector.broadcast %113 : vector<1x32xf32> to vector<16x32xf32>
    %116 = arith.addf %114, %115 : vector<16x32xf32>
    %117 = arith.addf %24, %116 : vector<16x32xf32>
    %c0_41 = arith.constant 0 : index
    %c0_42 = arith.constant 0 : index
    %c0_43 = arith.constant 0 : index
    %118 = vector.load %arg8[%c0_41, %c0_42, %c0_43] : memref<2x1x32xf32, #tpu.memory_space<vmem>>, vector<1x1x32xf32>
    %119 = vector.shape_cast %118 : vector<1x1x32xf32> to vector<1x32xf32>
    %c0_44 = arith.constant 0 : index
    %c0_45 = arith.constant 0 : index
    %c0_46 = arith.constant 0 : index
    %120 = vector.load %arg9[%c0_44, %c0_45, %c0_46] : memref<2x1x32xf32, #tpu.memory_space<vmem>>, vector<1x1x32xf32>
    %121 = vector.shape_cast %120 : vector<1x1x32xf32> to vector<1x32xf32>
    %cst_47 = arith.constant dense<0.000000e+00> : vector<16xf32>
    %122 = vector.multi_reduction <add>, %117, %cst_47 [1] : vector<16x32xf32> to vector<16xf32>
    %123 = vector.shape_cast %122 : vector<16xf32> to vector<16x1xf32>
    %cst_48 = arith.constant 3.200000e+01 : f32
    %124 = vector.broadcast %cst_48 : f32 to vector<16x1xf32>
    %125 = arith.divf %123, %124 : vector<16x1xf32>
    %126 = vector.broadcast %125 : vector<16x1xf32> to vector<16x32xf32>
    %127 = arith.subf %117, %126 : vector<16x32xf32>
    %128 = arith.mulf %127, %127 : vector<16x32xf32>
    %cst_49 = arith.constant dense<0.000000e+00> : vector<16xf32>
    %129 = vector.multi_reduction <add>, %128, %cst_49 [1] : vector<16x32xf32> to vector<16xf32>
    %130 = vector.shape_cast %129 : vector<16xf32> to vector<16x1xf32>
    %cst_50 = arith.constant 3.200000e+01 : f32
    %131 = vector.broadcast %cst_50 : f32 to vector<16x1xf32>
    %132 = arith.divf %130, %131 : vector<16x1xf32>
    %133 = vector.broadcast %125 : vector<16x1xf32> to vector<16x32xf32>
    %134 = arith.subf %117, %133 : vector<16x32xf32>
    %cst_51 = arith.constant 9.99999996E-13 : f32
    %135 = vector.broadcast %cst_51 : f32 to vector<16x1xf32>
    %136 = arith.addf %132, %135 : vector<16x1xf32>
    %137 = math.rsqrt %136 : vector<16x1xf32>
    %138 = vector.broadcast %137 : vector<16x1xf32> to vector<16x32xf32>
    %139 = arith.mulf %134, %138 : vector<16x32xf32>
    %140 = vector.broadcast %119 : vector<1x32xf32> to vector<16x32xf32>
    %141 = arith.mulf %139, %140 : vector<16x32xf32>
    %142 = vector.broadcast %121 : vector<1x32xf32> to vector<16x32xf32>
    %143 = arith.addf %141, %142 : vector<16x32xf32>
    %c0_52 = arith.constant 0 : index
    %c0_53 = arith.constant 0 : index
    %c0_54 = arith.constant 0 : index
    %144 = vector.load %arg10[%c0_52, %c0_53, %c0_54] : memref<2x32x64xf32, #tpu.memory_space<vmem>>, vector<1x32x64xf32>
    %145 = vector.shape_cast %144 : vector<1x32x64xf32> to vector<32x64xf32>
    %c0_55 = arith.constant 0 : index
    %c0_56 = arith.constant 0 : index
    %c0_57 = arith.constant 0 : index
    %146 = vector.load %arg11[%c0_55, %c0_56, %c0_57] : memref<2x1x64xf32, #tpu.memory_space<vmem>>, vector<1x1x64xf32>
    %147 = vector.shape_cast %146 : vector<1x1x64xf32> to vector<1x64xf32>
    %cst_58 = arith.constant dense<0.000000e+00> : vector<16x64xf32>
    %148 = tpu.matmul %143, %145, %cst_58 {dimension_numbers = #tpu.dot_dimension_numbers<[1], [0], [0], [1], [0, 0, 1, 1], [], []>} : vector<16x32xf32>, vector<32x64xf32>, vector<16x64xf32> -> vector<16x64xf32>
    %149 = vector.broadcast %147 : vector<1x64xf32> to vector<16x64xf32>
    %150 = arith.addf %148, %149 : vector<16x64xf32>
    %cst_59 = arith.constant 5.000000e-01 : f32
    %151 = vector.broadcast %cst_59 : f32 to vector<16x64xf32>
    %152 = arith.mulf %151, %150 : vector<16x64xf32>
    %cst_60 = arith.constant 0.707106769 : f32
    %153 = vector.broadcast %cst_60 : f32 to vector<16x64xf32>
    %154 = arith.mulf %150, %153 : vector<16x64xf32>
    %155 = math.erf %154 : vector<16x64xf32>
    %cst_61 = arith.constant 1.000000e+00 : f32
    %156 = vector.broadcast %cst_61 : f32 to vector<16x64xf32>
    %157 = arith.addf %156, %155 : vector<16x64xf32>
    %158 = arith.mulf %152, %157 : vector<16x64xf32>
    %c0_62 = arith.constant 0 : index
    %c0_63 = arith.constant 0 : index
    %c0_64 = arith.constant 0 : index
    %159 = vector.load %arg12[%c0_62, %c0_63, %c0_64] : memref<2x64x32xf32, #tpu.memory_space<vmem>>, vector<1x64x32xf32>
    %160 = vector.shape_cast %159 : vector<1x64x32xf32> to vector<64x32xf32>
    %c0_65 = arith.constant 0 : index
    %c0_66 = arith.constant 0 : index
    %c0_67 = arith.constant 0 : index
    %161 = vector.load %arg13[%c0_65, %c0_66, %c0_67] : memref<2x1x32xf32, #tpu.memory_space<vmem>>, vector<1x1x32xf32>
    %162 = vector.shape_cast %161 : vector<1x1x32xf32> to vector<1x32xf32>
    %cst_68 = arith.constant dense<0.000000e+00> : vector<16x32xf32>
    %163 = tpu.matmul %158, %160, %cst_68 {dimension_numbers = #tpu.dot_dimension_numbers<[1], [0], [0], [1], [0, 0, 1, 1], [], []>} : vector<16x64xf32>, vector<64x32xf32>, vector<16x32xf32> -> vector<16x32xf32>
    %164 = vector.broadcast %162 : vector<1x32xf32> to vector<16x32xf32>
    %165 = arith.addf %163, %164 : vector<16x32xf32>
    %166 = arith.addf %143, %165 : vector<16x32xf32>
    %c0_69 = arith.constant 0 : index
    %c0_70 = arith.constant 0 : index
    %c0_71 = arith.constant 0 : index
    %167 = vector.load %arg14[%c0_69, %c0_70, %c0_71] : memref<2x1x32xf32, #tpu.memory_space<vmem>>, vector<1x1x32xf32>
    %168 = vector.shape_cast %167 : vector<1x1x32xf32> to vector<1x32xf32>
    %c0_72 = arith.constant 0 : index
    %c0_73 = arith.constant 0 : index
    %c0_74 = arith.constant 0 : index
    %169 = vector.load %arg15[%c0_72, %c0_73, %c0_74] : memref<2x1x32xf32, #tpu.memory_space<vmem>>, vector<1x1x32xf32>
    %170 = vector.shape_cast %169 : vector<1x1x32xf32> to vector<1x32xf32>
    %cst_75 = arith.constant dense<0.000000e+00> : vector<16xf32>
    %171 = vector.multi_reduction <add>, %166, %cst_75 [1] : vector<16x32xf32> to vector<16xf32>
    %172 = vector.shape_cast %171 : vector<16xf32> to vector<16x1xf32>
    %cst_76 = arith.constant 3.200000e+01 : f32
    %173 = vector.broadcast %cst_76 : f32 to vector<16x1xf32>
    %174 = arith.divf %172, %173 : vector<16x1xf32>
    %175 = vector.broadcast %174 : vector<16x1xf32> to vector<16x32xf32>
    %176 = arith.subf %166, %175 : vector<16x32xf32>
    %177 = arith.mulf %176, %176 : vector<16x32xf32>
    %cst_77 = arith.constant dense<0.000000e+00> : vector<16xf32>
    %178 = vector.multi_reduction <add>, %177, %cst_77 [1] : vector<16x32xf32> to vector<16xf32>
    %179 = vector.shape_cast %178 : vector<16xf32> to vector<16x1xf32>
    %cst_78 = arith.constant 3.200000e+01 : f32
    %180 = vector.broadcast %cst_78 : f32 to vector<16x1xf32>
    %181 = arith.divf %179, %180 : vector<16x1xf32>
    %182 = vector.broadcast %174 : vector<16x1xf32> to vector<16x32xf32>
    %183 = arith.subf %166, %182 : vector<16x32xf32>
    %cst_79 = arith.constant 9.99999996E-13 : f32
    %184 = vector.broadcast %cst_79 : f32 to vector<16x1xf32>
    %185 = arith.addf %181, %184 : vector<16x1xf32>
    %186 = math.rsqrt %185 : vector<16x1xf32>
    %187 = vector.broadcast %186 : vector<16x1xf32> to vector<16x32xf32>
    %188 = arith.mulf %183, %187 : vector<16x32xf32>
    %189 = vector.broadcast %168 : vector<1x32xf32> to vector<16x32xf32>
    %190 = arith.mulf %188, %189 : vector<16x32xf32>
    %191 = vector.broadcast %170 : vector<1x32xf32> to vector<16x32xf32>
    %192 = arith.addf %190, %191 : vector<16x32xf32>
    %c1 = arith.constant 1 : index
    %c0_80 = arith.constant 0 : index
    %c0_81 = arith.constant 0 : index
    %193 = vector.load %arg4[%c1, %c0_80, %c0_81] : memref<2x32x96xf32, #tpu.memory_space<vmem>>, vector<1x32x96xf32>
    %194 = vector.shape_cast %193 : vector<1x32x96xf32> to vector<32x96xf32>
    %c1_82 = arith.constant 1 : index
    %c0_83 = arith.constant 0 : index
    %c0_84 = arith.constant 0 : index
    %195 = vector.load %arg5[%c1_82, %c0_83, %c0_84] : memref<2x1x96xf32, #tpu.memory_space<vmem>>, vector<1x1x96xf32>
    %196 = vector.shape_cast %195 : vector<1x1x96xf32> to vector<1x96xf32>
    %cst_85 = arith.constant dense<0.000000e+00> : vector<16x96xf32>
    %197 = tpu.matmul %192, %194, %cst_85 {dimension_numbers = #tpu.dot_dimension_numbers<[1], [0], [0], [1], [0, 0, 1, 1], [], []>} : vector<16x32xf32>, vector<32x96xf32>, vector<16x96xf32> -> vector<16x96xf32>
    %198 = vector.broadcast %196 : vector<1x96xf32> to vector<16x96xf32>
    %199 = arith.addf %197, %198 : vector<16x96xf32>
    %200 = vector.extract_strided_slice %25 {offsets = [0, 0], sizes = [1, 8], strides = [1, 1]} : vector<2x8xf32> to vector<1x8xf32>
    %201 = vector.extract_strided_slice %199 {offsets = [0, 0], sizes = [8, 16], strides = [1, 1]} : vector<16x96xf32> to vector<8x16xf32>
    %202 = vector.extract_strided_slice %199 {offsets = [0, 32], sizes = [8, 16], strides = [1, 1]} : vector<16x96xf32> to vector<8x16xf32>
    %203 = vector.extract_strided_slice %199 {offsets = [0, 64], sizes = [8, 16], strides = [1, 1]} : vector<16x96xf32> to vector<8x16xf32>
    %204 = tpu.transpose %202, [1, 0] : vector<8x16xf32> -> vector<16x8xf32>
    %cst_86 = arith.constant dense<0.000000e+00> : vector<8x8xf32>
    %205 = tpu.matmul %201, %204, %cst_86 {dimension_numbers = #tpu.dot_dimension_numbers<[1], [0], [0], [1], [0, 0, 1, 1], [], []>} : vector<8x16xf32>, vector<16x8xf32>, vector<8x8xf32> -> vector<8x8xf32>
    %206 = vector.broadcast %200 : vector<1x8xf32> to vector<8x8xf32>
    %207 = arith.addf %205, %206 : vector<8x8xf32>
    %cst_87 = arith.constant dense<0xFF800000> : vector<8xf32>
    %208 = vector.multi_reduction <maximumf>, %207, %cst_87 [1] : vector<8x8xf32> to vector<8xf32>
    %209 = vector.shape_cast %208 : vector<8xf32> to vector<8x1xf32>
    %210 = vector.broadcast %209 : vector<8x1xf32> to vector<8x8xf32>
    %211 = arith.subf %207, %210 : vector<8x8xf32>
    %212 = math.exp %211 : vector<8x8xf32>
    %cst_88 = arith.constant dense<0.000000e+00> : vector<8xf32>
    %213 = vector.multi_reduction <add>, %212, %cst_88 [1] : vector<8x8xf32> to vector<8xf32>
    %214 = vector.shape_cast %213 : vector<8xf32> to vector<8x1xf32>
    %215 = tpu.reciprocal %214 {approx = true} : vector<8x1xf32> -> vector<8x1xf32>
    %216 = vector.broadcast %215 : vector<8x1xf32> to vector<8x8xf32>
    %217 = arith.mulf %212, %216 : vector<8x8xf32>
    %cst_89 = arith.constant dense<0.000000e+00> : vector<8x16xf32>
    %218 = tpu.matmul %217, %203, %cst_89 {dimension_numbers = #tpu.dot_dimension_numbers<[1], [0], [0], [1], [0, 0, 1, 1], [], []>} : vector<8x8xf32>, vector<8x16xf32>, vector<8x16xf32> -> vector<8x16xf32>
    %219 = vector.extract_strided_slice %199 {offsets = [0, 16], sizes = [8, 16], strides = [1, 1]} : vector<16x96xf32> to vector<8x16xf32>
    %220 = vector.extract_strided_slice %199 {offsets = [0, 48], sizes = [8, 16], strides = [1, 1]} : vector<16x96xf32> to vector<8x16xf32>
    %221 = vector.extract_strided_slice %199 {offsets = [0, 80], sizes = [8, 16], strides = [1, 1]} : vector<16x96xf32> to vector<8x16xf32>
    %222 = tpu.transpose %220, [1, 0] : vector<8x16xf32> -> vector<16x8xf32>
    %cst_90 = arith.constant dense<0.000000e+00> : vector<8x8xf32>
    %223 = tpu.matmul %219, %222, %cst_90 {dimension_numbers = #tpu.dot_dimension_numbers<[1], [0], [0], [1], [0, 0, 1, 1], [], []>} : vector<8x16xf32>, vector<16x8xf32>, vector<8x8xf32> -> vector<8x8xf32>
    %224 = vector.broadcast %200 : vector<1x8xf32> to vector<8x8xf32>
    %225 = arith.addf %223, %224 : vector<8x8xf32>
    %cst_91 = arith.constant dense<0xFF800000> : vector<8xf32>
    %226 = vector.multi_reduction <maximumf>, %225, %cst_91 [1] : vector<8x8xf32> to vector<8xf32>
    %227 = vector.shape_cast %226 : vector<8xf32> to vector<8x1xf32>
    %228 = vector.broadcast %227 : vector<8x1xf32> to vector<8x8xf32>
    %229 = arith.subf %225, %228 : vector<8x8xf32>
    %230 = math.exp %229 : vector<8x8xf32>
    %cst_92 = arith.constant dense<0.000000e+00> : vector<8xf32>
    %231 = vector.multi_reduction <add>, %230, %cst_92 [1] : vector<8x8xf32> to vector<8xf32>
    %232 = vector.shape_cast %231 : vector<8xf32> to vector<8x1xf32>
    %233 = tpu.reciprocal %232 {approx = true} : vector<8x1xf32> -> vector<8x1xf32>
    %234 = vector.broadcast %233 : vector<8x1xf32> to vector<8x8xf32>
    %235 = arith.mulf %230, %234 : vector<8x8xf32>
    %cst_93 = arith.constant dense<0.000000e+00> : vector<8x16xf32>
    %236 = tpu.matmul %235, %221, %cst_93 {dimension_numbers = #tpu.dot_dimension_numbers<[1], [0], [0], [1], [0, 0, 1, 1], [], []>} : vector<8x8xf32>, vector<8x16xf32>, vector<8x16xf32> -> vector<8x16xf32>
    %237 = tpu.concatenate %218, %236 in 1 : vector<8x16xf32>, vector<8x16xf32> -> vector<8x32xf32>
    %238 = vector.extract_strided_slice %25 {offsets = [1, 0], sizes = [1, 8], strides = [1, 1]} : vector<2x8xf32> to vector<1x8xf32>
    %239 = vector.extract_strided_slice %199 {offsets = [8, 0], sizes = [8, 16], strides = [1, 1]} : vector<16x96xf32> to vector<8x16xf32>
    %240 = vector.extract_strided_slice %199 {offsets = [8, 32], sizes = [8, 16], strides = [1, 1]} : vector<16x96xf32> to vector<8x16xf32>
    %241 = vector.extract_strided_slice %199 {offsets = [8, 64], sizes = [8, 16], strides = [1, 1]} : vector<16x96xf32> to vector<8x16xf32>
    %242 = tpu.transpose %240, [1, 0] : vector<8x16xf32> -> vector<16x8xf32>
    %cst_94 = arith.constant dense<0.000000e+00> : vector<8x8xf32>
    %243 = tpu.matmul %239, %242, %cst_94 {dimension_numbers = #tpu.dot_dimension_numbers<[1], [0], [0], [1], [0, 0, 1, 1], [], []>} : vector<8x16xf32>, vector<16x8xf32>, vector<8x8xf32> -> vector<8x8xf32>
    %244 = vector.broadcast %238 : vector<1x8xf32> to vector<8x8xf32>
    %245 = arith.addf %243, %244 : vector<8x8xf32>
    %cst_95 = arith.constant dense<0xFF800000> : vector<8xf32>
    %246 = vector.multi_reduction <maximumf>, %245, %cst_95 [1] : vector<8x8xf32> to vector<8xf32>
    %247 = vector.shape_cast %246 : vector<8xf32> to vector<8x1xf32>
    %248 = vector.broadcast %247 : vector<8x1xf32> to vector<8x8xf32>
    %249 = arith.subf %245, %248 : vector<8x8xf32>
    %250 = math.exp %249 : vector<8x8xf32>
    %cst_96 = arith.constant dense<0.000000e+00> : vector<8xf32>
    %251 = vector.multi_reduction <add>, %250, %cst_96 [1] : vector<8x8xf32> to vector<8xf32>
    %252 = vector.shape_cast %251 : vector<8xf32> to vector<8x1xf32>
    %253 = tpu.reciprocal %252 {approx = true} : vector<8x1xf32> -> vector<8x1xf32>
    %254 = vector.broadcast %253 : vector<8x1xf32> to vector<8x8xf32>
    %255 = arith.mulf %250, %254 : vector<8x8xf32>
    %cst_97 = arith.constant dense<0.000000e+00> : vector<8x16xf32>
    %256 = tpu.matmul %255, %241, %cst_97 {dimension_numbers = #tpu.dot_dimension_numbers<[1], [0], [0], [1], [0, 0, 1, 1], [], []>} : vector<8x8xf32>, vector<8x16xf32>, vector<8x16xf32> -> vector<8x16xf32>
    %257 = vector.extract_strided_slice %199 {offsets = [8, 16], sizes = [8, 16], strides = [1, 1]} : vector<16x96xf32> to vector<8x16xf32>
    %258 = vector.extract_strided_slice %199 {offsets = [8, 48], sizes = [8, 16], strides = [1, 1]} : vector<16x96xf32> to vector<8x16xf32>
    %259 = vector.extract_strided_slice %199 {offsets = [8, 80], sizes = [8, 16], strides = [1, 1]} : vector<16x96xf32> to vector<8x16xf32>
    %260 = tpu.transpose %258, [1, 0] : vector<8x16xf32> -> vector<16x8xf32>
    %cst_98 = arith.constant dense<0.000000e+00> : vector<8x8xf32>
    %261 = tpu.matmul %257, %260, %cst_98 {dimension_numbers = #tpu.dot_dimension_numbers<[1], [0], [0], [1], [0, 0, 1, 1], [], []>} : vector<8x16xf32>, vector<16x8xf32>, vector<8x8xf32> -> vector<8x8xf32>
    %262 = vector.broadcast %238 : vector<1x8xf32> to vector<8x8xf32>
    %263 = arith.addf %261, %262 : vector<8x8xf32>
    %cst_99 = arith.constant dense<0xFF800000> : vector<8xf32>
    %264 = vector.multi_reduction <maximumf>, %263, %cst_99 [1] : vector<8x8xf32> to vector<8xf32>
    %265 = vector.shape_cast %264 : vector<8xf32> to vector<8x1xf32>
    %266 = vector.broadcast %265 : vector<8x1xf32> to vector<8x8xf32>
    %267 = arith.subf %263, %266 : vector<8x8xf32>
    %268 = math.exp %267 : vector<8x8xf32>
    %cst_100 = arith.constant dense<0.000000e+00> : vector<8xf32>
    %269 = vector.multi_reduction <add>, %268, %cst_100 [1] : vector<8x8xf32> to vector<8xf32>
    %270 = vector.shape_cast %269 : vector<8xf32> to vector<8x1xf32>
    %271 = tpu.reciprocal %270 {approx = true} : vector<8x1xf32> -> vector<8x1xf32>
    %272 = vector.broadcast %271 : vector<8x1xf32> to vector<8x8xf32>
    %273 = arith.mulf %268, %272 : vector<8x8xf32>
    %cst_101 = arith.constant dense<0.000000e+00> : vector<8x16xf32>
    %274 = tpu.matmul %273, %259, %cst_101 {dimension_numbers = #tpu.dot_dimension_numbers<[1], [0], [0], [1], [0, 0, 1, 1], [], []>} : vector<8x8xf32>, vector<8x16xf32>, vector<8x16xf32> -> vector<8x16xf32>
    %275 = tpu.concatenate %256, %274 in 1 : vector<8x16xf32>, vector<8x16xf32> -> vector<8x32xf32>
    %276 = tpu.concatenate %237, %275 in 0 : vector<8x32xf32>, vector<8x32xf32> -> vector<16x32xf32>
    %c1_102 = arith.constant 1 : index
    %c0_103 = arith.constant 0 : index
    %c0_104 = arith.constant 0 : index
    %277 = vector.load %arg6[%c1_102, %c0_103, %c0_104] : memref<2x32x32xf32, #tpu.memory_space<vmem>>, vector<1x32x32xf32>
    %278 = vector.shape_cast %277 : vector<1x32x32xf32> to vector<32x32xf32>
    %c1_105 = arith.constant 1 : index
    %c0_106 = arith.constant 0 : index
    %c0_107 = arith.constant 0 : index
    %279 = vector.load %arg7[%c1_105, %c0_106, %c0_107] : memref<2x1x32xf32, #tpu.memory_space<vmem>>, vector<1x1x32xf32>
    %280 = vector.shape_cast %279 : vector<1x1x32xf32> to vector<1x32xf32>
    %cst_108 = arith.constant dense<0.000000e+00> : vector<16x32xf32>
    %281 = tpu.matmul %276, %278, %cst_108 {dimension_numbers = #tpu.dot_dimension_numbers<[1], [0], [0], [1], [0, 0, 1, 1], [], []>} : vector<16x32xf32>, vector<32x32xf32>, vector<16x32xf32> -> vector<16x32xf32>
    %282 = vector.broadcast %280 : vector<1x32xf32> to vector<16x32xf32>
    %283 = arith.addf %281, %282 : vector<16x32xf32>
    %284 = arith.addf %192, %283 : vector<16x32xf32>
    %c1_109 = arith.constant 1 : index
    %c0_110 = arith.constant 0 : index
    %c0_111 = arith.constant 0 : index
    %285 = vector.load %arg8[%c1_109, %c0_110, %c0_111] : memref<2x1x32xf32, #tpu.memory_space<vmem>>, vector<1x1x32xf32>
    %286 = vector.shape_cast %285 : vector<1x1x32xf32> to vector<1x32xf32>
    %c1_112 = arith.constant 1 : index
    %c0_113 = arith.constant 0 : index
    %c0_114 = arith.constant 0 : index
    %287 = vector.load %arg9[%c1_112, %c0_113, %c0_114] : memref<2x1x32xf32, #tpu.memory_space<vmem>>, vector<1x1x32xf32>
    %288 = vector.shape_cast %287 : vector<1x1x32xf32> to vector<1x32xf32>
    %cst_115 = arith.constant dense<0.000000e+00> : vector<16xf32>
    %289 = vector.multi_reduction <add>, %284, %cst_115 [1] : vector<16x32xf32> to vector<16xf32>
    %290 = vector.shape_cast %289 : vector<16xf32> to vector<16x1xf32>
    %cst_116 = arith.constant 3.200000e+01 : f32
    %291 = vector.broadcast %cst_116 : f32 to vector<16x1xf32>
    %292 = arith.divf %290, %291 : vector<16x1xf32>
    %293 = vector.broadcast %292 : vector<16x1xf32> to vector<16x32xf32>
    %294 = arith.subf %284, %293 : vector<16x32xf32>
    %295 = arith.mulf %294, %294 : vector<16x32xf32>
    %cst_117 = arith.constant dense<0.000000e+00> : vector<16xf32>
    %296 = vector.multi_reduction <add>, %295, %cst_117 [1] : vector<16x32xf32> to vector<16xf32>
    %297 = vector.shape_cast %296 : vector<16xf32> to vector<16x1xf32>
    %cst_118 = arith.constant 3.200000e+01 : f32
    %298 = vector.broadcast %cst_118 : f32 to vector<16x1xf32>
    %299 = arith.divf %297, %298 : vector<16x1xf32>
    %300 = vector.broadcast %292 : vector<16x1xf32> to vector<16x32xf32>
    %301 = arith.subf %284, %300 : vector<16x32xf32>
    %cst_119 = arith.constant 9.99999996E-13 : f32
    %302 = vector.broadcast %cst_119 : f32 to vector<16x1xf32>
    %303 = arith.addf %299, %302 : vector<16x1xf32>
    %304 = math.rsqrt %303 : vector<16x1xf32>
    %305 = vector.broadcast %304 : vector<16x1xf32> to vector<16x32xf32>
    %306 = arith.mulf %301, %305 : vector<16x32xf32>
    %307 = vector.broadcast %286 : vector<1x32xf32> to vector<16x32xf32>
    %308 = arith.mulf %306, %307 : vector<16x32xf32>
    %309 = vector.broadcast %288 : vector<1x32xf32> to vector<16x32xf32>
    %310 = arith.addf %308, %309 : vector<16x32xf32>
    %c1_120 = arith.constant 1 : index
    %c0_121 = arith.constant 0 : index
    %c0_122 = arith.constant 0 : index
    %311 = vector.load %arg10[%c1_120, %c0_121, %c0_122] : memref<2x32x64xf32, #tpu.memory_space<vmem>>, vector<1x32x64xf32>
    %312 = vector.shape_cast %311 : vector<1x32x64xf32> to vector<32x64xf32>
    %c1_123 = arith.constant 1 : index
    %c0_124 = arith.constant 0 : index
    %c0_125 = arith.constant 0 : index
    %313 = vector.load %arg11[%c1_123, %c0_124, %c0_125] : memref<2x1x64xf32, #tpu.memory_space<vmem>>, vector<1x1x64xf32>
    %314 = vector.shape_cast %313 : vector<1x1x64xf32> to vector<1x64xf32>
    %cst_126 = arith.constant dense<0.000000e+00> : vector<16x64xf32>
    %315 = tpu.matmul %310, %312, %cst_126 {dimension_numbers = #tpu.dot_dimension_numbers<[1], [0], [0], [1], [0, 0, 1, 1], [], []>} : vector<16x32xf32>, vector<32x64xf32>, vector<16x64xf32> -> vector<16x64xf32>
    %316 = vector.broadcast %314 : vector<1x64xf32> to vector<16x64xf32>
    %317 = arith.addf %315, %316 : vector<16x64xf32>
    %cst_127 = arith.constant 5.000000e-01 : f32
    %318 = vector.broadcast %cst_127 : f32 to vector<16x64xf32>
    %319 = arith.mulf %318, %317 : vector<16x64xf32>
    %cst_128 = arith.constant 0.707106769 : f32
    %320 = vector.broadcast %cst_128 : f32 to vector<16x64xf32>
    %321 = arith.mulf %317, %320 : vector<16x64xf32>
    %322 = math.erf %321 : vector<16x64xf32>
    %cst_129 = arith.constant 1.000000e+00 : f32
    %323 = vector.broadcast %cst_129 : f32 to vector<16x64xf32>
    %324 = arith.addf %323, %322 : vector<16x64xf32>
    %325 = arith.mulf %319, %324 : vector<16x64xf32>
    %c1_130 = arith.constant 1 : index
    %c0_131 = arith.constant 0 : index
    %c0_132 = arith.constant 0 : index
    %326 = vector.load %arg12[%c1_130, %c0_131, %c0_132] : memref<2x64x32xf32, #tpu.memory_space<vmem>>, vector<1x64x32xf32>
    %327 = vector.shape_cast %326 : vector<1x64x32xf32> to vector<64x32xf32>
    %c1_133 = arith.constant 1 : index
    %c0_134 = arith.constant 0 : index
    %c0_135 = arith.constant 0 : index
    %328 = vector.load %arg13[%c1_133, %c0_134, %c0_135] : memref<2x1x32xf32, #tpu.memory_space<vmem>>, vector<1x1x32xf32>
    %329 = vector.shape_cast %328 : vector<1x1x32xf32> to vector<1x32xf32>
    %cst_136 = arith.constant dense<0.000000e+00> : vector<16x32xf32>
    %330 = tpu.matmul %325, %327, %cst_136 {dimension_numbers = #tpu.dot_dimension_numbers<[1], [0], [0], [1], [0, 0, 1, 1], [], []>} : vector<16x64xf32>, vector<64x32xf32>, vector<16x32xf32> -> vector<16x32xf32>
    %331 = vector.broadcast %329 : vector<1x32xf32> to vector<16x32xf32>
    %332 = arith.addf %330, %331 : vector<16x32xf32>
    %333 = arith.addf %310, %332 : vector<16x32xf32>
    %c1_137 = arith.constant 1 : index
    %c0_138 = arith.constant 0 : index
    %c0_139 = arith.constant 0 : index
    %334 = vector.load %arg14[%c1_137, %c0_138, %c0_139] : memref<2x1x32xf32, #tpu.memory_space<vmem>>, vector<1x1x32xf32>
    %335 = vector.shape_cast %334 : vector<1x1x32xf32> to vector<1x32xf32>
    %c1_140 = arith.constant 1 : index
    %c0_141 = arith.constant 0 : index
    %c0_142 = arith.constant 0 : index
    %336 = vector.load %arg15[%c1_140, %c0_141, %c0_142] : memref<2x1x32xf32, #tpu.memory_space<vmem>>, vector<1x1x32xf32>
    %337 = vector.shape_cast %336 : vector<1x1x32xf32> to vector<1x32xf32>
    %cst_143 = arith.constant dense<0.000000e+00> : vector<16xf32>
    %338 = vector.multi_reduction <add>, %333, %cst_143 [1] : vector<16x32xf32> to vector<16xf32>
    %339 = vector.shape_cast %338 : vector<16xf32> to vector<16x1xf32>
    %cst_144 = arith.constant 3.200000e+01 : f32
    %340 = vector.broadcast %cst_144 : f32 to vector<16x1xf32>
    %341 = arith.divf %339, %340 : vector<16x1xf32>
    %342 = vector.broadcast %341 : vector<16x1xf32> to vector<16x32xf32>
    %343 = arith.subf %333, %342 : vector<16x32xf32>
    %344 = arith.mulf %343, %343 : vector<16x32xf32>
    %cst_145 = arith.constant dense<0.000000e+00> : vector<16xf32>
    %345 = vector.multi_reduction <add>, %344, %cst_145 [1] : vector<16x32xf32> to vector<16xf32>
    %346 = vector.shape_cast %345 : vector<16xf32> to vector<16x1xf32>
    %cst_146 = arith.constant 3.200000e+01 : f32
    %347 = vector.broadcast %cst_146 : f32 to vector<16x1xf32>
    %348 = arith.divf %346, %347 : vector<16x1xf32>
    %349 = vector.broadcast %341 : vector<16x1xf32> to vector<16x32xf32>
    %350 = arith.subf %333, %349 : vector<16x32xf32>
    %cst_147 = arith.constant 9.99999996E-13 : f32
    %351 = vector.broadcast %cst_147 : f32 to vector<16x1xf32>
    %352 = arith.addf %348, %351 : vector<16x1xf32>
    %353 = math.rsqrt %352 : vector<16x1xf32>
    %354 = vector.broadcast %353 : vector<16x1xf32> to vector<16x32xf32>
    %355 = arith.mulf %350, %354 : vector<16x32xf32>
    %356 = vector.broadcast %335 : vector<1x32xf32> to vector<16x32xf32>
    %357 = arith.mulf %355, %356 : vector<16x32xf32>
    %358 = vector.broadcast %337 : vector<1x32xf32> to vector<16x32xf32>
    %359 = arith.addf %357, %358 : vector<16x32xf32>
    %360 = vector.extract_strided_slice %359 {offsets = [0, 0], sizes = [1, 32], strides = [1, 1]} : vector<16x32xf32> to vector<1x32xf32>
    %361 = vector.extract_strided_slice %359 {offsets = [8, 0], sizes = [1, 32], strides = [1, 1]} : vector<16x32xf32> to vector<1x32xf32>
    %362 = tpu.concatenate %360, %361 in 0 : vector<1x32xf32>, vector<1x32xf32> -> vector<2x32xf32>
    %c0_148 = arith.constant 0 : index
    %c0_149 = arith.constant 0 : index
    %363 = vector.load %arg16[%c0_148, %c0_149] : memref<32x32xf32, #tpu.memory_space<vmem>>, vector<32x32xf32>
    %c0_150 = arith.constant 0 : index
    %c0_151 = arith.constant 0 : index
    %364 = vector.load %arg17[%c0_150, %c0_151] : memref<1x32xf32, #tpu.memory_space<vmem>>, vector<1x32xf32>
    %cst_152 = arith.constant dense<0.000000e+00> : vector<2x32xf32>
    %365 = tpu.matmul %362, %363, %cst_152 {dimension_numbers = #tpu.dot_dimension_numbers<[1], [0], [0], [1], [0, 0, 1, 1], [], []>} : vector<2x32xf32>, vector<32x32xf32>, vector<2x32xf32> -> vector<2x32xf32>
    %366 = vector.broadcast %364 : vector<1x32xf32> to vector<2x32xf32>
    %367 = arith.addf %365, %366 : vector<2x32xf32>
    %368 = math.tanh %367 : vector<2x32xf32>
    %c0_153 = arith.constant 0 : index
    %c0_154 = arith.constant 0 : index
    %369 = vector.load %arg18[%c0_153, %c0_154] : memref<32x3xf32, #tpu.memory_space<vmem>>, vector<32x3xf32>
    %c0_155 = arith.constant 0 : index
    %c0_156 = arith.constant 0 : index
    %370 = vector.load %arg19[%c0_155, %c0_156] : memref<1x3xf32, #tpu.memory_space<vmem>>, vector<1x3xf32>
    %cst_157 = arith.constant dense<0.000000e+00> : vector<2x3xf32>
    %371 = tpu.matmul %368, %369, %cst_157 {dimension_numbers = #tpu.dot_dimension_numbers<[1], [0], [0], [1], [0, 0, 1, 1], [], []>} : vector<2x32xf32>, vector<32x3xf32>, vector<2x3xf32> -> vector<2x3xf32>
    %372 = vector.broadcast %370 : vector<1x3xf32> to vector<2x3xf32>
    %373 = arith.addf %371, %372 : vector<2x3xf32>
    %c0_158 = arith.constant 0 : index
    %c0_159 = arith.constant 0 : index
    %374 = vector.load %arg20[%c0_158, %c0_159] : memref<2x3xf32, #tpu.memory_space<vmem>>, vector<2x3xf32>
    tpu.vector_store %arg20[%c0_158, %c0_159], %373 {strides = array<i32>} : memref<2x3xf32, #tpu.memory_space<vmem>>, vector<2x3xf32>,
    return
  }
}

</mosaic_0001>

<llo_original>
// kernel: bert_module_forward.1
$region0: #{bert_module_forward.1}
  #allocation0 [shape = 'u32[]', space=smem, size = 0x4, offset = 0x4, fixed_abs, tag = 'smem constant byte address 0x4 - core index']
  #allocation1 [shape = 'u32[144,128]{1,0:T(1,128)}', space=vmem, size = 0x12000, scoped, tag = 'internal scratch']
  %s0 = inlined_call_operand.vmem [shape: f32[16,32], index: 0, kind: input, shape index: {}]
  %s1 = inlined_call_operand.vmem [shape: f32[2,8], index: 1, kind: input, shape index: {}]
  %s2 = inlined_call_operand.vmem [shape: f32[1,32], index: 2, kind: input, shape index: {}]
  %s3 = inlined_call_operand.vmem [shape: f32[1,32], index: 3, kind: input, shape index: {}]
  %s4 = inlined_call_operand.vmem [shape: f32[2,32,96], index: 4, kind: input, shape index: {}]
  %s5 = inlined_call_operand.vmem [shape: f32[2,1,96], index: 5, kind: input, shape index: {}]
  %s6 = inlined_call_operand.vmem [shape: f32[2,32,32], index: 6, kind: input, shape index: {}]
  %s7 = inlined_call_operand.vmem [shape: f32[2,1,32], index: 7, kind: input, shape index: {}]
  %s8 = inlined_call_operand.vmem [shape: f32[2,1,32], index: 8, kind: input, shape index: {}]
  %s9 = inlined_call_operand.vmem [shape: f32[2,1,32], index: 9, kind: input, shape index: {}]
  %s10 = inlined_call_operand.vmem [shape: f32[2,32,64], index: 10, kind: input, shape index: {}]
  %s11 = inlined_call_operand.vmem [shape: f32[2,1,64], index: 11, kind: input, shape index: {}]
  %s12 = inlined_call_operand.vmem [shape: f32[2,64,32], index: 12, kind: input, shape index: {}]
  %s13 = inlined_call_operand.vmem [shape: f32[2,1,32], index: 13, kind: input, shape index: {}]
  %s14 = inlined_call_operand.vmem [shape: f32[2,1,32], index: 14, kind: input, shape index: {}]
  %s15 = inlined_call_operand.vmem [shape: f32[2,1,32], index: 15, kind: input, shape index: {}]
  %s16 = inlined_call_operand.vmem [shape: f32[32,32], index: 16, kind: input, shape index: {}]
  %s17 = inlined_call_operand.vmem [shape: f32[1,32], index: 17, kind: input, shape index: {}]
  %s18 = inlined_call_operand.vmem [shape: f32[32,3], index: 18, kind: input, shape index: {}]
  %s19 = inlined_call_operand.vmem [shape: f32[1,3], index: 19, kind: input, shape index: {}]
  %s20 = inlined_call_operand.hbm [shape: f32[2,3], index: 20, kind: output, shape index: {}]
  %s21 = sld [smem:[#allocation0]]
  $region90: #{bert_module_forward.1} parent=0
    _
  %s23 = ssub.s32 1, %s21
  %s24 = scalar_select 0, %s23, %s21
  $region1: #{bert_module_forward.1} parent=0
    #allocation2 [shape = 'u8[1024]{0}', space=vmem, size = 0x400, scoped, tag = 'output window, operand 0, single buffered']
    #allocation3 [shape = 's32[1]{0}', space=sflag, size = 0x4, scoped, tag = 'scoped memory for bert_module_forward.1']
    %25 = vsyncpa [#allocation3], 0
    // Predicated region
    $region2: #{bert_module_forward.1} parent=1 // pred_check
      _
    $region3: #{bert_module_forward.1} parent=1 // pred_check_branch
      %27 = sbr.rel (0) target = $region5
    $region4: #{bert_module_forward.1} parent=1 // pred_region
      _
    $region5: #{bert_module_forward.1} parent=1 // pred_fallthru
      _
    // Predicated region
    $region6: #{bert_module_forward.1} parent=1 // pred_check
      _
    $region7: #{bert_module_forward.1} parent=1 // pred_check_branch
      %29 = sbr.rel (0) target = $region9
    $region8: #{bert_module_forward.1} parent=1 // pred_region
      _
    $region9: #{bert_module_forward.1} parent=1 // pred_fallthru
      _
    // Predicated region
    $region10: #{bert_module_forward.1} parent=1 // pred_check
      _
    $region11: #{bert_module_forward.1} parent=1 // pred_check_branch
      %31 = sbr.rel (0) target = $region13
    $region12: #{bert_module_forward.1} parent=1 // pred_region
      _
    $region13: #{bert_module_forward.1} parent=1 // pred_fallthru
      _
    // Predicated region
    $region14: #{bert_module_forward.1} parent=1 // pred_check
      _
    $region15: #{bert_module_forward.1} parent=1 // pred_check_branch
      %33 = sbr.rel (0) target = $region17
    $region16: #{bert_module_forward.1} parent=1 // pred_region
      _
    $region17: #{bert_module_forward.1} parent=1 // pred_fallthru
      _
    // Predicated region
    $region18: #{bert_module_forward.1} parent=1 // pred_check
      _
    $region19: #{bert_module_forward.1} parent=1 // pred_check_branch
      %35 = sbr.rel (0) target = $region21
    $region20: #{bert_module_forward.1} parent=1 // pred_region
      _
    $region21: #{bert_module_forward.1} parent=1 // pred_fallthru
      _
    // Predicated region
    $region22: #{bert_module_forward.1} parent=1 // pred_check
      _
    $region23: #{bert_module_forward.1} parent=1 // pred_check_branch
      %37 = sbr.rel (0) target = $region25
    $region24: #{bert_module_forward.1} parent=1 // pred_region
      _
    $region25: #{bert_module_forward.1} parent=1 // pred_fallthru
      _
    // Predicated region
    $region26: #{bert_module_forward.1} parent=1 // pred_check
      _
    $region27: #{bert_module_forward.1} parent=1 // pred_check_branch
      %39 = sbr.rel (0) target = $region29
    $region28: #{bert_module_forward.1} parent=1 // pred_region
      _
    $region29: #{bert_module_forward.1} parent=1 // pred_fallthru
      _
    // Predicated region
    $region30: #{bert_module_forward.1} parent=1 // pred_check
      _
    $region31: #{bert_module_forward.1} parent=1 // pred_check_branch
      %41 = sbr.rel (0) target = $region33
    $region32: #{bert_module_forward.1} parent=1 // pred_region
      _
    $region33: #{bert_module_forward.1} parent=1 // pred_fallthru
      _
    // Predicated region
    $region34: #{bert_module_forward.1} parent=1 // pred_check
      _
    $region35: #{bert_module_forward.1} parent=1 // pred_check_branch
      %43 = sbr.rel (0) target = $region37
    $region36: #{bert_module_forward.1} parent=1 // pred_region
      _
    $region37: #{bert_module_forward.1} parent=1 // pred_fallthru
      _
    // Predicated region
    $region38: #{bert_module_forward.1} parent=1 // pred_check
      _
    $region39: #{bert_module_forward.1} parent=1 // pred_check_branch
      %45 = sbr.rel (0) target = $region41
    $region40: #{bert_module_forward.1} parent=1 // pred_region
      _
    $region41: #{bert_module_forward.1} parent=1 // pred_fallthru
      _
    // Predicated region
    $region42: #{bert_module_forward.1} parent=1 // pred_check
      _
    $region43: #{bert_module_forward.1} parent=1 // pred_check_branch
      %47 = sbr.rel (0) target = $region45
    $region44: #{bert_module_forward.1} parent=1 // pred_region
      _
    $region45: #{bert_module_forward.1} parent=1 // pred_fallthru
      _
    // Predicated region
    $region46: #{bert_module_forward.1} parent=1 // pred_check
      _
    $region47: #{bert_module_forward.1} parent=1 // pred_check_branch
      %49 = sbr.rel (0) target = $region49
    $region48: #{bert_module_forward.1} parent=1 // pred_region
      _
    $region49: #{bert_module_forward.1} parent=1 // pred_fallthru
      _
    // Predicated region
    $region50: #{bert_module_forward.1} parent=1 // pred_check
      _
    $region51: #{bert_module_forward.1} parent=1 // pred_check_branch
      %51 = sbr.rel (0) target = $region53
    $region52: #{bert_module_forward.1} parent=1 // pred_region
      _
    $region53: #{bert_module_forward.1} parent=1 // pred_fallthru
      _
    // Predicated region
    $region54: #{bert_module_forward.1} parent=1 // pred_check
      _
    $region55: #{bert_module_forward.1} parent=1 // pred_check_branch
      %53 = sbr.rel (0) target = $region57
    $region56: #{bert_module_forward.1} parent=1 // pred_region
      _
    $region57: #{bert_module_forward.1} parent=1 // pred_fallthru
      _
    // Predicated region
    $region58: #{bert_module_forward.1} parent=1 // pred_check
      _
    $region59: #{bert_module_forward.1} parent=1 // pred_check_branch
      %55 = sbr.rel (0) target = $region61
    $region60: #{bert_module_forward.1} parent=1 // pred_region
      _
    $region61: #{bert_module_forward.1} parent=1 // pred_fallthru
      _
    // Predicated region
    $region62: #{bert_module_forward.1} parent=1 // pred_check
      _
    $region63: #{bert_module_forward.1} parent=1 // pred_check_branch
      %57 = sbr.rel (0) target = $region65
    $region64: #{bert_module_forward.1} parent=1 // pred_region
      _
    $region65: #{bert_module_forward.1} parent=1 // pred_fallthru
      _
    // Predicated region
    $region66: #{bert_module_forward.1} parent=1 // pred_check
      _
    $region67: #{bert_module_forward.1} parent=1 // pred_check_branch
      %59 = sbr.rel (0) target = $region69
    $region68: #{bert_module_forward.1} parent=1 // pred_region
      _
    $region69: #{bert_module_forward.1} parent=1 // pred_fallthru
      _
    // Predicated region
    $region70: #{bert_module_forward.1} parent=1 // pred_check
      _
    $region71: #{bert_module_forward.1} parent=1 // pred_check_branch
      %61 = sbr.rel (0) target = $region73
    $region72: #{bert_module_forward.1} parent=1 // pred_region
      _
    $region73: #{bert_module_forward.1} parent=1 // pred_fallthru
      _
    // Predicated region
    $region74: #{bert_module_forward.1} parent=1 // pred_check
      _
    $region75: #{bert_module_forward.1} parent=1 // pred_check_branch
      %63 = sbr.rel (0) target = $region77
    $region76: #{bert_module_forward.1} parent=1 // pred_region
      _
    $region77: #{bert_module_forward.1} parent=1 // pred_fallthru
      _
    // Predicated region
    $region78: #{bert_module_forward.1} parent=1 // pred_check
      _
    $region79: #{bert_module_forward.1} parent=1 // pred_check_branch
      %65 = sbr.rel (0) target = $region81
    $region80: #{bert_module_forward.1} parent=1 // pred_region
      _
    $region81: #{bert_module_forward.1} parent=1 // pred_fallthru
      _
    %v66 = vld [vmem:[%s0] sm:$0xff]
    %v67 = vld [vmem:[%s0 + $0x8] sm:$0xff]
    %v68 = vld [vmem:[%s2] sm:$0x1]
    %v69 = vld [vmem:[%s3] sm:$0x1]
    %vm70 = vcmask 261120
    %v71 = vsel %vm70, %v66, 0.0
    %72 = vadd.xlane.f32.xlu0 %v71
    %v73 = vpop.xlane.xlu0 %72
    %v74 = vsel %vm70, %v67, 0.0
    %75 = vadd.xlane.f32.xlu0 %v74
    %v76 = vpop.xlane.xlu0 %75
    %v77 = vrcp.pop 32.0
    %v78 = vmul.f32 %v73, %v77
    %v79 = vmul.f32 %v76, %v77
    %v80 = vsub.f32 %v66, %v78
    %v81 = vsub.f32 %v67, %v79
    %v82 = vmul.f32 %v80, %v80
    %v83 = vmul.f32 %v81, %v81
    %v84 = vsel %vm70, %v82, 0.0
    %85 = vadd.xlane.f32.xlu0 %v84
    %v86 = vpop.xlane.xlu0 %85
    %v87 = vsel %vm70, %v83, 0.0
    %88 = vadd.xlane.f32.xlu0 %v87
    %v89 = vpop.xlane.xlu0 %88
    %v90 = vmul.f32 %v86, %v77
    %v91 = vmul.f32 %v89, %v77
    %v92 = vadd.f32 %v90, 1e-12
    %v93 = vadd.f32 %v91, 1e-12
    %v94 = vrsqrt.pop %v92
    %v95 = vrsqrt.pop %v93
    %v96 = vmul.f32 %v80, %v94
    %v97 = vmul.f32 %v81, %v95
    %v99 = vlaneseq
    %v100 = vshrl.u32 %v99, 7
    %v101 = vsub.s32 0, %v100
    %v102 = vrot.slane %v68, %v101
    %v104 = vmul.f32 %v96, %v102
    %v105 = vmul.f32 %v97, %v102
    %v107 = vlaneseq
    %v108 = vshrl.u32 %v107, 7
    %v109 = vsub.s32 0, %v108
    %v110 = vrot.slane %v69, %v109
    %v112 = vadd.f32 %v104, %v110
    %v113 = vadd.f32 %v105, %v110
    %v114 = vld [vmem:[%s1] sm:$0x3]
    %v115 = vld [vmem:[%s4] sm:$0xff]
    %v116 = vld [vmem:[%s4 + $0x8] sm:$0xff]
    %v117 = vld [vmem:[%s4 + $0x10] sm:$0xff]
    %v118 = vld [vmem:[%s4 + $0x18] sm:$0xff]
    %v119 = vld [vmem:[%s5] sm:$0x1]
    %v121 = vlaneseq
    %v122 = vshrl.u32 %v121, 7
    %v123 = vsub.s32 0, %v122
    %v124 = vrot.slane %v119, %v123
    %v127 = vsel %vm70, %v112, 0
    %v130 = vsel %vm70, %v113, 0
    %132 = vmatprep.subr.mxu0 0.0
    %133 = vmatpush1.msra.mxu0 0.0
    %134 = vmatprep.subr.mxu0 0.0
    %135 = vmatpush1.msra.mxu0 0.0
    %136 = vmatprep.subr.mxu0 0.0
    %137 = vmatpush1.msra.mxu0 0.0
    %138 = vmatprep.subr.mxu0 0.0
    %139 = vmatpush1.msra.mxu0 0.0
    %140 = vmatprep.subr.mxu0 0.0
    %141 = vmatpush1.msra.mxu0 0.0
    %142 = vmatprep.subr.mxu0 0.0
    %143 = vmatpush1.msra.mxu0 0.0
    %144 = vmatprep.subr.mxu0 0.0
    %145 = vmatpush1.msra.mxu0 0.0
    %146 = vmatprep.subr.mxu0 0.0
    %147 = vmatpush1.msra.mxu0 0.0
    %148 = vmatprep.subr.mxu0 0.0
    %149 = vmatpush1.msra.mxu0 0.0
    %150 = vmatprep.subr.mxu0 0.0
    %151 = vmatpush1.msra.mxu0 0.0
    %152 = vmatprep.subr.mxu0 0.0
    %153 = vmatpush1.msra.mxu0 0.0
    %154 = vmatprep.subr.mxu0 0.0
    %155 = vmatpush1.msra.mxu0 0.0
    %156 = vmatprep.subr.mxu0 0.0
    %157 = vmatpush1.msra.mxu0 %v118
    %158 = vmatprep.subr.mxu0 0.0
    %159 = vmatpush1.msra.mxu0 %v117
    %160 = vmatprep.subr.mxu0 0.0
    %161 = vmatpush1.msra.mxu0 %v116
    %162 = vmatprep.subr.mxu0 0.0
    %163 = vmatpush1.msra.mxu0 %v115
    %164 = vmatprep.subr.mxu0 0.0
    %165 = vmatpush2.msra.mxu0 0.0
    %166 = vmatprep.subr.mxu0 0.0
    %167 = vmatpush2.msra.mxu0 0.0
    %168 = vmatprep.subr.mxu0 0.0
    %169 = vmatpush2.msra.mxu0 0.0
    %170 = vmatprep.subr.mxu0 0.0
    %171 = vmatpush2.msra.mxu0 0.0
    %172 = vmatprep.subr.mxu0 0.0
    %173 = vmatpush2.msra.mxu0 0.0
    %174 = vmatprep.subr.mxu0 0.0
    %175 = vmatpush2.msra.mxu0 0.0
    %176 = vmatprep.subr.mxu0 0.0
    %177 = vmatpush2.msra.mxu0 0.0
    %178 = vmatprep.subr.mxu0 0.0
    %179 = vmatpush2.msra.mxu0 0.0
    %180 = vmatprep.subr.mxu0 0.0
    %181 = vmatpush2.msra.mxu0 0.0
    %182 = vmatprep.subr.mxu0 0.0
    %183 = vmatpush2.msra.mxu0 0.0
    %184 = vmatprep.subr.mxu0 0.0
    %185 = vmatpush2.msra.mxu0 0.0
    %186 = vmatprep.subr.mxu0 0.0
    %187 = vmatpush2.msra.mxu0 0.0
    %188 = vmatprep.subr.mxu0 0.0
    %189 = vmatpush2.msra.mxu0 0.0
    %190 = vmatprep.subr.mxu0 0.0
    %191 = vmatpush2.msra.mxu0 0.0
    %192 = vmatprep.subr.mxu0 0.0
    %193 = vmatpush2.msra.mxu0 0.0
    %194 = vmatprep.subr.mxu0 0.0
    %195 = vmatpush2.msra.mxu0 0.0
    %196 = vmatprep.mubr.f32.mxu0 0.0
    %197 = vmatmul.mubr.f32.gmra.mxu0 %v127
    %v198 = vpop.f32.mrf.mxu0
    %v199 = vadd.f32 %v124, %v198
    %v200 = vpop.f32.mrf.mxu0
    %201 = vmatprep.mubr.f32.mxu0 0.0
    %202 = vmatmul.mubr.f32.gmra.mxu0 %v130
    %v203 = vpop.f32.mrf.mxu0
    %v204 = vadd.f32 %v124, %v203
    %v205 = vpop.f32.mrf.mxu0
    %206 = vdwg.mxu0
    %v207 = vlaneseq
    %v208 = vshrl.u32 %v207, 7
    %v209 = vsub.s32 0, %v208
    %v210 = vrot.slane %v114, %v209
    %212 = vrot.lane.b32.xlu0 %v199, 96
    %v213 = vpop.permute.xlu0 %212
    %vm214 = vcmask 130048
    %v215 = vsel %vm214, %v199, 0
    %v217 = vsel %vm214, %v213, 0
    %219 = vmatprep.subr.mxu0 0.0
    %220 = vmatpush1.xpose.msra.mxu0 0.0
    %221 = vmatprep.subr.mxu0 0.0
    %222 = vmatpush1.xpose.msra.mxu0 0.0
    %223 = vmatprep.subr.mxu0 0.0
    %224 = vmatpush1.xpose.msra.mxu0 0.0
    %225 = vmatprep.subr.mxu0 0.0
    %226 = vmatpush1.xpose.msra.mxu0 0.0
    %227 = vmatprep.subr.mxu0 0.0
    %228 = vmatpush1.xpose.msra.mxu0 0.0
    %229 = vmatprep.subr.mxu0 0.0
    %230 = vmatpush1.xpose.msra.mxu0 0.0
    %231 = vmatprep.subr.mxu0 0.0
    %232 = vmatpush1.xpose.msra.mxu0 0.0
    %233 = vmatprep.subr.mxu0 0.0
    %234 = vmatpush1.xpose.msra.mxu0 0.0
    %235 = vmatprep.subr.mxu0 0.0
    %236 = vmatpush1.xpose.msra.mxu0 0.0
    %237 = vmatprep.subr.mxu0 0.0
    %238 = vmatpush1.xpose.msra.mxu0 0.0
    %239 = vmatprep.subr.mxu0 0.0
    %240 = vmatpush1.xpose.msra.mxu0 0.0
    %241 = vmatprep.subr.mxu0 0.0
    %242 = vmatpush1.xpose.msra.mxu0 0.0
    %243 = vmatprep.subr.mxu0 0.0
    %244 = vmatpush1.xpose.msra.mxu0 0.0
    %245 = vmatprep.subr.mxu0 0.0
    %246 = vmatpush1.xpose.msra.mxu0 0.0
    %247 = vmatprep.subr.mxu0 0.0
    %248 = vmatpush1.xpose.msra.mxu0 0.0
    %249 = vmatprep.subr.mxu0 0.0
    %250 = vmatpush1.xpose.msra.mxu0 %v217
    %251 = vmatprep.subr.mxu0 0.0
    %252 = vmatpush2.xpose.msra.mxu0 0.0
    %253 = vmatprep.subr.mxu0 0.0
    %254 = vmatpush2.xpose.msra.mxu0 0.0
    %255 = vmatprep.subr.mxu0 0.0
    %256 = vmatpush2.xpose.msra.mxu0 0.0
    %257 = vmatprep.subr.mxu0 0.0
    %258 = vmatpush2.xpose.msra.mxu0 0.0
    %259 = vmatprep.subr.mxu0 0.0
    %260 = vmatpush2.xpose.msra.mxu0 0.0
    %261 = vmatprep.subr.mxu0 0.0
    %262 = vmatpush2.xpose.msra.mxu0 0.0
    %263 = vmatprep.subr.mxu0 0.0
    %264 = vmatpush2.xpose.msra.mxu0 0.0
    %265 = vmatprep.subr.mxu0 0.0
    %266 = vmatpush2.xpose.msra.mxu0 0.0
    %267 = vmatprep.subr.mxu0 0.0
    %268 = vmatpush2.xpose.msra.mxu0 0.0
    %269 = vmatprep.subr.mxu0 0.0
    %270 = vmatpush2.xpose.msra.mxu0 0.0
    %271 = vmatprep.subr.mxu0 0.0
    %272 = vmatpush2.xpose.msra.mxu0 0.0
    %273 = vmatprep.subr.mxu0 0.0
    %274 = vmatpush2.xpose.msra.mxu0 0.0
    %275 = vmatprep.subr.mxu0 0.0
    %276 = vmatpush2.xpose.msra.mxu0 0.0
    %277 = vmatprep.subr.mxu0 0.0
    %278 = vmatpush2.xpose.msra.mxu0 0.0
    %279 = vmatprep.subr.mxu0 0.0
    %280 = vmatpush2.xpose.msra.mxu0 0.0
    %281 = vmatprep.subr.mxu0 0.0
    %282 = vmatpush2.xpose.msra.mxu0 0.0
    %283 = vmatprep.mubr.f32.mxu0 0.0
    %284 = vmatmul.mubr.f32.gmra.mxu0 %v215
    %v285 = vpop.f32.mrf.mxu0
    %v286 = vadd.f32 %v210, %v285
    %v287 = vpop.f32.mrf.mxu0
    %288 = vdwg.mxu0
    %vm289 = vcmask 64512
    %v290 = vsel %vm289, %v286, -inf
    %291 = vmax.xlane.f32.xlu0 %v290
    %v292 = vpop.xlane.xlu0 %291
    %v293 = vsub.f32 %v286, %v292
    %v294 = vmul.f32 %v293, 1.442695
    %v295 = vpow.pop %v294
    %v296 = vsel %vm289, %v295, 0.0
    %297 = vadd.xlane.f32.xlu0 %v296
    %v298 = vpop.xlane.xlu0 %297
    %v299 = vrcp.pop %v298
    %v300 = vmul.f32 %v295, %v299
    %301 = vrot.lane.b32.xlu0 %v199, 64
    %v302 = vpop.permute.xlu0 %301
    %v305 = vsel %vm289, %v300, 0
    %307 = vmatprep.subr.mxu0 0.0
    %308 = vmatpush1.msra.mxu0 0.0
    %309 = vmatprep.subr.mxu0 0.0
    %310 = vmatpush1.msra.mxu0 0.0
    %311 = vmatprep.subr.mxu0 0.0
    %312 = vmatpush1.msra.mxu0 0.0
    %313 = vmatprep.subr.mxu0 0.0
    %314 = vmatpush1.msra.mxu0 0.0
    %315 = vmatprep.subr.mxu0 0.0
    %316 = vmatpush1.msra.mxu0 0.0
    %317 = vmatprep.subr.mxu0 0.0
    %318 = vmatpush1.msra.mxu0 0.0
    %319 = vmatprep.subr.mxu0 0.0
    %320 = vmatpush1.msra.mxu0 0.0
    %321 = vmatprep.subr.mxu0 0.0
    %322 = vmatpush1.msra.mxu0 0.0
    %323 = vmatprep.subr.mxu0 0.0
    %324 = vmatpush1.msra.mxu0 0.0
    %325 = vmatprep.subr.mxu0 0.0
    %326 = vmatpush1.msra.mxu0 0.0
    %327 = vmatprep.subr.mxu0 0.0
    %328 = vmatpush1.msra.mxu0 0.0
    %329 = vmatprep.subr.mxu0 0.0
    %330 = vmatpush1.msra.mxu0 0.0
    %331 = vmatprep.subr.mxu0 0.0
    %332 = vmatpush1.msra.mxu0 0.0
    %333 = vmatprep.subr.mxu0 0.0
    %334 = vmatpush1.msra.mxu0 0.0
    %335 = vmatprep.subr.mxu0 0.0
    %336 = vmatpush1.msra.mxu0 0.0
    %337 = vmatprep.subr.mxu0 0.0
    %338 = vmatpush1.msra.mxu0 %v302
    %339 = vmatprep.subr.mxu0 0.0
    %340 = vmatpush2.msra.mxu0 0.0
    %341 = vmatprep.subr.mxu0 0.0
    %342 = vmatpush2.msra.mxu0 0.0
    %343 = vmatprep.subr.mxu0 0.0
    %344 = vmatpush2.msra.mxu0 0.0
    %345 = vmatprep.subr.mxu0 0.0
    %346 = vmatpush2.msra.mxu0 0.0
    %347 = vmatprep.subr.mxu0 0.0
    %348 = vmatpush2.msra.mxu0 0.0
    %349 = vmatprep.subr.mxu0 0.0
    %350 = vmatpush2.msra.mxu0 0.0
    %351 = vmatprep.subr.mxu0 0.0
    %352 = vmatpush2.msra.mxu0 0.0
    %353 = vmatprep.subr.mxu0 0.0
    %354 = vmatpush2.msra.mxu0 0.0
    %355 = vmatprep.subr.mxu0 0.0
    %356 = vmatpush2.msra.mxu0 0.0
    %357 = vmatprep.subr.mxu0 0.0
    %358 = vmatpush2.msra.mxu0 0.0
    %359 = vmatprep.subr.mxu0 0.0
    %360 = vmatpush2.msra.mxu0 0.0
    %361 = vmatprep.subr.mxu0 0.0
    %362 = vmatpush2.msra.mxu0 0.0
    %363 = vmatprep.subr.mxu0 0.0
    %364 = vmatpush2.msra.mxu0 0.0
    %365 = vmatprep.subr.mxu0 0.0
    %366 = vmatpush2.msra.mxu0 0.0
    %367 = vmatprep.subr.mxu0 0.0
    %368 = vmatpush2.msra.mxu0 0.0
    %369 = vmatprep.subr.mxu0 0.0
    %370 = vmatpush2.msra.mxu0 0.0
    %371 = vmatprep.mubr.f32.mxu0 0.0
    %372 = vmatmul.mubr.f32.gmra.mxu0 %v305
    %v373 = vpop.f32.mrf.mxu0
    %v374 = vadd.f32 0.0, %v373
    %v375 = vpop.f32.mrf.mxu0
    %376 = vdwg.mxu0
    %377 = vrot.lane.b32.xlu0 %v199, 112
    %v378 = vpop.permute.xlu0 %377
    %379 = vrot.lane.b32.xlu0 %v199, 80
    %v380 = vpop.permute.xlu0 %379
    %v381 = vsel %vm214, %v378, 0
    %v383 = vsel %vm214, %v380, 0
    %385 = vmatprep.subr.mxu0 0.0
    %386 = vmatpush1.xpose.msra.mxu0 0.0
    %387 = vmatprep.subr.mxu0 0.0
    %388 = vmatpush1.xpose.msra.mxu0 0.0
    %389 = vmatprep.subr.mxu0 0.0
    %390 = vmatpush1.xpose.msra.mxu0 0.0
    %391 = vmatprep.subr.mxu0 0.0
    %392 = vmatpush1.xpose.msra.mxu0 0.0
    %393 = vmatprep.subr.mxu0 0.0
    %394 = vmatpush1.xpose.msra.mxu0 0.0
    %395 = vmatprep.subr.mxu0 0.0
    %396 = vmatpush1.xpose.msra.mxu0 0.0
    %397 = vmatprep.subr.mxu0 0.0
    %398 = vmatpush1.xpose.msra.mxu0 0.0
    %399 = vmatprep.subr.mxu0 0.0
    %400 = vmatpush1.xpose.msra.mxu0 0.0
    %401 = vmatprep.subr.mxu0 0.0
    %402 = vmatpush1.xpose.msra.mxu0 0.0
    %403 = vmatprep.subr.mxu0 0.0
    %404 = vmatpush1.xpose.msra.mxu0 0.0
    %405 = vmatprep.subr.mxu0 0.0
    %406 = vmatpush1.xpose.msra.mxu0 0.0
    %407 = vmatprep.subr.mxu0 0.0
    %408 = vmatpush1.xpose.msra.mxu0 0.0
    %409 = vmatprep.subr.mxu0 0.0
    %410 = vmatpush1.xpose.msra.mxu0 0.0
    %411 = vmatprep.subr.mxu0 0.0
    %412 = vmatpush1.xpose.msra.mxu0 0.0
    %413 = vmatprep.subr.mxu0 0.0
    %414 = vmatpush1.xpose.msra.mxu0 0.0
    %415 = vmatprep.subr.mxu0 0.0
    %416 = vmatpush1.xpose.msra.mxu0 %v383
    %417 = vmatprep.subr.mxu0 0.0
    %418 = vmatpush2.xpose.msra.mxu0 0.0
    %419 = vmatprep.subr.mxu0 0.0
    %420 = vmatpush2.xpose.msra.mxu0 0.0
    %421 = vmatprep.subr.mxu0 0.0
    %422 = vmatpush2.xpose.msra.mxu0 0.0
    %423 = vmatprep.subr.mxu0 0.0
    %424 = vmatpush2.xpose.msra.mxu0 0.0
    %425 = vmatprep.subr.mxu0 0.0
    %426 = vmatpush2.xpose.msra.mxu0 0.0
    %427 = vmatprep.subr.mxu0 0.0
    %428 = vmatpush2.xpose.msra.mxu0 0.0
    %429 = vmatprep.subr.mxu0 0.0
    %430 = vmatpush2.xpose.msra.mxu0 0.0
    %431 = vmatprep.subr.mxu0 0.0
    %432 = vmatpush2.xpose.msra.mxu0 0.0
    %433 = vmatprep.subr.mxu0 0.0
    %434 = vmatpush2.xpose.msra.mxu0 0.0
    %435 = vmatprep.subr.mxu0 0.0
    %436 = vmatpush2.xpose.msra.mxu0 0.0
    %437 = vmatprep.subr.mxu0 0.0
    %438 = vmatpush2.xpose.msra.mxu0 0.0
    %439 = vmatprep.subr.mxu0 0.0
    %440 = vmatpush2.xpose.msra.mxu0 0.0
    %441 = vmatprep.subr.mxu0 0.0
    %442 = vmatpush2.xpose.msra.mxu0 0.0
    %443 = vmatprep.subr.mxu0 0.0
    %444 = vmatpush2.xpose.msra.mxu0 0.0
    %445 = vmatprep.subr.mxu0 0.0
    %446 = vmatpush2.xpose.msra.mxu0 0.0
    %447 = vmatprep.subr.mxu0 0.0
    %448 = vmatpush2.xpose.msra.mxu0 0.0
    %449 = vmatprep.mubr.f32.mxu0 0.0
    %450 = vmatmul.mubr.f32.gmra.mxu0 %v381
    %v451 = vpop.f32.mrf.mxu0
    %v452 = vadd.f32 %v210, %v451
    %v453 = vpop.f32.mrf.mxu0
    %454 = vdwg.mxu0
    %v455 = vsel %vm289, %v452, -inf
    %456 = vmax.xlane.f32.xlu0 %v455
    %v457 = vpop.xlane.xlu0 %456
    %v458 = vsub.f32 %v452, %v457
    %v459 = vmul.f32 %v458, 1.442695
    %v460 = vpow.pop %v459
    %v461 = vsel %vm289, %v460, 0.0
    %462 = vadd.xlane.f32.xlu0 %v461
    %v463 = vpop.xlane.xlu0 %462
    %v464 = vrcp.pop %v463
    %v465 = vmul.f32 %v460, %v464
    %466 = vrot.lane.b32.xlu0 %v199, 48
    %v467 = vpop.permute.xlu0 %466
    %v470 = vsel %vm289, %v465, 0
    %472 = vmatprep.subr.mxu0 0.0
    %473 = vmatpush1.msra.mxu0 0.0
    %474 = vmatprep.subr.mxu0 0.0
    %475 = vmatpush1.msra.mxu0 0.0
    %476 = vmatprep.subr.mxu0 0.0
    %477 = vmatpush1.msra.mxu0 0.0
    %478 = vmatprep.subr.mxu0 0.0
    %479 = vmatpush1.msra.mxu0 0.0
    %480 = vmatprep.subr.mxu0 0.0
    %481 = vmatpush1.msra.mxu0 0.0
    %482 = vmatprep.subr.mxu0 0.0
    %483 = vmatpush1.msra.mxu0 0.0
    %484 = vmatprep.subr.mxu0 0.0
    %485 = vmatpush1.msra.mxu0 0.0
    %486 = vmatprep.subr.mxu0 0.0
    %487 = vmatpush1.msra.mxu0 0.0
    %488 = vmatprep.subr.mxu0 0.0
    %489 = vmatpush1.msra.mxu0 0.0
    %490 = vmatprep.subr.mxu0 0.0
    %491 = vmatpush1.msra.mxu0 0.0
    %492 = vmatprep.subr.mxu0 0.0
    %493 = vmatpush1.msra.mxu0 0.0
    %494 = vmatprep.subr.mxu0 0.0
    %495 = vmatpush1.msra.mxu0 0.0
    %496 = vmatprep.subr.mxu0 0.0
    %497 = vmatpush1.msra.mxu0 0.0
    %498 = vmatprep.subr.mxu0 0.0
    %499 = vmatpush1.msra.mxu0 0.0
    %500 = vmatprep.subr.mxu0 0.0
    %501 = vmatpush1.msra.mxu0 0.0
    %502 = vmatprep.subr.mxu0 0.0
    %503 = vmatpush1.msra.mxu0 %v467
    %504 = vmatprep.subr.mxu0 0.0
    %505 = vmatpush2.msra.mxu0 0.0
    %506 = vmatprep.subr.mxu0 0.0
    %507 = vmatpush2.msra.mxu0 0.0
    %508 = vmatprep.subr.mxu0 0.0
    %509 = vmatpush2.msra.mxu0 0.0
    %510 = vmatprep.subr.mxu0 0.0
    %511 = vmatpush2.msra.mxu0 0.0
    %512 = vmatprep.subr.mxu0 0.0
    %513 = vmatpush2.msra.mxu0 0.0
    %514 = vmatprep.subr.mxu0 0.0
    %515 = vmatpush2.msra.mxu0 0.0
    %516 = vmatprep.subr.mxu0 0.0
    %517 = vmatpush2.msra.mxu0 0.0
    %518 = vmatprep.subr.mxu0 0.0
    %519 = vmatpush2.msra.mxu0 0.0
    %520 = vmatprep.subr.mxu0 0.0
    %521 = vmatpush2.msra.mxu0 0.0
    %522 = vmatprep.subr.mxu0 0.0
    %523 = vmatpush2.msra.mxu0 0.0
    %524 = vmatprep.subr.mxu0 0.0
    %525 = vmatpush2.msra.mxu0 0.0
    %526 = vmatprep.subr.mxu0 0.0
    %527 = vmatpush2.msra.mxu0 0.0
    %528 = vmatprep.subr.mxu0 0.0
    %529 = vmatpush2.msra.mxu0 0.0
    %530 = vmatprep.subr.mxu0 0.0
    %531 = vmatpush2.msra.mxu0 0.0
    %532 = vmatprep.subr.mxu0 0.0
    %533 = vmatpush2.msra.mxu0 0.0
    %534 = vmatprep.subr.mxu0 0.0
    %535 = vmatpush2.msra.mxu0 0.0
    %536 = vmatprep.mubr.f32.mxu0 0.0
    %537 = vmatmul.mubr.f32.gmra.mxu0 %v470
    %v538 = vpop.f32.mrf.mxu0
    %v539 = vadd.f32 0.0, %v538
    %v540 = vpop.f32.mrf.mxu0
    %541 = vdwg.mxu0
    %543 = vrot.lane.b32.xlu0 %v539, 16
    %v544 = vpop.permute.xlu0 %543
    %v546 = vsel %vm214, %v374, %v544
    %v547 = vlaneseq
    %v548 = vshrl.u32 %v547, 7
    %v549 = vsub.s32 1, %v548
    %v550 = vrot.slane %v114, %v549
    %552 = vrot.lane.b32.xlu0 %v204, 96
    %v553 = vpop.permute.xlu0 %552
    %v554 = vsel %vm214, %v204, 0
    %v556 = vsel %vm214, %v553, 0
    %558 = vmatprep.subr.mxu0 0.0
    %559 = vmatpush1.xpose.msra.mxu0 0.0
    %560 = vmatprep.subr.mxu0 0.0
    %561 = vmatpush1.xpose.msra.mxu0 0.0
    %562 = vmatprep.subr.mxu0 0.0
    %563 = vmatpush1.xpose.msra.mxu0 0.0
    %564 = vmatprep.subr.mxu0 0.0
    %565 = vmatpush1.xpose.msra.mxu0 0.0
    %566 = vmatprep.subr.mxu0 0.0
    %567 = vmatpush1.xpose.msra.mxu0 0.0
    %568 = vmatprep.subr.mxu0 0.0
    %569 = vmatpush1.xpose.msra.mxu0 0.0
    %570 = vmatprep.subr.mxu0 0.0
    %571 = vmatpush1.xpose.msra.mxu0 0.0
    %572 = vmatprep.subr.mxu0 0.0
    %573 = vmatpush1.xpose.msra.mxu0 0.0
    %574 = vmatprep.subr.mxu0 0.0
    %575 = vmatpush1.xpose.msra.mxu0 0.0
    %576 = vmatprep.subr.mxu0 0.0
    %577 = vmatpush1.xpose.msra.mxu0 0.0
    %578 = vmatprep.subr.mxu0 0.0
    %579 = vmatpush1.xpose.msra.mxu0 0.0
    %580 = vmatprep.subr.mxu0 0.0
    %581 = vmatpush1.xpose.msra.mxu0 0.0
    %582 = vmatprep.subr.mxu0 0.0
    %583 = vmatpush1.xpose.msra.mxu0 0.0
    %584 = vmatprep.subr.mxu0 0.0
    %585 = vmatpush1.xpose.msra.mxu0 0.0
    %586 = vmatprep.subr.mxu0 0.0
    %587 = vmatpush1.xpose.msra.mxu0 0.0
    %588 = vmatprep.subr.mxu0 0.0
    %589 = vmatpush1.xpose.msra.mxu0 %v556
    %590 = vmatprep.subr.mxu0 0.0
    %591 = vmatpush2.xpose.msra.mxu0 0.0
    %592 = vmatprep.subr.mxu0 0.0
    %593 = vmatpush2.xpose.msra.mxu0 0.0
    %594 = vmatprep.subr.mxu0 0.0
    %595 = vmatpush2.xpose.msra.mxu0 0.0
    %596 = vmatprep.subr.mxu0 0.0
    %597 = vmatpush2.xpose.msra.mxu0 0.0
    %598 = vmatprep.subr.mxu0 0.0
    %599 = vmatpush2.xpose.msra.mxu0 0.0
    %600 = vmatprep.subr.mxu0 0.0
    %601 = vmatpush2.xpose.msra.mxu0 0.0
    %602 = vmatprep.subr.mxu0 0.0
    %603 = vmatpush2.xpose.msra.mxu0 0.0
    %604 = vmatprep.subr.mxu0 0.0
    %605 = vmatpush2.xpose.msra.mxu0 0.0
    %606 = vmatprep.subr.mxu0 0.0
    %607 = vmatpush2.xpose.msra.mxu0 0.0
    %608 = vmatprep.subr.mxu0 0.0
    %609 = vmatpush2.xpose.msra.mxu0 0.0
    %610 = vmatprep.subr.mxu0 0.0
    %611 = vmatpush2.xpose.msra.mxu0 0.0
    %612 = vmatprep.subr.mxu0 0.0
    %613 = vmatpush2.xpose.msra.mxu0 0.0
    %614 = vmatprep.subr.mxu0 0.0
    %615 = vmatpush2.xpose.msra.mxu0 0.0
    %616 = vmatprep.subr.mxu0 0.0
    %617 = vmatpush2.xpose.msra.mxu0 0.0
    %618 = vmatprep.subr.mxu0 0.0
    %619 = vmatpush2.xpose.msra.mxu0 0.0
    %620 = vmatprep.subr.mxu0 0.0
    %621 = vmatpush2.xpose.msra.mxu0 0.0
    %622 = vmatprep.mubr.f32.mxu0 0.0
    %623 = vmatmul.mubr.f32.gmra.mxu0 %v554
    %v624 = vpop.f32.mrf.mxu0
    %v625 = vadd.f32 %v550, %v624
    %v626 = vpop.f32.mrf.mxu0
    %627 = vdwg.mxu0
    %v628 = vsel %vm289, %v625, -inf
    %629 = vmax.xlane.f32.xlu0 %v628
    %v630 = vpop.xlane.xlu0 %629
    %v631 = vsub.f32 %v625, %v630
    %v632 = vmul.f32 %v631, 1.442695
    %v633 = vpow.pop %v632
    %v634 = vsel %vm289, %v633, 0.0
    %635 = vadd.xlane.f32.xlu0 %v634
    %v636 = vpop.xlane.xlu0 %635
    %v637 = vrcp.pop %v636
    %v638 = vmul.f32 %v633, %v637
    %639 = vrot.lane.b32.xlu0 %v204, 64
    %v640 = vpop.permute.xlu0 %639
    %v643 = vsel %vm289, %v638, 0
    %645 = vmatprep.subr.mxu0 0.0
    %646 = vmatpush1.msra.mxu0 0.0
    %647 = vmatprep.subr.mxu0 0.0
    %648 = vmatpush1.msra.mxu0 0.0
    %649 = vmatprep.subr.mxu0 0.0
    %650 = vmatpush1.msra.mxu0 0.0
    %651 = vmatprep.subr.mxu0 0.0
    %652 = vmatpush1.msra.mxu0 0.0
    %653 = vmatprep.subr.mxu0 0.0
    %654 = vmatpush1.msra.mxu0 0.0
    %655 = vmatprep.subr.mxu0 0.0
    %656 = vmatpush1.msra.mxu0 0.0
    %657 = vmatprep.subr.mxu0 0.0
    %658 = vmatpush1.msra.mxu0 0.0
    %659 = vmatprep.subr.mxu0 0.0
    %660 = vmatpush1.msra.mxu0 0.0
    %661 = vmatprep.subr.mxu0 0.0
    %662 = vmatpush1.msra.mxu0 0.0
    %663 = vmatprep.subr.mxu0 0.0
    %664 = vmatpush1.msra.mxu0 0.0
    %665 = vmatprep.subr.mxu0 0.0
    %666 = vmatpush1.msra.mxu0 0.0
    %667 = vmatprep.subr.mxu0 0.0
    %668 = vmatpush1.msra.mxu0 0.0
    %669 = vmatprep.subr.mxu0 0.0
    %670 = vmatpush1.msra.mxu0 0.0
    %671 = vmatprep.subr.mxu0 0.0
    %672 = vmatpush1.msra.mxu0 0.0
    %673 = vmatprep.subr.mxu0 0.0
    %674 = vmatpush1.msra.mxu0 0.0
    %675 = vmatprep.subr.mxu0 0.0
    %676 = vmatpush1.msra.mxu0 %v640
    %677 = vmatprep.subr.mxu0 0.0
    %678 = vmatpush2.msra.mxu0 0.0
    %679 = vmatprep.subr.mxu0 0.0
    %680 = vmatpush2.msra.mxu0 0.0
    %681 = vmatprep.subr.mxu0 0.0
    %682 = vmatpush2.msra.mxu0 0.0
    %683 = vmatprep.subr.mxu0 0.0
    %684 = vmatpush2.msra.mxu0 0.0
    %685 = vmatprep.subr.mxu0 0.0
    %686 = vmatpush2.msra.mxu0 0.0
    %687 = vmatprep.subr.mxu0 0.0
    %688 = vmatpush2.msra.mxu0 0.0
    %689 = vmatprep.subr.mxu0 0.0
    %690 = vmatpush2.msra.mxu0 0.0
    %691 = vmatprep.subr.mxu0 0.0
    %692 = vmatpush2.msra.mxu0 0.0
    %693 = vmatprep.subr.mxu0 0.0
    %694 = vmatpush2.msra.mxu0 0.0
    %695 = vmatprep.subr.mxu0 0.0
    %696 = vmatpush2.msra.mxu0 0.0
    %697 = vmatprep.subr.mxu0 0.0
    %698 = vmatpush2.msra.mxu0 0.0
    %699 = vmatprep.subr.mxu0 0.0
    %700 = vmatpush2.msra.mxu0 0.0
    %701 = vmatprep.subr.mxu0 0.0
    %702 = vmatpush2.msra.mxu0 0.0
    %703 = vmatprep.subr.mxu0 0.0
    %704 = vmatpush2.msra.mxu0 0.0
    %705 = vmatprep.subr.mxu0 0.0
    %706 = vmatpush2.msra.mxu0 0.0
    %707 = vmatprep.subr.mxu0 0.0
    %708 = vmatpush2.msra.mxu0 0.0
    %709 = vmatprep.mubr.f32.mxu0 0.0
    %710 = vmatmul.mubr.f32.gmra.mxu0 %v643
    %v711 = vpop.f32.mrf.mxu0
    %v712 = vadd.f32 0.0, %v711
    %v713 = vpop.f32.mrf.mxu0
    %714 = vdwg.mxu0
    %715 = vrot.lane.b32.xlu0 %v204, 112
    %v716 = vpop.permute.xlu0 %715
    %717 = vrot.lane.b32.xlu0 %v204, 80
    %v718 = vpop.permute.xlu0 %717
    %v719 = vsel %vm214, %v716, 0
    %v721 = vsel %vm214, %v718, 0
    %723 = vmatprep.subr.mxu0 0.0
    %724 = vmatpush1.xpose.msra.mxu0 0.0
    %725 = vmatprep.subr.mxu0 0.0
    %726 = vmatpush1.xpose.msra.mxu0 0.0
    %727 = vmatprep.subr.mxu0 0.0
    %728 = vmatpush1.xpose.msra.mxu0 0.0
    %729 = vmatprep.subr.mxu0 0.0
    %730 = vmatpush1.xpose.msra.mxu0 0.0
    %731 = vmatprep.subr.mxu0 0.0
    %732 = vmatpush1.xpose.msra.mxu0 0.0
    %733 = vmatprep.subr.mxu0 0.0
    %734 = vmatpush1.xpose.msra.mxu0 0.0
    %735 = vmatprep.subr.mxu0 0.0
    %736 = vmatpush1.xpose.msra.mxu0 0.0
    %737 = vmatprep.subr.mxu0 0.0
    %738 = vmatpush1.xpose.msra.mxu0 0.0
    %739 = vmatprep.subr.mxu0 0.0
    %740 = vmatpush1.xpose.msra.mxu0 0.0
    %741 = vmatprep.subr.mxu0 0.0
    %742 = vmatpush1.xpose.msra.mxu0 0.0
    %743 = vmatprep.subr.mxu0 0.0
    %744 = vmatpush1.xpose.msra.mxu0 0.0
    %745 = vmatprep.subr.mxu0 0.0
    %746 = vmatpush1.xpose.msra.mxu0 0.0
    %747 = vmatprep.subr.mxu0 0.0
    %748 = vmatpush1.xpose.msra.mxu0 0.0
    %749 = vmatprep.subr.mxu0 0.0
    %750 = vmatpush1.xpose.msra.mxu0 0.0
    %751 = vmatprep.subr.mxu0 0.0
    %752 = vmatpush1.xpose.msra.mxu0 0.0
    %753 = vmatprep.subr.mxu0 0.0
    %754 = vmatpush1.xpose.msra.mxu0 %v721
    %755 = vmatprep.subr.mxu0 0.0
    %756 = vmatpush2.xpose.msra.mxu0 0.0
    %757 = vmatprep.subr.mxu0 0.0
    %758 = vmatpush2.xpose.msra.mxu0 0.0
    %759 = vmatprep.subr.mxu0 0.0
    %760 = vmatpush2.xpose.msra.mxu0 0.0
    %761 = vmatprep.subr.mxu0 0.0
    %762 = vmatpush2.xpose.msra.mxu0 0.0
    %763 = vmatprep.subr.mxu0 0.0
    %764 = vmatpush2.xpose.msra.mxu0 0.0
    %765 = vmatprep.subr.mxu0 0.0
    %766 = vmatpush2.xpose.msra.mxu0 0.0
    %767 = vmatprep.subr.mxu0 0.0
    %768 = vmatpush2.xpose.msra.mxu0 0.0
    %769 = vmatprep.subr.mxu0 0.0
    %770 = vmatpush2.xpose.msra.mxu0 0.0
    %771 = vmatprep.subr.mxu0 0.0
    %772 = vmatpush2.xpose.msra.mxu0 0.0
    %773 = vmatprep.subr.mxu0 0.0
    %774 = vmatpush2.xpose.msra.mxu0 0.0
    %775 = vmatprep.subr.mxu0 0.0
    %776 = vmatpush2.xpose.msra.mxu0 0.0
    %777 = vmatprep.subr.mxu0 0.0
    %778 = vmatpush2.xpose.msra.mxu0 0.0
    %779 = vmatprep.subr.mxu0 0.0
    %780 = vmatpush2.xpose.msra.mxu0 0.0
    %781 = vmatprep.subr.mxu0 0.0
    %782 = vmatpush2.xpose.msra.mxu0 0.0
    %783 = vmatprep.subr.mxu0 0.0
    %784 = vmatpush2.xpose.msra.mxu0 0.0
    %785 = vmatprep.subr.mxu0 0.0
    %786 = vmatpush2.xpose.msra.mxu0 0.0
    %787 = vmatprep.mubr.f32.mxu0 0.0
    %788 = vmatmul.mubr.f32.gmra.mxu0 %v719
    %v789 = vpop.f32.mrf.mxu0
    %v790 = vadd.f32 %v550, %v789
    %v791 = vpop.f32.mrf.mxu0
    %792 = vdwg.mxu0
    %v793 = vsel %vm289, %v790, -inf
    %794 = vmax.xlane.f32.xlu0 %v793
    %v795 = vpop.xlane.xlu0 %794
    %v796 = vsub.f32 %v790, %v795
    %v797 = vmul.f32 %v796, 1.442695
    %v798 = vpow.pop %v797
    %v799 = vsel %vm289, %v798, 0.0
    %800 = vadd.xlane.f32.xlu0 %v799
    %v801 = vpop.xlane.xlu0 %800
    %v802 = vrcp.pop %v801
    %v803 = vmul.f32 %v798, %v802
    %804 = vrot.lane.b32.xlu0 %v204, 48
    %v805 = vpop.permute.xlu0 %804
    %v808 = vsel %vm289, %v803, 0
    %810 = vmatprep.subr.mxu0 0.0
    %811 = vmatpush1.msra.mxu0 0.0
    %812 = vmatprep.subr.mxu0 0.0
    %813 = vmatpush1.msra.mxu0 0.0
    %814 = vmatprep.subr.mxu0 0.0
    %815 = vmatpush1.msra.mxu0 0.0
    %816 = vmatprep.subr.mxu0 0.0
    %817 = vmatpush1.msra.mxu0 0.0
    %818 = vmatprep.subr.mxu0 0.0
    %819 = vmatpush1.msra.mxu0 0.0
    %820 = vmatprep.subr.mxu0 0.0
    %821 = vmatpush1.msra.mxu0 0.0
    %822 = vmatprep.subr.mxu0 0.0
    %823 = vmatpush1.msra.mxu0 0.0
    %824 = vmatprep.subr.mxu0 0.0
    %825 = vmatpush1.msra.mxu0 0.0
    %826 = vmatprep.subr.mxu0 0.0
    %827 = vmatpush1.msra.mxu0 0.0
    %828 = vmatprep.subr.mxu0 0.0
    %829 = vmatpush1.msra.mxu0 0.0
    %830 = vmatprep.subr.mxu0 0.0
    %831 = vmatpush1.msra.mxu0 0.0
    %832 = vmatprep.subr.mxu0 0.0
    %833 = vmatpush1.msra.mxu0 0.0
    %834 = vmatprep.subr.mxu0 0.0
    %835 = vmatpush1.msra.mxu0 0.0
    %836 = vmatprep.subr.mxu0 0.0
    %837 = vmatpush1.msra.mxu0 0.0
    %838 = vmatprep.subr.mxu0 0.0
    %839 = vmatpush1.msra.mxu0 0.0
    %840 = vmatprep.subr.mxu0 0.0
    %841 = vmatpush1.msra.mxu0 %v805
    %842 = vmatprep.subr.mxu0 0.0
    %843 = vmatpush2.msra.mxu0 0.0
    %844 = vmatprep.subr.mxu0 0.0
    %845 = vmatpush2.msra.mxu0 0.0
    %846 = vmatprep.subr.mxu0 0.0
    %847 = vmatpush2.msra.mxu0 0.0
    %848 = vmatprep.subr.mxu0 0.0
    %849 = vmatpush2.msra.mxu0 0.0
    %850 = vmatprep.subr.mxu0 0.0
    %851 = vmatpush2.msra.mxu0 0.0
    %852 = vmatprep.subr.mxu0 0.0
    %853 = vmatpush2.msra.mxu0 0.0
    %854 = vmatprep.subr.mxu0 0.0
    %855 = vmatpush2.msra.mxu0 0.0
    %856 = vmatprep.subr.mxu0 0.0
    %857 = vmatpush2.msra.mxu0 0.0
    %858 = vmatprep.subr.mxu0 0.0
    %859 = vmatpush2.msra.mxu0 0.0
    %860 = vmatprep.subr.mxu0 0.0
    %861 = vmatpush2.msra.mxu0 0.0
    %862 = vmatprep.subr.mxu0 0.0
    %863 = vmatpush2.msra.mxu0 0.0
    %864 = vmatprep.subr.mxu0 0.0
    %865 = vmatpush2.msra.mxu0 0.0
    %866 = vmatprep.subr.mxu0 0.0
    %867 = vmatpush2.msra.mxu0 0.0
    %868 = vmatprep.subr.mxu0 0.0
    %869 = vmatpush2.msra.mxu0 0.0
    %870 = vmatprep.subr.mxu0 0.0
    %871 = vmatpush2.msra.mxu0 0.0
    %872 = vmatprep.subr.mxu0 0.0
    %873 = vmatpush2.msra.mxu0 0.0
    %874 = vmatprep.mubr.f32.mxu0 0.0
    %875 = vmatmul.mubr.f32.gmra.mxu0 %v808
    %v876 = vpop.f32.mrf.mxu0
    %v877 = vadd.f32 0.0, %v876
    %v878 = vpop.f32.mrf.mxu0
    %879 = vdwg.mxu0
    %881 = vrot.lane.b32.xlu0 %v877, 16
    %v882 = vpop.permute.xlu0 %881
    %v884 = vsel %vm214, %v712, %v882
    %v885 = vld [vmem:[%s6] sm:$0xff]
    %v886 = vld [vmem:[%s6 + $0x8] sm:$0xff]
    %v887 = vld [vmem:[%s6 + $0x10] sm:$0xff]
    %v888 = vld [vmem:[%s6 + $0x18] sm:$0xff]
    %v889 = vld [vmem:[%s7] sm:$0x1]
    %v891 = vlaneseq
    %v892 = vshrl.u32 %v891, 7
    %v893 = vsub.s32 0, %v892
    %v894 = vrot.slane %v889, %v893
    %v897 = vsel %vm70, %v546, 0
    %v900 = vsel %vm70, %v884, 0
    %902 = vmatprep.subr.mxu0 0.0
    %903 = vmatpush1.msra.mxu0 0.0
    %904 = vmatprep.subr.mxu0 0.0
    %905 = vmatpush1.msra.mxu0 0.0
    %906 = vmatprep.subr.mxu0 0.0
    %907 = vmatpush1.msra.mxu0 0.0
    %908 = vmatprep.subr.mxu0 0.0
    %909 = vmatpush1.msra.mxu0 0.0
    %910 = vmatprep.subr.mxu0 0.0
    %911 = vmatpush1.msra.mxu0 0.0
    %912 = vmatprep.subr.mxu0 0.0
    %913 = vmatpush1.msra.mxu0 0.0
    %914 = vmatprep.subr.mxu0 0.0
    %915 = vmatpush1.msra.mxu0 0.0
    %916 = vmatprep.subr.mxu0 0.0
    %917 = vmatpush1.msra.mxu0 0.0
    %918 = vmatprep.subr.mxu0 0.0
    %919 = vmatpush1.msra.mxu0 0.0
    %920 = vmatprep.subr.mxu0 0.0
    %921 = vmatpush1.msra.mxu0 0.0
    %922 = vmatprep.subr.mxu0 0.0
    %923 = vmatpush1.msra.mxu0 0.0
    %924 = vmatprep.subr.mxu0 0.0
    %925 = vmatpush1.msra.mxu0 0.0
    %926 = vmatprep.subr.mxu0 0.0
    %927 = vmatpush1.msra.mxu0 %v888
    %928 = vmatprep.subr.mxu0 0.0
    %929 = vmatpush1.msra.mxu0 %v887
    %930 = vmatprep.subr.mxu0 0.0
    %931 = vmatpush1.msra.mxu0 %v886
    %932 = vmatprep.subr.mxu0 0.0
    %933 = vmatpush1.msra.mxu0 %v885
    %934 = vmatprep.subr.mxu0 0.0
    %935 = vmatpush2.msra.mxu0 0.0
    %936 = vmatprep.subr.mxu0 0.0
    %937 = vmatpush2.msra.mxu0 0.0
    %938 = vmatprep.subr.mxu0 0.0
    %939 = vmatpush2.msra.mxu0 0.0
    %940 = vmatprep.subr.mxu0 0.0
    %941 = vmatpush2.msra.mxu0 0.0
    %942 = vmatprep.subr.mxu0 0.0
    %943 = vmatpush2.msra.mxu0 0.0
    %944 = vmatprep.subr.mxu0 0.0
    %945 = vmatpush2.msra.mxu0 0.0
    %946 = vmatprep.subr.mxu0 0.0
    %947 = vmatpush2.msra.mxu0 0.0
    %948 = vmatprep.subr.mxu0 0.0
    %949 = vmatpush2.msra.mxu0 0.0
    %950 = vmatprep.subr.mxu0 0.0
    %951 = vmatpush2.msra.mxu0 0.0
    %952 = vmatprep.subr.mxu0 0.0
    %953 = vmatpush2.msra.mxu0 0.0
    %954 = vmatprep.subr.mxu0 0.0
    %955 = vmatpush2.msra.mxu0 0.0
    %956 = vmatprep.subr.mxu0 0.0
    %957 = vmatpush2.msra.mxu0 0.0
    %958 = vmatprep.subr.mxu0 0.0
    %959 = vmatpush2.msra.mxu0 0.0
    %960 = vmatprep.subr.mxu0 0.0
    %961 = vmatpush2.msra.mxu0 0.0
    %962 = vmatprep.subr.mxu0 0.0
    %963 = vmatpush2.msra.mxu0 0.0
    %964 = vmatprep.subr.mxu0 0.0
    %965 = vmatpush2.msra.mxu0 0.0
    %966 = vmatprep.mubr.f32.mxu0 0.0
    %967 = vmatmul.mubr.f32.gmra.mxu0 %v897
    %v968 = vpop.f32.mrf.mxu0
    %v969 = vadd.f32 %v894, %v968
    %v970 = vpop.f32.mrf.mxu0
    %971 = vmatprep.mubr.f32.mxu0 0.0
    %972 = vmatmul.mubr.f32.gmra.mxu0 %v900
    %v973 = vpop.f32.mrf.mxu0
    %v974 = vadd.f32 %v894, %v973
    %v975 = vpop.f32.mrf.mxu0
    %976 = vdwg.mxu0
    %v977 = vadd.f32 %v112, %v969
    %v978 = vadd.f32 %v113, %v974
    %v979 = vld [vmem:[%s8] sm:$0x1]
    %v980 = vld [vmem:[%s9] sm:$0x1]
    %v981 = vsel %vm70, %v977, 0.0
    %982 = vadd.xlane.f32.xlu0 %v981
    %v983 = vpop.xlane.xlu0 %982
    %v984 = vsel %vm70, %v978, 0.0
    %985 = vadd.xlane.f32.xlu0 %v984
    %v986 = vpop.xlane.xlu0 %985
    %v987 = vmul.f32 %v983, %v77
    %v988 = vmul.f32 %v986, %v77
    %v989 = vsub.f32 %v977, %v987
    %v990 = vsub.f32 %v978, %v988
    %v991 = vmul.f32 %v989, %v989
    %v992 = vmul.f32 %v990, %v990
    %v993 = vsel %vm70, %v991, 0.0
    %994 = vadd.xlane.f32.xlu0 %v993
    %v995 = vpop.xlane.xlu0 %994
    %v996 = vsel %vm70, %v992, 0.0
    %997 = vadd.xlane.f32.xlu0 %v996
    %v998 = vpop.xlane.xlu0 %997
    %v999 = vmul.f32 %v995, %v77
    %v1000 = vmul.f32 %v998, %v77
    %v1001 = vadd.f32 %v999, 1e-12
    %v1002 = vadd.f32 %v1000, 1e-12
    %v1003 = vrsqrt.pop %v1001
    %v1004 = vrsqrt.pop %v1002
    %v1005 = vmul.f32 %v989, %v1003
    %v1006 = vmul.f32 %v990, %v1004
    %v1008 = vlaneseq
    %v1009 = vshrl.u32 %v1008, 7
    %v1010 = vsub.s32 0, %v1009
    %v1011 = vrot.slane %v979, %v1010
    %v1013 = vmul.f32 %v1005, %v1011
    %v1014 = vmul.f32 %v1006, %v1011
    %v1016 = vlaneseq
    %v1017 = vshrl.u32 %v1016, 7
    %v1018 = vsub.s32 0, %v1017
    %v1019 = vrot.slane %v980, %v1018
    %v1021 = vadd.f32 %v1013, %v1019
    %v1022 = vadd.f32 %v1014, %v1019
    %v1023 = vld [vmem:[%s10] sm:$0xff]
    %v1024 = vld [vmem:[%s10 + $0x8] sm:$0xff]
    %v1025 = vld [vmem:[%s10 + $0x10] sm:$0xff]
    %v1026 = vld [vmem:[%s10 + $0x18] sm:$0xff]
    %v1027 = vld [vmem:[%s11] sm:$0x1]
    %v1029 = vlaneseq
    %v1030 = vshrl.u32 %v1029, 7
    %v1031 = vsub.s32 0, %v1030
    %v1032 = vrot.slane %v1027, %v1031
    %v1035 = vsel %vm70, %v1021, 0
    %v1038 = vsel %vm70, %v1022, 0
    %1040 = vmatprep.subr.mxu0 0.0
    %1041 = vmatpush1.msra.mxu0 0.0
    %1042 = vmatprep.subr.mxu0 0.0
    %1043 = vmatpush1.msra.mxu0 0.0
    %1044 = vmatprep.subr.mxu0 0.0
    %1045 = vmatpush1.msra.mxu0 0.0
    %1046 = vmatprep.subr.mxu0 0.0
    %1047 = vmatpush1.msra.mxu0 0.0
    %1048 = vmatprep.subr.mxu0 0.0
    %1049 = vmatpush1.msra.mxu0 0.0
    %1050 = vmatprep.subr.mxu0 0.0
    %1051 = vmatpush1.msra.mxu0 0.0
    %1052 = vmatprep.subr.mxu0 0.0
    %1053 = vmatpush1.msra.mxu0 0.0
    %1054 = vmatprep.subr.mxu0 0.0
    %1055 = vmatpush1.msra.mxu0 0.0
    %1056 = vmatprep.subr.mxu0 0.0
    %1057 = vmatpush1.msra.mxu0 0.0
    %1058 = vmatprep.subr.mxu0 0.0
    %1059 = vmatpush1.msra.mxu0 0.0
    %1060 = vmatprep.subr.mxu0 0.0
    %1061 = vmatpush1.msra.mxu0 0.0
    %1062 = vmatprep.subr.mxu0 0.0
    %1063 = vmatpush1.msra.mxu0 0.0
    %1064 = vmatprep.subr.mxu0 0.0
    %1065 = vmatpush1.msra.mxu0 %v1026
    %1066 = vmatprep.subr.mxu0 0.0
    %1067 = vmatpush1.msra.mxu0 %v1025
    %1068 = vmatprep.subr.mxu0 0.0
    %1069 = vmatpush1.msra.mxu0 %v1024
    %1070 = vmatprep.subr.mxu0 0.0
    %1071 = vmatpush1.msra.mxu0 %v1023
    %1072 = vmatprep.subr.mxu0 0.0
    %1073 = vmatpush2.msra.mxu0 0.0
    %1074 = vmatprep.subr.mxu0 0.0
    %1075 = vmatpush2.msra.mxu0 0.0
    %1076 = vmatprep.subr.mxu0 0.0
    %1077 = vmatpush2.msra.mxu0 0.0
    %1078 = vmatprep.subr.mxu0 0.0
    %1079 = vmatpush2.msra.mxu0 0.0
    %1080 = vmatprep.subr.mxu0 0.0
    %1081 = vmatpush2.msra.mxu0 0.0
    %1082 = vmatprep.subr.mxu0 0.0
    %1083 = vmatpush2.msra.mxu0 0.0
    %1084 = vmatprep.subr.mxu0 0.0
    %1085 = vmatpush2.msra.mxu0 0.0
    %1086 = vmatprep.subr.mxu0 0.0
    %1087 = vmatpush2.msra.mxu0 0.0
    %1088 = vmatprep.subr.mxu0 0.0
    %1089 = vmatpush2.msra.mxu0 0.0
    %1090 = vmatprep.subr.mxu0 0.0
    %1091 = vmatpush2.msra.mxu0 0.0
    %1092 = vmatprep.subr.mxu0 0.0
    %1093 = vmatpush2.msra.mxu0 0.0
    %1094 = vmatprep.subr.mxu0 0.0
    %1095 = vmatpush2.msra.mxu0 0.0
    %1096 = vmatprep.subr.mxu0 0.0
    %1097 = vmatpush2.msra.mxu0 0.0
    %1098 = vmatprep.subr.mxu0 0.0
    %1099 = vmatpush2.msra.mxu0 0.0
    %1100 = vmatprep.subr.mxu0 0.0
    %1101 = vmatpush2.msra.mxu0 0.0
    %1102 = vmatprep.subr.mxu0 0.0
    %1103 = vmatpush2.msra.mxu0 0.0
    %1104 = vmatprep.mubr.f32.mxu0 0.0
    %1105 = vmatmul.mubr.f32.gmra.mxu0 %v1035
    %v1106 = vpop.f32.mrf.mxu0
    %v1107 = vadd.f32 %v1032, %v1106
    %v1108 = vpop.f32.mrf.mxu0
    %1109 = vmatprep.mubr.f32.mxu0 0.0
    %1110 = vmatmul.mubr.f32.gmra.mxu0 %v1038
    %v1111 = vpop.f32.mrf.mxu0
    %v1112 = vadd.f32 %v1032, %v1111
    %v1113 = vpop.f32.mrf.mxu0
    %1114 = vdwg.mxu0
    %v1115 = vmul.f32 %v1107, 0.5
    %v1116 = vmul.f32 %v1112, 0.5
    %v1117 = vmul.f32 %v1107, 0.70710677
    %v1118 = vmul.f32 %v1112, 0.70710677
    %v1119 = verf.f32.pop %v1117
    %v1120 = verf.f32.pop %v1118
    %v1121 = vadd.f32 %v1119, 1.0
    %v1122 = vadd.f32 %v1120, 1.0
    %v1123 = vmul.f32 %v1115, %v1121
    %v1124 = vmul.f32 %v1116, %v1122
    %v1125 = vld [vmem:[%s12] sm:$0xff]
    %v1126 = vld [vmem:[%s12 + $0x8] sm:$0xff]
    %v1127 = vld [vmem:[%s12 + $0x10] sm:$0xff]
    %v1128 = vld [vmem:[%s12 + $0x18] sm:$0xff]
    %v1129 = vld [vmem:[%s12 + $0x20] sm:$0xff]
    %v1130 = vld [vmem:[%s12 + $0x28] sm:$0xff]
    %v1131 = vld [vmem:[%s12 + $0x30] sm:$0xff]
    %v1132 = vld [vmem:[%s12 + $0x38] sm:$0xff]
    %v1133 = vld [vmem:[%s13] sm:$0x1]
    %v1135 = vlaneseq
    %v1136 = vshrl.u32 %v1135, 7
    %v1137 = vsub.s32 0, %v1136
    %v1138 = vrot.slane %v1133, %v1137
    %vm1140 = vcmask 523264
    %v1142 = vsel %vm1140, %v1123, 0
    %v1145 = vsel %vm1140, %v1124, 0
    %1147 = vmatprep.subr.mxu0 0.0
    %1148 = vmatpush1.msra.mxu0 0.0
    %1149 = vmatprep.subr.mxu0 0.0
    %1150 = vmatpush1.msra.mxu0 0.0
    %1151 = vmatprep.subr.mxu0 0.0
    %1152 = vmatpush1.msra.mxu0 0.0
    %1153 = vmatprep.subr.mxu0 0.0
    %1154 = vmatpush1.msra.mxu0 0.0
    %1155 = vmatprep.subr.mxu0 0.0
    %1156 = vmatpush1.msra.mxu0 0.0
    %1157 = vmatprep.subr.mxu0 0.0
    %1158 = vmatpush1.msra.mxu0 0.0
    %1159 = vmatprep.subr.mxu0 0.0
    %1160 = vmatpush1.msra.mxu0 0.0
    %1161 = vmatprep.subr.mxu0 0.0
    %1162 = vmatpush1.msra.mxu0 0.0
    %1163 = vmatprep.subr.mxu0 0.0
    %1164 = vmatpush1.msra.mxu0 %v1132
    %1165 = vmatprep.subr.mxu0 0.0
    %1166 = vmatpush1.msra.mxu0 %v1131
    %1167 = vmatprep.subr.mxu0 0.0
    %1168 = vmatpush1.msra.mxu0 %v1130
    %1169 = vmatprep.subr.mxu0 0.0
    %1170 = vmatpush1.msra.mxu0 %v1129
    %1171 = vmatprep.subr.mxu0 0.0
    %1172 = vmatpush1.msra.mxu0 %v1128
    %1173 = vmatprep.subr.mxu0 0.0
    %1174 = vmatpush1.msra.mxu0 %v1127
    %1175 = vmatprep.subr.mxu0 0.0
    %1176 = vmatpush1.msra.mxu0 %v1126
    %1177 = vmatprep.subr.mxu0 0.0
    %1178 = vmatpush1.msra.mxu0 %v1125
    %1179 = vmatprep.subr.mxu0 0.0
    %1180 = vmatpush2.msra.mxu0 0.0
    %1181 = vmatprep.subr.mxu0 0.0
    %1182 = vmatpush2.msra.mxu0 0.0
    %1183 = vmatprep.subr.mxu0 0.0
    %1184 = vmatpush2.msra.mxu0 0.0
    %1185 = vmatprep.subr.mxu0 0.0
    %1186 = vmatpush2.msra.mxu0 0.0
    %1187 = vmatprep.subr.mxu0 0.0
    %1188 = vmatpush2.msra.mxu0 0.0
    %1189 = vmatprep.subr.mxu0 0.0
    %1190 = vmatpush2.msra.mxu0 0.0
    %1191 = vmatprep.subr.mxu0 0.0
    %1192 = vmatpush2.msra.mxu0 0.0
    %1193 = vmatprep.subr.mxu0 0.0
    %1194 = vmatpush2.msra.mxu0 0.0
    %1195 = vmatprep.subr.mxu0 0.0
    %1196 = vmatpush2.msra.mxu0 0.0
    %1197 = vmatprep.subr.mxu0 0.0
    %1198 = vmatpush2.msra.mxu0 0.0
    %1199 = vmatprep.subr.mxu0 0.0
    %1200 = vmatpush2.msra.mxu0 0.0
    %1201 = vmatprep.subr.mxu0 0.0
    %1202 = vmatpush2.msra.mxu0 0.0
    %1203 = vmatprep.subr.mxu0 0.0
    %1204 = vmatpush2.msra.mxu0 0.0
    %1205 = vmatprep.subr.mxu0 0.0
    %1206 = vmatpush2.msra.mxu0 0.0
    %1207 = vmatprep.subr.mxu0 0.0
    %1208 = vmatpush2.msra.mxu0 0.0
    %1209 = vmatprep.subr.mxu0 0.0
    %1210 = vmatpush2.msra.mxu0 0.0
    %1211 = vmatprep.mubr.f32.mxu0 0.0
    %1212 = vmatmul.mubr.f32.gmra.mxu0 %v1142
    %v1213 = vpop.f32.mrf.mxu0
    %v1214 = vadd.f32 %v1138, %v1213
    %v1215 = vpop.f32.mrf.mxu0
    %1216 = vmatprep.mubr.f32.mxu0 0.0
    %1217 = vmatmul.mubr.f32.gmra.mxu0 %v1145
    %v1218 = vpop.f32.mrf.mxu0
    %v1219 = vadd.f32 %v1138, %v1218
    %v1220 = vpop.f32.mrf.mxu0
    %1221 = vdwg.mxu0
    %v1222 = vadd.f32 %v1021, %v1214
    %v1223 = vadd.f32 %v1022, %v1219
    %v1224 = vld [vmem:[%s14] sm:$0x1]
    %v1225 = vld [vmem:[%s15] sm:$0x1]
    %v1226 = vsel %vm70, %v1222, 0.0
    %1227 = vadd.xlane.f32.xlu0 %v1226
    %v1228 = vpop.xlane.xlu0 %1227
    %v1229 = vsel %vm70, %v1223, 0.0
    %1230 = vadd.xlane.f32.xlu0 %v1229
    %v1231 = vpop.xlane.xlu0 %1230
    %v1232 = vmul.f32 %v1228, %v77
    %v1233 = vmul.f32 %v1231, %v77
    %v1234 = vsub.f32 %v1222, %v1232
    %v1235 = vsub.f32 %v1223, %v1233
    %v1236 = vmul.f32 %v1234, %v1234
    %v1237 = vmul.f32 %v1235, %v1235
    %v1238 = vsel %vm70, %v1236, 0.0
    %1239 = vadd.xlane.f32.xlu0 %v1238
    %v1240 = vpop.xlane.xlu0 %1239
    %v1241 = vsel %vm70, %v1237, 0.0
    %1242 = vadd.xlane.f32.xlu0 %v1241
    %v1243 = vpop.xlane.xlu0 %1242
    %v1244 = vmul.f32 %v1240, %v77
    %v1245 = vmul.f32 %v1243, %v77
    %v1246 = vadd.f32 %v1244, 1e-12
    %v1247 = vadd.f32 %v1245, 1e-12
    %v1248 = vrsqrt.pop %v1246
    %v1249 = vrsqrt.pop %v1247
    %v1250 = vmul.f32 %v1234, %v1248
    %v1251 = vmul.f32 %v1235, %v1249
    %v1253 = vlaneseq
    %v1254 = vshrl.u32 %v1253, 7
    %v1255 = vsub.s32 0, %v1254
    %v1256 = vrot.slane %v1224, %v1255
    %v1258 = vmul.f32 %v1250, %v1256
    %v1259 = vmul.f32 %v1251, %v1256
    %v1261 = vlaneseq
    %v1262 = vshrl.u32 %v1261, 7
    %v1263 = vsub.s32 0, %v1262
    %v1264 = vrot.slane %v1225, %v1263
    %v1266 = vadd.f32 %v1258, %v1264
    %v1267 = vadd.f32 %v1259, %v1264
    %s1268 = scalar_lea.vmem %s4, 32
    %v1269 = vld [vmem:[%s1268] sm:$0xff]
    %v1270 = vld [vmem:[%s1268 + $0x8] sm:$0xff]
    %v1271 = vld [vmem:[%s1268 + $0x10] sm:$0xff]
    %v1272 = vld [vmem:[%s1268 + $0x18] sm:$0xff]
    %s1273 = scalar_lea.vmem %s5, 1
    %v1274 = vld [vmem:[%s1273] sm:$0x1]
    %v1276 = vlaneseq
    %v1277 = vshrl.u32 %v1276, 7
    %v1278 = vsub.s32 0, %v1277
    %v1279 = vrot.slane %v1274, %v1278
    %v1282 = vsel %vm70, %v1266, 0
    %v1285 = vsel %vm70, %v1267, 0
    %1287 = vmatprep.subr.mxu0 0.0
    %1288 = vmatpush1.msra.mxu0 0.0
    %1289 = vmatprep.subr.mxu0 0.0
    %1290 = vmatpush1.msra.mxu0 0.0
    %1291 = vmatprep.subr.mxu0 0.0
    %1292 = vmatpush1.msra.mxu0 0.0
    %1293 = vmatprep.subr.mxu0 0.0
    %1294 = vmatpush1.msra.mxu0 0.0
    %1295 = vmatprep.subr.mxu0 0.0
    %1296 = vmatpush1.msra.mxu0 0.0
    %1297 = vmatprep.subr.mxu0 0.0
    %1298 = vmatpush1.msra.mxu0 0.0
    %1299 = vmatprep.subr.mxu0 0.0
    %1300 = vmatpush1.msra.mxu0 0.0
    %1301 = vmatprep.subr.mxu0 0.0
    %1302 = vmatpush1.msra.mxu0 0.0
    %1303 = vmatprep.subr.mxu0 0.0
    %1304 = vmatpush1.msra.mxu0 0.0
    %1305 = vmatprep.subr.mxu0 0.0
    %1306 = vmatpush1.msra.mxu0 0.0
    %1307 = vmatprep.subr.mxu0 0.0
    %1308 = vmatpush1.msra.mxu0 0.0
    %1309 = vmatprep.subr.mxu0 0.0
    %1310 = vmatpush1.msra.mxu0 0.0
    %1311 = vmatprep.subr.mxu0 0.0
    %1312 = vmatpush1.msra.mxu0 %v1272
    %1313 = vmatprep.subr.mxu0 0.0
    %1314 = vmatpush1.msra.mxu0 %v1271
    %1315 = vmatprep.subr.mxu0 0.0
    %1316 = vmatpush1.msra.mxu0 %v1270
    %1317 = vmatprep.subr.mxu0 0.0
    %1318 = vmatpush1.msra.mxu0 %v1269
    %1319 = vmatprep.subr.mxu0 0.0
    %1320 = vmatpush2.msra.mxu0 0.0
    %1321 = vmatprep.subr.mxu0 0.0
    %1322 = vmatpush2.msra.mxu0 0.0
    %1323 = vmatprep.subr.mxu0 0.0
    %1324 = vmatpush2.msra.mxu0 0.0
    %1325 = vmatprep.subr.mxu0 0.0
    %1326 = vmatpush2.msra.mxu0 0.0
    %1327 = vmatprep.subr.mxu0 0.0
    %1328 = vmatpush2.msra.mxu0 0.0
    %1329 = vmatprep.subr.mxu0 0.0
    %1330 = vmatpush2.msra.mxu0 0.0
    %1331 = vmatprep.subr.mxu0 0.0
    %1332 = vmatpush2.msra.mxu0 0.0
    %1333 = vmatprep.subr.mxu0 0.0
    %1334 = vmatpush2.msra.mxu0 0.0
    %1335 = vmatprep.subr.mxu0 0.0
    %1336 = vmatpush2.msra.mxu0 0.0
    %1337 = vmatprep.subr.mxu0 0.0
    %1338 = vmatpush2.msra.mxu0 0.0
    %1339 = vmatprep.subr.mxu0 0.0
    %1340 = vmatpush2.msra.mxu0 0.0
    %1341 = vmatprep.subr.mxu0 0.0
    %1342 = vmatpush2.msra.mxu0 0.0
    %1343 = vmatprep.subr.mxu0 0.0
    %1344 = vmatpush2.msra.mxu0 0.0
    %1345 = vmatprep.subr.mxu0 0.0
    %1346 = vmatpush2.msra.mxu0 0.0
    %1347 = vmatprep.subr.mxu0 0.0
    %1348 = vmatpush2.msra.mxu0 0.0
    %1349 = vmatprep.subr.mxu0 0.0
    %1350 = vmatpush2.msra.mxu0 0.0
    %1351 = vmatprep.mubr.f32.mxu0 0.0
    %1352 = vmatmul.mubr.f32.gmra.mxu0 %v1282
    %v1353 = vpop.f32.mrf.mxu0
    %v1354 = vadd.f32 %v1279, %v1353
    %v1355 = vpop.f32.mrf.mxu0
    %1356 = vmatprep.mubr.f32.mxu0 0.0
    %1357 = vmatmul.mubr.f32.gmra.mxu0 %v1285
    %v1358 = vpop.f32.mrf.mxu0
    %v1359 = vadd.f32 %v1279, %v1358
    %v1360 = vpop.f32.mrf.mxu0
    %1361 = vdwg.mxu0
    %1363 = vrot.lane.b32.xlu0 %v1354, 96
    %v1364 = vpop.permute.xlu0 %1363
    %v1365 = vsel %vm214, %v1354, 0
    %v1367 = vsel %vm214, %v1364, 0
    %1369 = vmatprep.subr.mxu0 0.0
    %1370 = vmatpush1.xpose.msra.mxu0 0.0
    %1371 = vmatprep.subr.mxu0 0.0
    %1372 = vmatpush1.xpose.msra.mxu0 0.0
    %1373 = vmatprep.subr.mxu0 0.0
    %1374 = vmatpush1.xpose.msra.mxu0 0.0
    %1375 = vmatprep.subr.mxu0 0.0
    %1376 = vmatpush1.xpose.msra.mxu0 0.0
    %1377 = vmatprep.subr.mxu0 0.0
    %1378 = vmatpush1.xpose.msra.mxu0 0.0
    %1379 = vmatprep.subr.mxu0 0.0
    %1380 = vmatpush1.xpose.msra.mxu0 0.0
    %1381 = vmatprep.subr.mxu0 0.0
    %1382 = vmatpush1.xpose.msra.mxu0 0.0
    %1383 = vmatprep.subr.mxu0 0.0
    %1384 = vmatpush1.xpose.msra.mxu0 0.0
    %1385 = vmatprep.subr.mxu0 0.0
    %1386 = vmatpush1.xpose.msra.mxu0 0.0
    %1387 = vmatprep.subr.mxu0 0.0
    %1388 = vmatpush1.xpose.msra.mxu0 0.0
    %1389 = vmatprep.subr.mxu0 0.0
    %1390 = vmatpush1.xpose.msra.mxu0 0.0
    %1391 = vmatprep.subr.mxu0 0.0
    %1392 = vmatpush1.xpose.msra.mxu0 0.0
    %1393 = vmatprep.subr.mxu0 0.0
    %1394 = vmatpush1.xpose.msra.mxu0 0.0
    %1395 = vmatprep.subr.mxu0 0.0
    %1396 = vmatpush1.xpose.msra.mxu0 0.0
    %1397 = vmatprep.subr.mxu0 0.0
    %1398 = vmatpush1.xpose.msra.mxu0 0.0
    %1399 = vmatprep.subr.mxu0 0.0
    %1400 = vmatpush1.xpose.msra.mxu0 %v1367
    %1401 = vmatprep.subr.mxu0 0.0
    %1402 = vmatpush2.xpose.msra.mxu0 0.0
    %1403 = vmatprep.subr.mxu0 0.0
    %1404 = vmatpush2.xpose.msra.mxu0 0.0
    %1405 = vmatprep.subr.mxu0 0.0
    %1406 = vmatpush2.xpose.msra.mxu0 0.0
    %1407 = vmatprep.subr.mxu0 0.0
    %1408 = vmatpush2.xpose.msra.mxu0 0.0
    %1409 = vmatprep.subr.mxu0 0.0
    %1410 = vmatpush2.xpose.msra.mxu0 0.0
    %1411 = vmatprep.subr.mxu0 0.0
    %1412 = vmatpush2.xpose.msra.mxu0 0.0
    %1413 = vmatprep.subr.mxu0 0.0
    %1414 = vmatpush2.xpose.msra.mxu0 0.0
    %1415 = vmatprep.subr.mxu0 0.0
    %1416 = vmatpush2.xpose.msra.mxu0 0.0
    %1417 = vmatprep.subr.mxu0 0.0
    %1418 = vmatpush2.xpose.msra.mxu0 0.0
    %1419 = vmatprep.subr.mxu0 0.0
    %1420 = vmatpush2.xpose.msra.mxu0 0.0
    %1421 = vmatprep.subr.mxu0 0.0
    %1422 = vmatpush2.xpose.msra.mxu0 0.0
    %1423 = vmatprep.subr.mxu0 0.0
    %1424 = vmatpush2.xpose.msra.mxu0 0.0
    %1425 = vmatprep.subr.mxu0 0.0
    %1426 = vmatpush2.xpose.msra.mxu0 0.0
    %1427 = vmatprep.subr.mxu0 0.0
    %1428 = vmatpush2.xpose.msra.mxu0 0.0
    %1429 = vmatprep.subr.mxu0 0.0
    %1430 = vmatpush2.xpose.msra.mxu0 0.0
    %1431 = vmatprep.subr.mxu0 0.0
    %1432 = vmatpush2.xpose.msra.mxu0 0.0
    %1433 = vmatprep.mubr.f32.mxu0 0.0
    %1434 = vmatmul.mubr.f32.gmra.mxu0 %v1365
    %v1435 = vpop.f32.mrf.mxu0
    %v1436 = vadd.f32 %v210, %v1435
    %v1437 = vpop.f32.mrf.mxu0
    %1438 = vdwg.mxu0
    %v1439 = vsel %vm289, %v1436, -inf
    %1440 = vmax.xlane.f32.xlu0 %v1439
    %v1441 = vpop.xlane.xlu0 %1440
    %v1442 = vsub.f32 %v1436, %v1441
    %v1443 = vmul.f32 %v1442, 1.442695
    %v1444 = vpow.pop %v1443
    %v1445 = vsel %vm289, %v1444, 0.0
    %1446 = vadd.xlane.f32.xlu0 %v1445
    %v1447 = vpop.xlane.xlu0 %1446
    %v1448 = vrcp.pop %v1447
    %v1449 = vmul.f32 %v1444, %v1448
    %1450 = vrot.lane.b32.xlu0 %v1354, 64
    %v1451 = vpop.permute.xlu0 %1450
    %v1454 = vsel %vm289, %v1449, 0
    %1456 = vmatprep.subr.mxu0 0.0
    %1457 = vmatpush1.msra.mxu0 0.0
    %1458 = vmatprep.subr.mxu0 0.0
    %1459 = vmatpush1.msra.mxu0 0.0
    %1460 = vmatprep.subr.mxu0 0.0
    %1461 = vmatpush1.msra.mxu0 0.0
    %1462 = vmatprep.subr.mxu0 0.0
    %1463 = vmatpush1.msra.mxu0 0.0
    %1464 = vmatprep.subr.mxu0 0.0
    %1465 = vmatpush1.msra.mxu0 0.0
    %1466 = vmatprep.subr.mxu0 0.0
    %1467 = vmatpush1.msra.mxu0 0.0
    %1468 = vmatprep.subr.mxu0 0.0
    %1469 = vmatpush1.msra.mxu0 0.0
    %1470 = vmatprep.subr.mxu0 0.0
    %1471 = vmatpush1.msra.mxu0 0.0
    %1472 = vmatprep.subr.mxu0 0.0
    %1473 = vmatpush1.msra.mxu0 0.0
    %1474 = vmatprep.subr.mxu0 0.0
    %1475 = vmatpush1.msra.mxu0 0.0
    %1476 = vmatprep.subr.mxu0 0.0
    %1477 = vmatpush1.msra.mxu0 0.0
    %1478 = vmatprep.subr.mxu0 0.0
    %1479 = vmatpush1.msra.mxu0 0.0
    %1480 = vmatprep.subr.mxu0 0.0
    %1481 = vmatpush1.msra.mxu0 0.0
    %1482 = vmatprep.subr.mxu0 0.0
    %1483 = vmatpush1.msra.mxu0 0.0
    %1484 = vmatprep.subr.mxu0 0.0
    %1485 = vmatpush1.msra.mxu0 0.0
    %1486 = vmatprep.subr.mxu0 0.0
    %1487 = vmatpush1.msra.mxu0 %v1451
    %1488 = vmatprep.subr.mxu0 0.0
    %1489 = vmatpush2.msra.mxu0 0.0
    %1490 = vmatprep.subr.mxu0 0.0
    %1491 = vmatpush2.msra.mxu0 0.0
    %1492 = vmatprep.subr.mxu0 0.0
    %1493 = vmatpush2.msra.mxu0 0.0
    %1494 = vmatprep.subr.mxu0 0.0
    %1495 = vmatpush2.msra.mxu0 0.0
    %1496 = vmatprep.subr.mxu0 0.0
    %1497 = vmatpush2.msra.mxu0 0.0
    %1498 = vmatprep.subr.mxu0 0.0
    %1499 = vmatpush2.msra.mxu0 0.0
    %1500 = vmatprep.subr.mxu0 0.0
    %1501 = vmatpush2.msra.mxu0 0.0
    %1502 = vmatprep.subr.mxu0 0.0
    %1503 = vmatpush2.msra.mxu0 0.0
    %1504 = vmatprep.subr.mxu0 0.0
    %1505 = vmatpush2.msra.mxu0 0.0
    %1506 = vmatprep.subr.mxu0 0.0
    %1507 = vmatpush2.msra.mxu0 0.0
    %1508 = vmatprep.subr.mxu0 0.0
    %1509 = vmatpush2.msra.mxu0 0.0
    %1510 = vmatprep.subr.mxu0 0.0
    %1511 = vmatpush2.msra.mxu0 0.0
    %1512 = vmatprep.subr.mxu0 0.0
    %1513 = vmatpush2.msra.mxu0 0.0
    %1514 = vmatprep.subr.mxu0 0.0
    %1515 = vmatpush2.msra.mxu0 0.0
    %1516 = vmatprep.subr.mxu0 0.0
    %1517 = vmatpush2.msra.mxu0 0.0
    %1518 = vmatprep.subr.mxu0 0.0
    %1519 = vmatpush2.msra.mxu0 0.0
    %1520 = vmatprep.mubr.f32.mxu0 0.0
    %1521 = vmatmul.mubr.f32.gmra.mxu0 %v1454
    %v1522 = vpop.f32.mrf.mxu0
    %v1523 = vadd.f32 0.0, %v1522
    %v1524 = vpop.f32.mrf.mxu0
    %1525 = vdwg.mxu0
    %1526 = vrot.lane.b32.xlu0 %v1354, 112
    %v1527 = vpop.permute.xlu0 %1526
    %1528 = vrot.lane.b32.xlu0 %v1354, 80
    %v1529 = vpop.permute.xlu0 %1528
    %v1530 = vsel %vm214, %v1527, 0
    %v1532 = vsel %vm214, %v1529, 0
    %1534 = vmatprep.subr.mxu0 0.0
    %1535 = vmatpush1.xpose.msra.mxu0 0.0
    %1536 = vmatprep.subr.mxu0 0.0
    %1537 = vmatpush1.xpose.msra.mxu0 0.0
    %1538 = vmatprep.subr.mxu0 0.0
    %1539 = vmatpush1.xpose.msra.mxu0 0.0
    %1540 = vmatprep.subr.mxu0 0.0
    %1541 = vmatpush1.xpose.msra.mxu0 0.0
    %1542 = vmatprep.subr.mxu0 0.0
    %1543 = vmatpush1.xpose.msra.mxu0 0.0
    %1544 = vmatprep.subr.mxu0 0.0
    %1545 = vmatpush1.xpose.msra.mxu0 0.0
    %1546 = vmatprep.subr.mxu0 0.0
    %1547 = vmatpush1.xpose.msra.mxu0 0.0
    %1548 = vmatprep.subr.mxu0 0.0
    %1549 = vmatpush1.xpose.msra.mxu0 0.0
    %1550 = vmatprep.subr.mxu0 0.0
    %1551 = vmatpush1.xpose.msra.mxu0 0.0
    %1552 = vmatprep.subr.mxu0 0.0
    %1553 = vmatpush1.xpose.msra.mxu0 0.0
    %1554 = vmatprep.subr.mxu0 0.0
    %1555 = vmatpush1.xpose.msra.mxu0 0.0
    %1556 = vmatprep.subr.mxu0 0.0
    %1557 = vmatpush1.xpose.msra.mxu0 0.0
    %1558 = vmatprep.subr.mxu0 0.0
    %1559 = vmatpush1.xpose.msra.mxu0 0.0
    %1560 = vmatprep.subr.mxu0 0.0
    %1561 = vmatpush1.xpose.msra.mxu0 0.0
    %1562 = vmatprep.subr.mxu0 0.0
    %1563 = vmatpush1.xpose.msra.mxu0 0.0
    %1564 = vmatprep.subr.mxu0 0.0
    %1565 = vmatpush1.xpose.msra.mxu0 %v1532
    %1566 = vmatprep.subr.mxu0 0.0
    %1567 = vmatpush2.xpose.msra.mxu0 0.0
    %1568 = vmatprep.subr.mxu0 0.0
    %1569 = vmatpush2.xpose.msra.mxu0 0.0
    %1570 = vmatprep.subr.mxu0 0.0
    %1571 = vmatpush2.xpose.msra.mxu0 0.0
    %1572 = vmatprep.subr.mxu0 0.0
    %1573 = vmatpush2.xpose.msra.mxu0 0.0
    %1574 = vmatprep.subr.mxu0 0.0
    %1575 = vmatpush2.xpose.msra.mxu0 0.0
    %1576 = vmatprep.subr.mxu0 0.0
    %1577 = vmatpush2.xpose.msra.mxu0 0.0
    %1578 = vmatprep.subr.mxu0 0.0
    %1579 = vmatpush2.xpose.msra.mxu0 0.0
    %1580 = vmatprep.subr.mxu0 0.0
    %1581 = vmatpush2.xpose.msra.mxu0 0.0
    %1582 = vmatprep.subr.mxu0 0.0
    %1583 = vmatpush2.xpose.msra.mxu0 0.0
    %1584 = vmatprep.subr.mxu0 0.0
    %1585 = vmatpush2.xpose.msra.mxu0 0.0
    %1586 = vmatprep.subr.mxu0 0.0
    %1587 = vmatpush2.xpose.msra.mxu0 0.0
    %1588 = vmatprep.subr.mxu0 0.0
    %1589 = vmatpush2.xpose.msra.mxu0 0.0
    %1590 = vmatprep.subr.mxu0 0.0
    %1591 = vmatpush2.xpose.msra.mxu0 0.0
    %1592 = vmatprep.subr.mxu0 0.0
    %1593 = vmatpush2.xpose.msra.mxu0 0.0
    %1594 = vmatprep.subr.mxu0 0.0
    %1595 = vmatpush2.xpose.msra.mxu0 0.0
    %1596 = vmatprep.subr.mxu0 0.0
    %1597 = vmatpush2.xpose.msra.mxu0 0.0
    %1598 = vmatprep.mubr.f32.mxu0 0.0
    %1599 = vmatmul.mubr.f32.gmra.mxu0 %v1530
    %v1600 = vpop.f32.mrf.mxu0
    %v1601 = vadd.f32 %v210, %v1600
    %v1602 = vpop.f32.mrf.mxu0
    %1603 = vdwg.mxu0
    %v1604 = vsel %vm289, %v1601, -inf
    %1605 = vmax.xlane.f32.xlu0 %v1604
    %v1606 = vpop.xlane.xlu0 %1605
    %v1607 = vsub.f32 %v1601, %v1606
    %v1608 = vmul.f32 %v1607, 1.442695
    %v1609 = vpow.pop %v1608
    %v1610 = vsel %vm289, %v1609, 0.0
    %1611 = vadd.xlane.f32.xlu0 %v1610
    %v1612 = vpop.xlane.xlu0 %1611
    %v1613 = vrcp.pop %v1612
    %v1614 = vmul.f32 %v1609, %v1613
    %1615 = vrot.lane.b32.xlu0 %v1354, 48
    %v1616 = vpop.permute.xlu0 %1615
    %v1619 = vsel %vm289, %v1614, 0
    %1621 = vmatprep.subr.mxu0 0.0
    %1622 = vmatpush1.msra.mxu0 0.0
    %1623 = vmatprep.subr.mxu0 0.0
    %1624 = vmatpush1.msra.mxu0 0.0
    %1625 = vmatprep.subr.mxu0 0.0
    %1626 = vmatpush1.msra.mxu0 0.0
    %1627 = vmatprep.subr.mxu0 0.0
    %1628 = vmatpush1.msra.mxu0 0.0
    %1629 = vmatprep.subr.mxu0 0.0
    %1630 = vmatpush1.msra.mxu0 0.0
    %1631 = vmatprep.subr.mxu0 0.0
    %1632 = vmatpush1.msra.mxu0 0.0
    %1633 = vmatprep.subr.mxu0 0.0
    %1634 = vmatpush1.msra.mxu0 0.0
    %1635 = vmatprep.subr.mxu0 0.0
    %1636 = vmatpush1.msra.mxu0 0.0
    %1637 = vmatprep.subr.mxu0 0.0
    %1638 = vmatpush1.msra.mxu0 0.0
    %1639 = vmatprep.subr.mxu0 0.0
    %1640 = vmatpush1.msra.mxu0 0.0
    %1641 = vmatprep.subr.mxu0 0.0
    %1642 = vmatpush1.msra.mxu0 0.0
    %1643 = vmatprep.subr.mxu0 0.0
    %1644 = vmatpush1.msra.mxu0 0.0
    %1645 = vmatprep.subr.mxu0 0.0
    %1646 = vmatpush1.msra.mxu0 0.0
    %1647 = vmatprep.subr.mxu0 0.0
    %1648 = vmatpush1.msra.mxu0 0.0
    %1649 = vmatprep.subr.mxu0 0.0
    %1650 = vmatpush1.msra.mxu0 0.0
    %1651 = vmatprep.subr.mxu0 0.0
    %1652 = vmatpush1.msra.mxu0 %v1616
    %1653 = vmatprep.subr.mxu0 0.0
    %1654 = vmatpush2.msra.mxu0 0.0
    %1655 = vmatprep.subr.mxu0 0.0
    %1656 = vmatpush2.msra.mxu0 0.0
    %1657 = vmatprep.subr.mxu0 0.0
    %1658 = vmatpush2.msra.mxu0 0.0
    %1659 = vmatprep.subr.mxu0 0.0
    %1660 = vmatpush2.msra.mxu0 0.0
    %1661 = vmatprep.subr.mxu0 0.0
    %1662 = vmatpush2.msra.mxu0 0.0
    %1663 = vmatprep.subr.mxu0 0.0
    %1664 = vmatpush2.msra.mxu0 0.0
    %1665 = vmatprep.subr.mxu0 0.0
    %1666 = vmatpush2.msra.mxu0 0.0
    %1667 = vmatprep.subr.mxu0 0.0
    %1668 = vmatpush2.msra.mxu0 0.0
    %1669 = vmatprep.subr.mxu0 0.0
    %1670 = vmatpush2.msra.mxu0 0.0
    %1671 = vmatprep.subr.mxu0 0.0
    %1672 = vmatpush2.msra.mxu0 0.0
    %1673 = vmatprep.subr.mxu0 0.0
    %1674 = vmatpush2.msra.mxu0 0.0
    %1675 = vmatprep.subr.mxu0 0.0
    %1676 = vmatpush2.msra.mxu0 0.0
    %1677 = vmatprep.subr.mxu0 0.0
    %1678 = vmatpush2.msra.mxu0 0.0
    %1679 = vmatprep.subr.mxu0 0.0
    %1680 = vmatpush2.msra.mxu0 0.0
    %1681 = vmatprep.subr.mxu0 0.0
    %1682 = vmatpush2.msra.mxu0 0.0
    %1683 = vmatprep.subr.mxu0 0.0
    %1684 = vmatpush2.msra.mxu0 0.0
    %1685 = vmatprep.mubr.f32.mxu0 0.0
    %1686 = vmatmul.mubr.f32.gmra.mxu0 %v1619
    %v1687 = vpop.f32.mrf.mxu0
    %v1688 = vadd.f32 0.0, %v1687
    %v1689 = vpop.f32.mrf.mxu0
    %1690 = vdwg.mxu0
    %1692 = vrot.lane.b32.xlu0 %v1688, 16
    %v1693 = vpop.permute.xlu0 %1692
    %v1695 = vsel %vm214, %v1523, %v1693
    %1697 = vrot.lane.b32.xlu0 %v1359, 96
    %v1698 = vpop.permute.xlu0 %1697
    %v1699 = vsel %vm214, %v1359, 0
    %v1701 = vsel %vm214, %v1698, 0
    %1703 = vmatprep.subr.mxu0 0.0
    %1704 = vmatpush1.xpose.msra.mxu0 0.0
    %1705 = vmatprep.subr.mxu0 0.0
    %1706 = vmatpush1.xpose.msra.mxu0 0.0
    %1707 = vmatprep.subr.mxu0 0.0
    %1708 = vmatpush1.xpose.msra.mxu0 0.0
    %1709 = vmatprep.subr.mxu0 0.0
    %1710 = vmatpush1.xpose.msra.mxu0 0.0
    %1711 = vmatprep.subr.mxu0 0.0
    %1712 = vmatpush1.xpose.msra.mxu0 0.0
    %1713 = vmatprep.subr.mxu0 0.0
    %1714 = vmatpush1.xpose.msra.mxu0 0.0
    %1715 = vmatprep.subr.mxu0 0.0
    %1716 = vmatpush1.xpose.msra.mxu0 0.0
    %1717 = vmatprep.subr.mxu0 0.0
    %1718 = vmatpush1.xpose.msra.mxu0 0.0
    %1719 = vmatprep.subr.mxu0 0.0
    %1720 = vmatpush1.xpose.msra.mxu0 0.0
    %1721 = vmatprep.subr.mxu0 0.0
    %1722 = vmatpush1.xpose.msra.mxu0 0.0
    %1723 = vmatprep.subr.mxu0 0.0
    %1724 = vmatpush1.xpose.msra.mxu0 0.0
    %1725 = vmatprep.subr.mxu0 0.0
    %1726 = vmatpush1.xpose.msra.mxu0 0.0
    %1727 = vmatprep.subr.mxu0 0.0
    %1728 = vmatpush1.xpose.msra.mxu0 0.0
    %1729 = vmatprep.subr.mxu0 0.0
    %1730 = vmatpush1.xpose.msra.mxu0 0.0
    %1731 = vmatprep.subr.mxu0 0.0
    %1732 = vmatpush1.xpose.msra.mxu0 0.0
    %1733 = vmatprep.subr.mxu0 0.0
    %1734 = vmatpush1.xpose.msra.mxu0 %v1701
    %1735 = vmatprep.subr.mxu0 0.0
    %1736 = vmatpush2.xpose.msra.mxu0 0.0
    %1737 = vmatprep.subr.mxu0 0.0
    %1738 = vmatpush2.xpose.msra.mxu0 0.0
    %1739 = vmatprep.subr.mxu0 0.0
    %1740 = vmatpush2.xpose.msra.mxu0 0.0
    %1741 = vmatprep.subr.mxu0 0.0
    %1742 = vmatpush2.xpose.msra.mxu0 0.0
    %1743 = vmatprep.subr.mxu0 0.0
    %1744 = vmatpush2.xpose.msra.mxu0 0.0
    %1745 = vmatprep.subr.mxu0 0.0
    %1746 = vmatpush2.xpose.msra.mxu0 0.0
    %1747 = vmatprep.subr.mxu0 0.0
    %1748 = vmatpush2.xpose.msra.mxu0 0.0
    %1749 = vmatprep.subr.mxu0 0.0
    %1750 = vmatpush2.xpose.msra.mxu0 0.0
    %1751 = vmatprep.subr.mxu0 0.0
    %1752 = vmatpush2.xpose.msra.mxu0 0.0
    %1753 = vmatprep.subr.mxu0 0.0
    %1754 = vmatpush2.xpose.msra.mxu0 0.0
    %1755 = vmatprep.subr.mxu0 0.0
    %1756 = vmatpush2.xpose.msra.mxu0 0.0
    %1757 = vmatprep.subr.mxu0 0.0
    %1758 = vmatpush2.xpose.msra.mxu0 0.0
    %1759 = vmatprep.subr.mxu0 0.0
    %1760 = vmatpush2.xpose.msra.mxu0 0.0
    %1761 = vmatprep.subr.mxu0 0.0
    %1762 = vmatpush2.xpose.msra.mxu0 0.0
    %1763 = vmatprep.subr.mxu0 0.0
    %1764 = vmatpush2.xpose.msra.mxu0 0.0
    %1765 = vmatprep.subr.mxu0 0.0
    %1766 = vmatpush2.xpose.msra.mxu0 0.0
    %1767 = vmatprep.mubr.f32.mxu0 0.0
    %1768 = vmatmul.mubr.f32.gmra.mxu0 %v1699
    %v1769 = vpop.f32.mrf.mxu0
    %v1770 = vadd.f32 %v550, %v1769
    %v1771 = vpop.f32.mrf.mxu0
    %1772 = vdwg.mxu0
    %v1773 = vsel %vm289, %v1770, -inf
    %1774 = vmax.xlane.f32.xlu0 %v1773
    %v1775 = vpop.xlane.xlu0 %1774
    %v1776 = vsub.f32 %v1770, %v1775
    %v1777 = vmul.f32 %v1776, 1.442695
    %v1778 = vpow.pop %v1777
    %v1779 = vsel %vm289, %v1778, 0.0
    %1780 = vadd.xlane.f32.xlu0 %v1779
    %v1781 = vpop.xlane.xlu0 %1780
    %v1782 = vrcp.pop %v1781
    %v1783 = vmul.f32 %v1778, %v1782
    %1784 = vrot.lane.b32.xlu0 %v1359, 64
    %v1785 = vpop.permute.xlu0 %1784
    %v1788 = vsel %vm289, %v1783, 0
    %1790 = vmatprep.subr.mxu0 0.0
    %1791 = vmatpush1.msra.mxu0 0.0
    %1792 = vmatprep.subr.mxu0 0.0
    %1793 = vmatpush1.msra.mxu0 0.0
    %1794 = vmatprep.subr.mxu0 0.0
    %1795 = vmatpush1.msra.mxu0 0.0
    %1796 = vmatprep.subr.mxu0 0.0
    %1797 = vmatpush1.msra.mxu0 0.0
    %1798 = vmatprep.subr.mxu0 0.0
    %1799 = vmatpush1.msra.mxu0 0.0
    %1800 = vmatprep.subr.mxu0 0.0
    %1801 = vmatpush1.msra.mxu0 0.0
    %1802 = vmatprep.subr.mxu0 0.0
    %1803 = vmatpush1.msra.mxu0 0.0
    %1804 = vmatprep.subr.mxu0 0.0
    %1805 = vmatpush1.msra.mxu0 0.0
    %1806 = vmatprep.subr.mxu0 0.0
    %1807 = vmatpush1.msra.mxu0 0.0
    %1808 = vmatprep.subr.mxu0 0.0
    %1809 = vmatpush1.msra.mxu0 0.0
    %1810 = vmatprep.subr.mxu0 0.0
    %1811 = vmatpush1.msra.mxu0 0.0
    %1812 = vmatprep.subr.mxu0 0.0
    %1813 = vmatpush1.msra.mxu0 0.0
    %1814 = vmatprep.subr.mxu0 0.0
    %1815 = vmatpush1.msra.mxu0 0.0
    %1816 = vmatprep.subr.mxu0 0.0
    %1817 = vmatpush1.msra.mxu0 0.0
    %1818 = vmatprep.subr.mxu0 0.0
    %1819 = vmatpush1.msra.mxu0 0.0
    %1820 = vmatprep.subr.mxu0 0.0
    %1821 = vmatpush1.msra.mxu0 %v1785
    %1822 = vmatprep.subr.mxu0 0.0
    %1823 = vmatpush2.msra.mxu0 0.0
    %1824 = vmatprep.subr.mxu0 0.0
    %1825 = vmatpush2.msra.mxu0 0.0
    %1826 = vmatprep.subr.mxu0 0.0
    %1827 = vmatpush2.msra.mxu0 0.0
    %1828 = vmatprep.subr.mxu0 0.0
    %1829 = vmatpush2.msra.mxu0 0.0
    %1830 = vmatprep.subr.mxu0 0.0
    %1831 = vmatpush2.msra.mxu0 0.0
    %1832 = vmatprep.subr.mxu0 0.0
    %1833 = vmatpush2.msra.mxu0 0.0
    %1834 = vmatprep.subr.mxu0 0.0
    %1835 = vmatpush2.msra.mxu0 0.0
    %1836 = vmatprep.subr.mxu0 0.0
    %1837 = vmatpush2.msra.mxu0 0.0
    %1838 = vmatprep.subr.mxu0 0.0
    %1839 = vmatpush2.msra.mxu0 0.0
    %1840 = vmatprep.subr.mxu0 0.0
    %1841 = vmatpush2.msra.mxu0 0.0
    %1842 = vmatprep.subr.mxu0 0.0
    %1843 = vmatpush2.msra.mxu0 0.0
    %1844 = vmatprep.subr.mxu0 0.0
    %1845 = vmatpush2.msra.mxu0 0.0
    %1846 = vmatprep.subr.mxu0 0.0
    %1847 = vmatpush2.msra.mxu0 0.0
    %1848 = vmatprep.subr.mxu0 0.0
    %1849 = vmatpush2.msra.mxu0 0.0
    %1850 = vmatprep.subr.mxu0 0.0
    %1851 = vmatpush2.msra.mxu0 0.0
    %1852 = vmatprep.subr.mxu0 0.0
    %1853 = vmatpush2.msra.mxu0 0.0
    %1854 = vmatprep.mubr.f32.mxu0 0.0
    %1855 = vmatmul.mubr.f32.gmra.mxu0 %v1788
    %v1856 = vpop.f32.mrf.mxu0
    %v1857 = vadd.f32 0.0, %v1856
    %v1858 = vpop.f32.mrf.mxu0
    %1859 = vdwg.mxu0
    %1860 = vrot.lane.b32.xlu0 %v1359, 112
    %v1861 = vpop.permute.xlu0 %1860
    %1862 = vrot.lane.b32.xlu0 %v1359, 80
    %v1863 = vpop.permute.xlu0 %1862
    %v1864 = vsel %vm214, %v1861, 0
    %v1866 = vsel %vm214, %v1863, 0
    %1868 = vmatprep.subr.mxu0 0.0
    %1869 = vmatpush1.xpose.msra.mxu0 0.0
    %1870 = vmatprep.subr.mxu0 0.0
    %1871 = vmatpush1.xpose.msra.mxu0 0.0
    %1872 = vmatprep.subr.mxu0 0.0
    %1873 = vmatpush1.xpose.msra.mxu0 0.0
    %1874 = vmatprep.subr.mxu0 0.0
    %1875 = vmatpush1.xpose.msra.mxu0 0.0
    %1876 = vmatprep.subr.mxu0 0.0
    %1877 = vmatpush1.xpose.msra.mxu0 0.0
    %1878 = vmatprep.subr.mxu0 0.0
    %1879 = vmatpush1.xpose.msra.mxu0 0.0
    %1880 = vmatprep.subr.mxu0 0.0
    %1881 = vmatpush1.xpose.msra.mxu0 0.0
    %1882 = vmatprep.subr.mxu0 0.0
    %1883 = vmatpush1.xpose.msra.mxu0 0.0
    %1884 = vmatprep.subr.mxu0 0.0
    %1885 = vmatpush1.xpose.msra.mxu0 0.0
    %1886 = vmatprep.subr.mxu0 0.0
    %1887 = vmatpush1.xpose.msra.mxu0 0.0
    %1888 = vmatprep.subr.mxu0 0.0
    %1889 = vmatpush1.xpose.msra.mxu0 0.0
    %1890 = vmatprep.subr.mxu0 0.0
    %1891 = vmatpush1.xpose.msra.mxu0 0.0
    %1892 = vmatprep.subr.mxu0 0.0
    %1893 = vmatpush1.xpose.msra.mxu0 0.0
    %1894 = vmatprep.subr.mxu0 0.0
    %1895 = vmatpush1.xpose.msra.mxu0 0.0
    %1896 = vmatprep.subr.mxu0 0.0
    %1897 = vmatpush1.xpose.msra.mxu0 0.0
    %1898 = vmatprep.subr.mxu0 0.0
    %1899 = vmatpush1.xpose.msra.mxu0 %v1866
    %1900 = vmatprep.subr.mxu0 0.0
    %1901 = vmatpush2.xpose.msra.mxu0 0.0
    %1902 = vmatprep.subr.mxu0 0.0
    %1903 = vmatpush2.xpose.msra.mxu0 0.0
    %1904 = vmatprep.subr.mxu0 0.0
    %1905 = vmatpush2.xpose.msra.mxu0 0.0
    %1906 = vmatprep.subr.mxu0 0.0
    %1907 = vmatpush2.xpose.msra.mxu0 0.0
    %1908 = vmatprep.subr.mxu0 0.0
    %1909 = vmatpush2.xpose.msra.mxu0 0.0
    %1910 = vmatprep.subr.mxu0 0.0
    %1911 = vmatpush2.xpose.msra.mxu0 0.0
    %1912 = vmatprep.subr.mxu0 0.0
    %1913 = vmatpush2.xpose.msra.mxu0 0.0
    %1914 = vmatprep.subr.mxu0 0.0
    %1915 = vmatpush2.xpose.msra.mxu0 0.0
    %1916 = vmatprep.subr.mxu0 0.0
    %1917 = vmatpush2.xpose.msra.mxu0 0.0
    %1918 = vmatprep.subr.mxu0 0.0
    %1919 = vmatpush2.xpose.msra.mxu0 0.0
    %1920 = vmatprep.subr.mxu0 0.0
    %1921 = vmatpush2.xpose.msra.mxu0 0.0
    %1922 = vmatprep.subr.mxu0 0.0
    %1923 = vmatpush2.xpose.msra.mxu0 0.0
    %1924 = vmatprep.subr.mxu0 0.0
    %1925 = vmatpush2.xpose.msra.mxu0 0.0
    %1926 = vmatprep.subr.mxu0 0.0
    %1927 = vmatpush2.xpose.msra.mxu0 0.0
    %1928 = vmatprep.subr.mxu0 0.0
    %1929 = vmatpush2.xpose.msra.mxu0 0.0
    %1930 = vmatprep.subr.mxu0 0.0
    %1931 = vmatpush2.xpose.msra.mxu0 0.0
    %1932 = vmatprep.mubr.f32.mxu0 0.0
    %1933 = vmatmul.mubr.f32.gmra.mxu0 %v1864
    %v1934 = vpop.f32.mrf.mxu0
    %v1935 = vadd.f32 %v550, %v1934
    %v1936 = vpop.f32.mrf.mxu0
    %1937 = vdwg.mxu0
    %v1938 = vsel %vm289, %v1935, -inf
    %1939 = vmax.xlane.f32.xlu0 %v1938
    %v1940 = vpop.xlane.xlu0 %1939
    %v1941 = vsub.f32 %v1935, %v1940
    %v1942 = vmul.f32 %v1941, 1.442695
    %v1943 = vpow.pop %v1942
    %v1944 = vsel %vm289, %v1943, 0.0
    %1945 = vadd.xlane.f32.xlu0 %v1944
    %v1946 = vpop.xlane.xlu0 %1945
    %v1947 = vrcp.pop %v1946
    %v1948 = vmul.f32 %v1943, %v1947
    %1949 = vrot.lane.b32.xlu0 %v1359, 48
    %v1950 = vpop.permute.xlu0 %1949
    %v1953 = vsel %vm289, %v1948, 0
    %1955 = vmatprep.subr.mxu0 0.0
    %1956 = vmatpush1.msra.mxu0 0.0
    %1957 = vmatprep.subr.mxu0 0.0
    %1958 = vmatpush1.msra.mxu0 0.0
    %1959 = vmatprep.subr.mxu0 0.0
    %1960 = vmatpush1.msra.mxu0 0.0
    %1961 = vmatprep.subr.mxu0 0.0
    %1962 = vmatpush1.msra.mxu0 0.0
    %1963 = vmatprep.subr.mxu0 0.0
    %1964 = vmatpush1.msra.mxu0 0.0
    %1965 = vmatprep.subr.mxu0 0.0
    %1966 = vmatpush1.msra.mxu0 0.0
    %1967 = vmatprep.subr.mxu0 0.0
    %1968 = vmatpush1.msra.mxu0 0.0
    %1969 = vmatprep.subr.mxu0 0.0
    %1970 = vmatpush1.msra.mxu0 0.0
    %1971 = vmatprep.subr.mxu0 0.0
    %1972 = vmatpush1.msra.mxu0 0.0
    %1973 = vmatprep.subr.mxu0 0.0
    %1974 = vmatpush1.msra.mxu0 0.0
    %1975 = vmatprep.subr.mxu0 0.0
    %1976 = vmatpush1.msra.mxu0 0.0
    %1977 = vmatprep.subr.mxu0 0.0
    %1978 = vmatpush1.msra.mxu0 0.0
    %1979 = vmatprep.subr.mxu0 0.0
    %1980 = vmatpush1.msra.mxu0 0.0
    %1981 = vmatprep.subr.mxu0 0.0
    %1982 = vmatpush1.msra.mxu0 0.0
    %1983 = vmatprep.subr.mxu0 0.0
    %1984 = vmatpush1.msra.mxu0 0.0
    %1985 = vmatprep.subr.mxu0 0.0
    %1986 = vmatpush1.msra.mxu0 %v1950
    %1987 = vmatprep.subr.mxu0 0.0
    %1988 = vmatpush2.msra.mxu0 0.0
    %1989 = vmatprep.subr.mxu0 0.0
    %1990 = vmatpush2.msra.mxu0 0.0
    %1991 = vmatprep.subr.mxu0 0.0
    %1992 = vmatpush2.msra.mxu0 0.0
    %1993 = vmatprep.subr.mxu0 0.0
    %1994 = vmatpush2.msra.mxu0 0.0
    %1995 = vmatprep.subr.mxu0 0.0
    %1996 = vmatpush2.msra.mxu0 0.0
    %1997 = vmatprep.subr.mxu0 0.0
    %1998 = vmatpush2.msra.mxu0 0.0
    %1999 = vmatprep.subr.mxu0 0.0
    %2000 = vmatpush2.msra.mxu0 0.0
    %2001 = vmatprep.subr.mxu0 0.0
    %2002 = vmatpush2.msra.mxu0 0.0
    %2003 = vmatprep.subr.mxu0 0.0
    %2004 = vmatpush2.msra.mxu0 0.0
    %2005 = vmatprep.subr.mxu0 0.0
    %2006 = vmatpush2.msra.mxu0 0.0
    %2007 = vmatprep.subr.mxu0 0.0
    %2008 = vmatpush2.msra.mxu0 0.0
    %2009 = vmatprep.subr.mxu0 0.0
    %2010 = vmatpush2.msra.mxu0 0.0
    %2011 = vmatprep.subr.mxu0 0.0
    %2012 = vmatpush2.msra.mxu0 0.0
    %2013 = vmatprep.subr.mxu0 0.0
    %2014 = vmatpush2.msra.mxu0 0.0
    %2015 = vmatprep.subr.mxu0 0.0
    %2016 = vmatpush2.msra.mxu0 0.0
    %2017 = vmatprep.subr.mxu0 0.0
    %2018 = vmatpush2.msra.mxu0 0.0
    %2019 = vmatprep.mubr.f32.mxu0 0.0
    %2020 = vmatmul.mubr.f32.gmra.mxu0 %v1953
    %v2021 = vpop.f32.mrf.mxu0
    %v2022 = vadd.f32 0.0, %v2021
    %v2023 = vpop.f32.mrf.mxu0
    %2024 = vdwg.mxu0
    %2026 = vrot.lane.b32.xlu0 %v2022, 16
    %v2027 = vpop.permute.xlu0 %2026
    %v2029 = vsel %vm214, %v1857, %v2027
    %s2030 = scalar_lea.vmem %s6, 32
    %v2031 = vld [vmem:[%s2030] sm:$0xff]
    %v2032 = vld [vmem:[%s2030 + $0x8] sm:$0xff]
    %v2033 = vld [vmem:[%s2030 + $0x10] sm:$0xff]
    %v2034 = vld [vmem:[%s2030 + $0x18] sm:$0xff]
    %s2035 = scalar_lea.vmem %s7, 1
    %v2036 = vld [vmem:[%s2035] sm:$0x1]
    %v2038 = vlaneseq
    %v2039 = vshrl.u32 %v2038, 7
    %v2040 = vsub.s32 0, %v2039
    %v2041 = vrot.slane %v2036, %v2040
    %v2044 = vsel %vm70, %v1695, 0
    %v2047 = vsel %vm70, %v2029, 0
    %2049 = vmatprep.subr.mxu0 0.0
    %2050 = vmatpush1.msra.mxu0 0.0
    %2051 = vmatprep.subr.mxu0 0.0
    %2052 = vmatpush1.msra.mxu0 0.0
    %2053 = vmatprep.subr.mxu0 0.0
    %2054 = vmatpush1.msra.mxu0 0.0
    %2055 = vmatprep.subr.mxu0 0.0
    %2056 = vmatpush1.msra.mxu0 0.0
    %2057 = vmatprep.subr.mxu0 0.0
    %2058 = vmatpush1.msra.mxu0 0.0
    %2059 = vmatprep.subr.mxu0 0.0
    %2060 = vmatpush1.msra.mxu0 0.0
    %2061 = vmatprep.subr.mxu0 0.0
    %2062 = vmatpush1.msra.mxu0 0.0
    %2063 = vmatprep.subr.mxu0 0.0
    %2064 = vmatpush1.msra.mxu0 0.0
    %2065 = vmatprep.subr.mxu0 0.0
    %2066 = vmatpush1.msra.mxu0 0.0
    %2067 = vmatprep.subr.mxu0 0.0
    %2068 = vmatpush1.msra.mxu0 0.0
    %2069 = vmatprep.subr.mxu0 0.0
    %2070 = vmatpush1.msra.mxu0 0.0
    %2071 = vmatprep.subr.mxu0 0.0
    %2072 = vmatpush1.msra.mxu0 0.0
    %2073 = vmatprep.subr.mxu0 0.0
    %2074 = vmatpush1.msra.mxu0 %v2034
    %2075 = vmatprep.subr.mxu0 0.0
    %2076 = vmatpush1.msra.mxu0 %v2033
    %2077 = vmatprep.subr.mxu0 0.0
    %2078 = vmatpush1.msra.mxu0 %v2032
    %2079 = vmatprep.subr.mxu0 0.0
    %2080 = vmatpush1.msra.mxu0 %v2031
    %2081 = vmatprep.subr.mxu0 0.0
    %2082 = vmatpush2.msra.mxu0 0.0
    %2083 = vmatprep.subr.mxu0 0.0
    %2084 = vmatpush2.msra.mxu0 0.0
    %2085 = vmatprep.subr.mxu0 0.0
    %2086 = vmatpush2.msra.mxu0 0.0
    %2087 = vmatprep.subr.mxu0 0.0
    %2088 = vmatpush2.msra.mxu0 0.0
    %2089 = vmatprep.subr.mxu0 0.0
    %2090 = vmatpush2.msra.mxu0 0.0
    %2091 = vmatprep.subr.mxu0 0.0
    %2092 = vmatpush2.msra.mxu0 0.0
    %2093 = vmatprep.subr.mxu0 0.0
    %2094 = vmatpush2.msra.mxu0 0.0
    %2095 = vmatprep.subr.mxu0 0.0
    %2096 = vmatpush2.msra.mxu0 0.0
    %2097 = vmatprep.subr.mxu0 0.0
    %2098 = vmatpush2.msra.mxu0 0.0
    %2099 = vmatprep.subr.mxu0 0.0
    %2100 = vmatpush2.msra.mxu0 0.0
    %2101 = vmatprep.subr.mxu0 0.0
    %2102 = vmatpush2.msra.mxu0 0.0
    %2103 = vmatprep.subr.mxu0 0.0
    %2104 = vmatpush2.msra.mxu0 0.0
    %2105 = vmatprep.subr.mxu0 0.0
    %2106 = vmatpush2.msra.mxu0 0.0
    %2107 = vmatprep.subr.mxu0 0.0
    %2108 = vmatpush2.msra.mxu0 0.0
    %2109 = vmatprep.subr.mxu0 0.0
    %2110 = vmatpush2.msra.mxu0 0.0
    %2111 = vmatprep.subr.mxu0 0.0
    %2112 = vmatpush2.msra.mxu0 0.0
    %2113 = vmatprep.mubr.f32.mxu0 0.0
    %2114 = vmatmul.mubr.f32.gmra.mxu0 %v2044
    %v2115 = vpop.f32.mrf.mxu0
    %v2116 = vadd.f32 %v2041, %v2115
    %v2117 = vpop.f32.mrf.mxu0
    %2118 = vmatprep.mubr.f32.mxu0 0.0
    %2119 = vmatmul.mubr.f32.gmra.mxu0 %v2047
    %v2120 = vpop.f32.mrf.mxu0
    %v2121 = vadd.f32 %v2041, %v2120
    %v2122 = vpop.f32.mrf.mxu0
    %2123 = vdwg.mxu0
    %v2124 = vadd.f32 %v1266, %v2116
    %v2125 = vadd.f32 %v1267, %v2121
    %s2126 = scalar_lea.vmem %s8, 1
    %v2127 = vld [vmem:[%s2126] sm:$0x1]
    %s2128 = scalar_lea.vmem %s9, 1
    %v2129 = vld [vmem:[%s2128] sm:$0x1]
    %v2130 = vsel %vm70, %v2124, 0.0
    %2131 = vadd.xlane.f32.xlu0 %v2130
    %v2132 = vpop.xlane.xlu0 %2131
    %v2133 = vsel %vm70, %v2125, 0.0
    %2134 = vadd.xlane.f32.xlu0 %v2133
    %v2135 = vpop.xlane.xlu0 %2134
    %v2136 = vmul.f32 %v2132, %v77
    %v2137 = vmul.f32 %v2135, %v77
    %v2138 = vsub.f32 %v2124, %v2136
    %v2139 = vsub.f32 %v2125, %v2137
    %v2140 = vmul.f32 %v2138, %v2138
    %v2141 = vmul.f32 %v2139, %v2139
    %v2142 = vsel %vm70, %v2140, 0.0
    %2143 = vadd.xlane.f32.xlu0 %v2142
    %v2144 = vpop.xlane.xlu0 %2143
    %v2145 = vsel %vm70, %v2141, 0.0
    %2146 = vadd.xlane.f32.xlu0 %v2145
    %v2147 = vpop.xlane.xlu0 %2146
    %v2148 = vmul.f32 %v2144, %v77
    %v2149 = vmul.f32 %v2147, %v77
    %v2150 = vadd.f32 %v2148, 1e-12
    %v2151 = vadd.f32 %v2149, 1e-12
    %v2152 = vrsqrt.pop %v2150
    %v2153 = vrsqrt.pop %v2151
    %v2154 = vmul.f32 %v2138, %v2152
    %v2155 = vmul.f32 %v2139, %v2153
    %v2157 = vlaneseq
    %v2158 = vshrl.u32 %v2157, 7
    %v2159 = vsub.s32 0, %v2158
    %v2160 = vrot.slane %v2127, %v2159
    %v2162 = vmul.f32 %v2154, %v2160
    %v2163 = vmul.f32 %v2155, %v2160
    %v2165 = vlaneseq
    %v2166 = vshrl.u32 %v2165, 7
    %v2167 = vsub.s32 0, %v2166
    %v2168 = vrot.slane %v2129, %v2167
    %v2170 = vadd.f32 %v2162, %v2168
    %v2171 = vadd.f32 %v2163, %v2168
    %s2172 = scalar_lea.vmem %s10, 32
    %v2173 = vld [vmem:[%s2172] sm:$0xff]
    %v2174 = vld [vmem:[%s2172 + $0x8] sm:$0xff]
    %v2175 = vld [vmem:[%s2172 + $0x10] sm:$0xff]
    %v2176 = vld [vmem:[%s2172 + $0x18] sm:$0xff]
    %s2177 = scalar_lea.vmem %s11, 1
    %v2178 = vld [vmem:[%s2177] sm:$0x1]
    %v2180 = vlaneseq
    %v2181 = vshrl.u32 %v2180, 7
    %v2182 = vsub.s32 0, %v2181
    %v2183 = vrot.slane %v2178, %v2182
    %v2186 = vsel %vm70, %v2170, 0
    %v2189 = vsel %vm70, %v2171, 0
    %2191 = vmatprep.subr.mxu0 0.0
    %2192 = vmatpush1.msra.mxu0 0.0
    %2193 = vmatprep.subr.mxu0 0.0
    %2194 = vmatpush1.msra.mxu0 0.0
    %2195 = vmatprep.subr.mxu0 0.0
    %2196 = vmatpush1.msra.mxu0 0.0
    %2197 = vmatprep.subr.mxu0 0.0
    %2198 = vmatpush1.msra.mxu0 0.0
    %2199 = vmatprep.subr.mxu0 0.0
    %2200 = vmatpush1.msra.mxu0 0.0
    %2201 = vmatprep.subr.mxu0 0.0
    %2202 = vmatpush1.msra.mxu0 0.0
    %2203 = vmatprep.subr.mxu0 0.0
    %2204 = vmatpush1.msra.mxu0 0.0
    %2205 = vmatprep.subr.mxu0 0.0
    %2206 = vmatpush1.msra.mxu0 0.0
    %2207 = vmatprep.subr.mxu0 0.0
    %2208 = vmatpush1.msra.mxu0 0.0
    %2209 = vmatprep.subr.mxu0 0.0
    %2210 = vmatpush1.msra.mxu0 0.0
    %2211 = vmatprep.subr.mxu0 0.0
    %2212 = vmatpush1.msra.mxu0 0.0
    %2213 = vmatprep.subr.mxu0 0.0
    %2214 = vmatpush1.msra.mxu0 0.0
    %2215 = vmatprep.subr.mxu0 0.0
    %2216 = vmatpush1.msra.mxu0 %v2176
    %2217 = vmatprep.subr.mxu0 0.0
    %2218 = vmatpush1.msra.mxu0 %v2175
    %2219 = vmatprep.subr.mxu0 0.0
    %2220 = vmatpush1.msra.mxu0 %v2174
    %2221 = vmatprep.subr.mxu0 0.0
    %2222 = vmatpush1.msra.mxu0 %v2173
    %2223 = vmatprep.subr.mxu0 0.0
    %2224 = vmatpush2.msra.mxu0 0.0
    %2225 = vmatprep.subr.mxu0 0.0
    %2226 = vmatpush2.msra.mxu0 0.0
    %2227 = vmatprep.subr.mxu0 0.0
    %2228 = vmatpush2.msra.mxu0 0.0
    %2229 = vmatprep.subr.mxu0 0.0
    %2230 = vmatpush2.msra.mxu0 0.0
    %2231 = vmatprep.subr.mxu0 0.0
    %2232 = vmatpush2.msra.mxu0 0.0
    %2233 = vmatprep.subr.mxu0 0.0
    %2234 = vmatpush2.msra.mxu0 0.0
    %2235 = vmatprep.subr.mxu0 0.0
    %2236 = vmatpush2.msra.mxu0 0.0
    %2237 = vmatprep.subr.mxu0 0.0
    %2238 = vmatpush2.msra.mxu0 0.0
    %2239 = vmatprep.subr.mxu0 0.0
    %2240 = vmatpush2.msra.mxu0 0.0
    %2241 = vmatprep.subr.mxu0 0.0
    %2242 = vmatpush2.msra.mxu0 0.0
    %2243 = vmatprep.subr.mxu0 0.0
    %2244 = vmatpush2.msra.mxu0 0.0
    %2245 = vmatprep.subr.mxu0 0.0
    %2246 = vmatpush2.msra.mxu0 0.0
    %2247 = vmatprep.subr.mxu0 0.0
    %2248 = vmatpush2.msra.mxu0 0.0
    %2249 = vmatprep.subr.mxu0 0.0
    %2250 = vmatpush2.msra.mxu0 0.0
    %2251 = vmatprep.subr.mxu0 0.0
    %2252 = vmatpush2.msra.mxu0 0.0
    %2253 = vmatprep.subr.mxu0 0.0
    %2254 = vmatpush2.msra.mxu0 0.0
    %2255 = vmatprep.mubr.f32.mxu0 0.0
    %2256 = vmatmul.mubr.f32.gmra.mxu0 %v2186
    %v2257 = vpop.f32.mrf.mxu0
    %v2258 = vadd.f32 %v2183, %v2257
    %v2259 = vpop.f32.mrf.mxu0
    %2260 = vmatprep.mubr.f32.mxu0 0.0
    %2261 = vmatmul.mubr.f32.gmra.mxu0 %v2189
    %v2262 = vpop.f32.mrf.mxu0
    %v2263 = vadd.f32 %v2183, %v2262
    %v2264 = vpop.f32.mrf.mxu0
    %2265 = vdwg.mxu0
    %v2266 = vmul.f32 %v2258, 0.5
    %v2267 = vmul.f32 %v2263, 0.5
    %v2268 = vmul.f32 %v2258, 0.70710677
    %v2269 = vmul.f32 %v2263, 0.70710677
    %v2270 = verf.f32.pop %v2268
    %v2271 = verf.f32.pop %v2269
    %v2272 = vadd.f32 %v2270, 1.0
    %v2273 = vadd.f32 %v2271, 1.0
    %v2274 = vmul.f32 %v2266, %v2272
    %v2275 = vmul.f32 %v2267, %v2273
    %s2276 = scalar_lea.vmem %s12, 64
    %v2277 = vld [vmem:[%s2276] sm:$0xff]
    %v2278 = vld [vmem:[%s2276 + $0x8] sm:$0xff]
    %v2279 = vld [vmem:[%s2276 + $0x10] sm:$0xff]
    %v2280 = vld [vmem:[%s2276 + $0x18] sm:$0xff]
    %v2281 = vld [vmem:[%s2276 + $0x20] sm:$0xff]
    %v2282 = vld [vmem:[%s2276 + $0x28] sm:$0xff]
    %v2283 = vld [vmem:[%s2276 + $0x30] sm:$0xff]
    %v2284 = vld [vmem:[%s2276 + $0x38] sm:$0xff]
    %s2285 = scalar_lea.vmem %s13, 1
    %v2286 = vld [vmem:[%s2285] sm:$0x1]
    %v2288 = vlaneseq
    %v2289 = vshrl.u32 %v2288, 7
    %v2290 = vsub.s32 0, %v2289
    %v2291 = vrot.slane %v2286, %v2290
    %v2294 = vsel %vm1140, %v2274, 0
    %v2297 = vsel %vm1140, %v2275, 0
    %2299 = vmatprep.subr.mxu0 0.0
    %2300 = vmatpush1.msra.mxu0 0.0
    %2301 = vmatprep.subr.mxu0 0.0
    %2302 = vmatpush1.msra.mxu0 0.0
    %2303 = vmatprep.subr.mxu0 0.0
    %2304 = vmatpush1.msra.mxu0 0.0
    %2305 = vmatprep.subr.mxu0 0.0
    %2306 = vmatpush1.msra.mxu0 0.0
    %2307 = vmatprep.subr.mxu0 0.0
    %2308 = vmatpush1.msra.mxu0 0.0
    %2309 = vmatprep.subr.mxu0 0.0
    %2310 = vmatpush1.msra.mxu0 0.0
    %2311 = vmatprep.subr.mxu0 0.0
    %2312 = vmatpush1.msra.mxu0 0.0
    %2313 = vmatprep.subr.mxu0 0.0
    %2314 = vmatpush1.msra.mxu0 0.0
    %2315 = vmatprep.subr.mxu0 0.0
    %2316 = vmatpush1.msra.mxu0 %v2284
    %2317 = vmatprep.subr.mxu0 0.0
    %2318 = vmatpush1.msra.mxu0 %v2283
    %2319 = vmatprep.subr.mxu0 0.0
    %2320 = vmatpush1.msra.mxu0 %v2282
    %2321 = vmatprep.subr.mxu0 0.0
    %2322 = vmatpush1.msra.mxu0 %v2281
    %2323 = vmatprep.subr.mxu0 0.0
    %2324 = vmatpush1.msra.mxu0 %v2280
    %2325 = vmatprep.subr.mxu0 0.0
    %2326 = vmatpush1.msra.mxu0 %v2279
    %2327 = vmatprep.subr.mxu0 0.0
    %2328 = vmatpush1.msra.mxu0 %v2278
    %2329 = vmatprep.subr.mxu0 0.0
    %2330 = vmatpush1.msra.mxu0 %v2277
    %2331 = vmatprep.subr.mxu0 0.0
    %2332 = vmatpush2.msra.mxu0 0.0
    %2333 = vmatprep.subr.mxu0 0.0
    %2334 = vmatpush2.msra.mxu0 0.0
    %2335 = vmatprep.subr.mxu0 0.0
    %2336 = vmatpush2.msra.mxu0 0.0
    %2337 = vmatprep.subr.mxu0 0.0
    %2338 = vmatpush2.msra.mxu0 0.0
    %2339 = vmatprep.subr.mxu0 0.0
    %2340 = vmatpush2.msra.mxu0 0.0
    %2341 = vmatprep.subr.mxu0 0.0
    %2342 = vmatpush2.msra.mxu0 0.0
    %2343 = vmatprep.subr.mxu0 0.0
    %2344 = vmatpush2.msra.mxu0 0.0
    %2345 = vmatprep.subr.mxu0 0.0
    %2346 = vmatpush2.msra.mxu0 0.0
    %2347 = vmatprep.subr.mxu0 0.0
    %2348 = vmatpush2.msra.mxu0 0.0
    %2349 = vmatprep.subr.mxu0 0.0
    %2350 = vmatpush2.msra.mxu0 0.0
    %2351 = vmatprep.subr.mxu0 0.0
    %2352 = vmatpush2.msra.mxu0 0.0
    %2353 = vmatprep.subr.mxu0 0.0
    %2354 = vmatpush2.msra.mxu0 0.0
    %2355 = vmatprep.subr.mxu0 0.0
    %2356 = vmatpush2.msra.mxu0 0.0
    %2357 = vmatprep.subr.mxu0 0.0
    %2358 = vmatpush2.msra.mxu0 0.0
    %2359 = vmatprep.subr.mxu0 0.0
    %2360 = vmatpush2.msra.mxu0 0.0
    %2361 = vmatprep.subr.mxu0 0.0
    %2362 = vmatpush2.msra.mxu0 0.0
    %2363 = vmatprep.mubr.f32.mxu0 0.0
    %2364 = vmatmul.mubr.f32.gmra.mxu0 %v2294
    %v2365 = vpop.f32.mrf.mxu0
    %v2366 = vadd.f32 %v2291, %v2365
    %v2367 = vpop.f32.mrf.mxu0
    %2368 = vmatprep.mubr.f32.mxu0 0.0
    %2369 = vmatmul.mubr.f32.gmra.mxu0 %v2297
    %v2370 = vpop.f32.mrf.mxu0
    %v2371 = vadd.f32 %v2291, %v2370
    %v2372 = vpop.f32.mrf.mxu0
    %2373 = vdwg.mxu0
    %v2374 = vadd.f32 %v2170, %v2366
    %v2375 = vadd.f32 %v2171, %v2371
    %s2376 = scalar_lea.vmem %s14, 1
    %v2377 = vld [vmem:[%s2376] sm:$0x1]
    %s2378 = scalar_lea.vmem %s15, 1
    %v2379 = vld [vmem:[%s2378] sm:$0x1]
    %v2380 = vsel %vm70, %v2374, 0.0
    %2381 = vadd.xlane.f32.xlu0 %v2380
    %v2382 = vpop.xlane.xlu0 %2381
    %v2383 = vsel %vm70, %v2375, 0.0
    %2384 = vadd.xlane.f32.xlu0 %v2383
    %v2385 = vpop.xlane.xlu0 %2384
    %v2386 = vmul.f32 %v2382, %v77
    %v2387 = vmul.f32 %v2385, %v77
    %v2388 = vsub.f32 %v2374, %v2386
    %v2389 = vsub.f32 %v2375, %v2387
    %v2390 = vmul.f32 %v2388, %v2388
    %v2391 = vmul.f32 %v2389, %v2389
    %v2392 = vsel %vm70, %v2390, 0.0
    %2393 = vadd.xlane.f32.xlu0 %v2392
    %v2394 = vpop.xlane.xlu0 %2393
    %v2395 = vsel %vm70, %v2391, 0.0
    %2396 = vadd.xlane.f32.xlu0 %v2395
    %v2397 = vpop.xlane.xlu0 %2396
    %v2398 = vmul.f32 %v2394, %v77
    %v2399 = vmul.f32 %v2397, %v77
    %v2400 = vadd.f32 %v2398, 1e-12
    %v2401 = vadd.f32 %v2399, 1e-12
    %v2402 = vrsqrt.pop %v2400
    %v2403 = vrsqrt.pop %v2401
    %v2404 = vmul.f32 %v2388, %v2402
    %v2405 = vmul.f32 %v2389, %v2403
    %v2407 = vlaneseq
    %v2408 = vshrl.u32 %v2407, 7
    %v2409 = vsub.s32 0, %v2408
    %v2410 = vrot.slane %v2377, %v2409
    %v2412 = vmul.f32 %v2404, %v2410
    %v2413 = vmul.f32 %v2405, %v2410
    %v2415 = vlaneseq
    %v2416 = vshrl.u32 %v2415, 7
    %v2417 = vsub.s32 0, %v2416
    %v2418 = vrot.slane %v2379, %v2417
    %v2420 = vadd.f32 %v2412, %v2418
    %v2421 = vadd.f32 %v2413, %v2418
    %v2423 = vrot.slane %v2421, 7
    %vm2425 = vcmask 1040384
    %v2426 = vsel %vm2425, %v2420, %v2423
    %v2427 = vld [vmem:[%s16] sm:$0xff]
    %v2428 = vld [vmem:[%s16 + $0x8] sm:$0xff]
    %v2429 = vld [vmem:[%s16 + $0x10] sm:$0xff]
    %v2430 = vld [vmem:[%s16 + $0x18] sm:$0xff]
    %v2431 = vld [vmem:[%s17] sm:$0x1]
    %v2433 = vlaneseq
    %v2434 = vshrl.u32 %v2433, 7
    %v2435 = vsub.s32 0, %v2434
    %v2436 = vrot.slane %v2431, %v2435
    %v2439 = vsel %vm70, %v2426, 0
    %2441 = vmatprep.subr.mxu0 0.0
    %2442 = vmatpush1.msra.mxu0 0.0
    %2443 = vmatprep.subr.mxu0 0.0
    %2444 = vmatpush1.msra.mxu0 0.0
    %2445 = vmatprep.subr.mxu0 0.0
    %2446 = vmatpush1.msra.mxu0 0.0
    %2447 = vmatprep.subr.mxu0 0.0
    %2448 = vmatpush1.msra.mxu0 0.0
    %2449 = vmatprep.subr.mxu0 0.0
    %2450 = vmatpush1.msra.mxu0 0.0
    %2451 = vmatprep.subr.mxu0 0.0
    %2452 = vmatpush1.msra.mxu0 0.0
    %2453 = vmatprep.subr.mxu0 0.0
    %2454 = vmatpush1.msra.mxu0 0.0
    %2455 = vmatprep.subr.mxu0 0.0
    %2456 = vmatpush1.msra.mxu0 0.0
    %2457 = vmatprep.subr.mxu0 0.0
    %2458 = vmatpush1.msra.mxu0 0.0
    %2459 = vmatprep.subr.mxu0 0.0
    %2460 = vmatpush1.msra.mxu0 0.0
    %2461 = vmatprep.subr.mxu0 0.0
    %2462 = vmatpush1.msra.mxu0 0.0
    %2463 = vmatprep.subr.mxu0 0.0
    %2464 = vmatpush1.msra.mxu0 0.0
    %2465 = vmatprep.subr.mxu0 0.0
    %2466 = vmatpush1.msra.mxu0 %v2430
    %2467 = vmatprep.subr.mxu0 0.0
    %2468 = vmatpush1.msra.mxu0 %v2429
    %2469 = vmatprep.subr.mxu0 0.0
    %2470 = vmatpush1.msra.mxu0 %v2428
    %2471 = vmatprep.subr.mxu0 0.0
    %2472 = vmatpush1.msra.mxu0 %v2427
    %2473 = vmatprep.subr.mxu0 0.0
    %2474 = vmatpush2.msra.mxu0 0.0
    %2475 = vmatprep.subr.mxu0 0.0
    %2476 = vmatpush2.msra.mxu0 0.0
    %2477 = vmatprep.subr.mxu0 0.0
    %2478 = vmatpush2.msra.mxu0 0.0
    %2479 = vmatprep.subr.mxu0 0.0
    %2480 = vmatpush2.msra.mxu0 0.0
    %2481 = vmatprep.subr.mxu0 0.0
    %2482 = vmatpush2.msra.mxu0 0.0
    %2483 = vmatprep.subr.mxu0 0.0
    %2484 = vmatpush2.msra.mxu0 0.0
    %2485 = vmatprep.subr.mxu0 0.0
    %2486 = vmatpush2.msra.mxu0 0.0
    %2487 = vmatprep.subr.mxu0 0.0
    %2488 = vmatpush2.msra.mxu0 0.0
    %2489 = vmatprep.subr.mxu0 0.0
    %2490 = vmatpush2.msra.mxu0 0.0
    %2491 = vmatprep.subr.mxu0 0.0
    %2492 = vmatpush2.msra.mxu0 0.0
    %2493 = vmatprep.subr.mxu0 0.0
    %2494 = vmatpush2.msra.mxu0 0.0
    %2495 = vmatprep.subr.mxu0 0.0
    %2496 = vmatpush2.msra.mxu0 0.0
    %2497 = vmatprep.subr.mxu0 0.0
    %2498 = vmatpush2.msra.mxu0 0.0
    %2499 = vmatprep.subr.mxu0 0.0
    %2500 = vmatpush2.msra.mxu0 0.0
    %2501 = vmatprep.subr.mxu0 0.0
    %2502 = vmatpush2.msra.mxu0 0.0
    %2503 = vmatprep.subr.mxu0 0.0
    %2504 = vmatpush2.msra.mxu0 0.0
    %2505 = vmatprep.mubr.f32.mxu0 0.0
    %2506 = vmatmul.mubr.f32.gmra.mxu0 %v2439
    %v2507 = vpop.f32.mrf.mxu0
    %v2508 = vadd.f32 %v2436, %v2507
    %v2509 = vpop.f32.mrf.mxu0
    %2510 = vdwg.mxu0
    %v2511 = vtanh.pop %v2508
    %v2512 = vld [vmem:[%s18] sm:$0xff]
    %v2513 = vld [vmem:[%s18 + $0x8] sm:$0xff]
    %v2514 = vld [vmem:[%s18 + $0x10] sm:$0xff]
    %v2515 = vld [vmem:[%s18 + $0x18] sm:$0xff]
    %v2516 = vld [vmem:[%s19] sm:$0x1]
    %v2518 = vlaneseq
    %v2519 = vshrl.u32 %v2518, 7
    %v2520 = vsub.s32 0, %v2519
    %v2521 = vrot.slane %v2516, %v2520
    %v2524 = vsel %vm70, %v2511, 0
    %2526 = vmatprep.subr.mxu0 0.0
    %2527 = vmatpush1.msra.mxu0 0.0
    %2528 = vmatprep.subr.mxu0 0.0
    %2529 = vmatpush1.msra.mxu0 0.0
    %2530 = vmatprep.subr.mxu0 0.0
    %2531 = vmatpush1.msra.mxu0 0.0
    %2532 = vmatprep.subr.mxu0 0.0
    %2533 = vmatpush1.msra.mxu0 0.0
    %2534 = vmatprep.subr.mxu0 0.0
    %2535 = vmatpush1.msra.mxu0 0.0
    %2536 = vmatprep.subr.mxu0 0.0
    %2537 = vmatpush1.msra.mxu0 0.0
    %2538 = vmatprep.subr.mxu0 0.0
    %2539 = vmatpush1.msra.mxu0 0.0
    %2540 = vmatprep.subr.mxu0 0.0
    %2541 = vmatpush1.msra.mxu0 0.0
    %2542 = vmatprep.subr.mxu0 0.0
    %2543 = vmatpush1.msra.mxu0 0.0
    %2544 = vmatprep.subr.mxu0 0.0
    %2545 = vmatpush1.msra.mxu0 0.0
    %2546 = vmatprep.subr.mxu0 0.0
    %2547 = vmatpush1.msra.mxu0 0.0
    %2548 = vmatprep.subr.mxu0 0.0
    %2549 = vmatpush1.msra.mxu0 0.0
    %2550 = vmatprep.subr.mxu0 0.0
    %2551 = vmatpush1.msra.mxu0 %v2515
    %2552 = vmatprep.subr.mxu0 0.0
    %2553 = vmatpush1.msra.mxu0 %v2514
    %2554 = vmatprep.subr.mxu0 0.0
    %2555 = vmatpush1.msra.mxu0 %v2513
    %2556 = vmatprep.subr.mxu0 0.0
    %2557 = vmatpush1.msra.mxu0 %v2512
    %2558 = vmatprep.subr.mxu0 0.0
    %2559 = vmatpush2.msra.mxu0 0.0
    %2560 = vmatprep.subr.mxu0 0.0
    %2561 = vmatpush2.msra.mxu0 0.0
    %2562 = vmatprep.subr.mxu0 0.0
    %2563 = vmatpush2.msra.mxu0 0.0
    %2564 = vmatprep.subr.mxu0 0.0
    %2565 = vmatpush2.msra.mxu0 0.0
    %2566 = vmatprep.subr.mxu0 0.0
    %2567 = vmatpush2.msra.mxu0 0.0
    %2568 = vmatprep.subr.mxu0 0.0
    %2569 = vmatpush2.msra.mxu0 0.0
    %2570 = vmatprep.subr.mxu0 0.0
    %2571 = vmatpush2.msra.mxu0 0.0
    %2572 = vmatprep.subr.mxu0 0.0
    %2573 = vmatpush2.msra.mxu0 0.0
    %2574 = vmatprep.subr.mxu0 0.0
    %2575 = vmatpush2.msra.mxu0 0.0
    %2576 = vmatprep.subr.mxu0 0.0
    %2577 = vmatpush2.msra.mxu0 0.0
    %2578 = vmatprep.subr.mxu0 0.0
    %2579 = vmatpush2.msra.mxu0 0.0
    %2580 = vmatprep.subr.mxu0 0.0
    %2581 = vmatpush2.msra.mxu0 0.0
    %2582 = vmatprep.subr.mxu0 0.0
    %2583 = vmatpush2.msra.mxu0 0.0
    %2584 = vmatprep.subr.mxu0 0.0
    %2585 = vmatpush2.msra.mxu0 0.0
    %2586 = vmatprep.subr.mxu0 0.0
    %2587 = vmatpush2.msra.mxu0 0.0
    %2588 = vmatprep.subr.mxu0 0.0
    %2589 = vmatpush2.msra.mxu0 0.0
    %2590 = vmatprep.mubr.f32.mxu0 0.0
    %2591 = vmatmul.mubr.f32.gmra.mxu0 %v2524
    %v2592 = vpop.f32.mrf.mxu0
    %v2593 = vadd.f32 %v2521, %v2592
    %v2594 = vpop.f32.mrf.mxu0
    %2595 = vdwg.mxu0
    %vm2596 = vcmask 17408
    %2597 = vst.msk [vmem:[#allocation2] sm:$0x3] %vm2596, %v2593
    // Predicated region
    $region82: #{bert_module_forward.1} parent=1 // pred_check
      _
    $region83: #{bert_module_forward.1} parent=1 // pred_check_branch
      %2599 = sbr.rel (0) target = $region85
    $region84: #{bert_module_forward.1} parent=1 // pred_region
      %s2601 = ssub.s32 32, 32
      %2602 = vsyncadd [#allocation3], %s2601
      %s2604 = sshll.u32 [#allocation2], 4
      %s2605 = int_to_ptr.vmem [resolvable:$true] %s2604
      %2607 = dma.vmem_to_hbm [thread:$0]  %s2605, 32, %s20, [#allocation3]
    $region85: #{bert_module_forward.1} parent=1 // pred_fallthru
      _
    // Predicated region
    $region86: #{bert_module_forward.1} parent=1 // pred_check
      _
    $region87: #{bert_module_forward.1} parent=1 // pred_check_branch
      %2609 = sbr.rel (0) target = $region89
    $region88: #{bert_module_forward.1} parent=1 // pred_region
      %2610 = dma.done [#allocation3], 32
    $region89: #{bert_module_forward.1} parent=1 // pred_fallthru
      _
    %2611 = vsyncpa [#allocation3], 1

</llo_original>
